<compile_context>
chip_gen: v7x
topology: tpu7x:2x2x1
jax: 0.10.0
libtpu: 0.0.40
codegen_flags: <defaults>
</compile_context>

<pallas_src>
import functools
import math

import jax
import jax.numpy as jnp
from jax import lax
from jax.experimental import pallas as pl
from jax.experimental.pallas import tpu as pltpu


_VMEM_LIMIT = 64 * 1024 * 1024


# ---------------------------------------------------------------------------
# Tiling helpers
# ---------------------------------------------------------------------------
def _pick_tm(M):
    """Lane tile for the per-position (channel-matmul) kernels (capped at 1024
    so double-buffered blocks stay inside v5e's scoped-VMEM default)."""
    for t in (1024, 512, 256, 128):
        if M % t == 0:
            return t
    # TODO(synk): non-multiple-of-128 position counts fall back to one tile.
    return M


def _pick_tb(B):
    """Batch block for the attention kernel: amortize grid-step overhead while
    keeping several grid steps (megacore) and bounded VMEM (v7x 64 MiB)."""
    for t in (8, 4, 2):
        if B % t == 0 and B // t >= 4:
            return t
    for t in (8, 4, 2):
        if B % t == 0 and B // t >= 2:
            return t
    return 1


# ---------------------------------------------------------------------------
# Per-position (1x1 conv style) kernels: (C_in, tm) -> (C_out, tm)
# ---------------------------------------------------------------------------
def _down_qkv_kernel(x_ref, wd_ref, s1_ref, b1_ref, wq_ref, sq_ref, bq_ref, o_ref):
    # conv_down + bn1 + ReLU fused with the height block's qkv_transform + bn_qkv
    x = x_ref[...].astype(jnp.bfloat16)                                      # (Cin, tm)
    h = jnp.dot(wd_ref[...], x, preferred_element_type=jnp.float32)          # (w,  tm)
    h = jnp.maximum(h * s1_ref[...] + b1_ref[...], 0.0)
    qkv = jnp.dot(wq_ref[...], h.astype(jnp.bfloat16),
                  preferred_element_type=jnp.float32)                        # (2w, tm)
    o_ref[...] = (qkv * sq_ref[...] + bq_ref[...]).astype(o_ref.dtype)


def _proj_bn_kernel(x_ref, w_ref, s_ref, b_ref, o_ref):
    # width block's qkv_transform (1x1 Conv1d) + bn_qkv (folded, eval mode)
    y = jnp.dot(w_ref[...].astype(jnp.bfloat16), x_ref[...].astype(jnp.bfloat16),
                preferred_element_type=jnp.float32)
    o_ref[...] = (y * s_ref[...] + b_ref[...]).astype(o_ref.dtype)


def _up_res_kernel(x_ref, res_ref, w_ref, s_ref, b_ref, o_ref):
    # ReLU (after the width block, fused) + conv_up + bn2 + residual + ReLU
    x = jnp.maximum(x_ref[...], 0.0).astype(jnp.bfloat16)
    y = jnp.dot(w_ref[...], x, preferred_element_type=jnp.float32)
    o_ref[...] = jnp.maximum(y * s_ref[...] + b_ref[...]
                             + res_ref[...].astype(jnp.float32), 0.0)


def _per_position_call(kernel, blocked, consts, out_channels, out_dtype):
    """Run `kernel` over (C, tm) position tiles of (N, C, M) arrays.

    `blocked` arrays are tiled over (batch, positions); `consts` (weights and
    folded BN vectors) use a constant index map, so Pallas DMAs them only once.
    """
    N, _, M = blocked[0].shape
    tm = _pick_tm(M)
    grid = (N, M // tm)

    in_specs = [pl.BlockSpec((None, a.shape[1], tm), lambda n, m: (n, 0, m))
                for a in blocked]
    in_specs += [pl.BlockSpec(a.shape, lambda n, m, _nd=a.ndim: (0,) * _nd)
                 for a in consts]

    return pl.pallas_call(
        kernel,
        out_shape=jax.ShapeDtypeStruct((N, out_channels, M), out_dtype),
        grid=grid,
        in_specs=in_specs,
        out_specs=pl.BlockSpec((None, out_channels, tm), lambda n, m: (n, 0, m)),
        compiler_params=pltpu.CompilerParams(
            dimension_semantics=("parallel", "parallel"),
            vmem_limit_bytes=_VMEM_LIMIT),
    )(*blocked, *consts)


# ---------------------------------------------------------------------------
# Axial attention kernel: TB rows/columns per grid step, vectorized over TB
# ---------------------------------------------------------------------------
def _axial_attn_kernel(qkv_ref, qt_ref, qemb_ref, kembt_ref, vemb_ref,
                       s_qk_ref, s_qr_ref, s_kr_ref, b_sim_ref,
                       s_sve_ref, b_out_ref,
                       o_ref, *, groups, gp):
    """AxialAttention_dynamic for a block of TB batch elements (post-qkv)."""
    gph = gp // 2

    qkv = qkv_ref[...]        # (TB, 2*out, L) bf16  channels on sublanes, L on lanes
    qt = qt_ref[...]          # (TB, L, out/2) bf16  query index on sublanes (q half only)

    for g in range(groups):
        base = g * 2 * gp
        q_t = qt[:, :, g * gph:(g + 1) * gph]          # (TB, L, gph)
        k = qkv[:, base + gph:base + gp, :]            # (TB, gph, L)
        v = qkv[:, base + gp:base + 2 * gp, :]         # (TB, gp,  L)  (f_sv*bn folded)

        # qk[b,i,j] = sum_c q[b,c,i] k[b,c,j]  (batched MXU matmul, bf16 in / f32 acc)
        qk = lax.dot_general(q_t, k, (((2,), (1,)), ((0,), (0,))),
                             preferred_element_type=jnp.float32)             # (TB, L, L)

        # Positional terms: small channel loop, each iteration a full (TB,L,L) VPU op.
        # qr[b,i,j] = sum_c q[b,c,i] qemb[c,i,j];  kr[b,i,j] = sum_c k[b,c,j] kembt[c,i,j]
        qr = q_t[:, :, 0:1] * qemb_ref[0]
        kr = k[:, 0:1, :] * kembt_ref[0]
        for c in range(1, gph):
            qr = qr + q_t[:, :, c:c + 1] * qemb_ref[c]
            kr = kr + k[:, c:c + 1, :] * kembt_ref[c]

        # bn_similarity (eval, folded; f_qr/f_kr folded into the scales) and sum
        sim = (qk * s_qk_ref[g] + qr * s_qr_ref[g]
               + kr * s_kr_ref[g] + b_sim_ref[g])                            # (TB, L, L)

        # softmax over the key axis (EUP exp + approx reciprocal)
        sim = sim - jnp.max(sim, axis=-1, keepdims=True)
        e = jnp.exp(sim)
        p = e * pl.reciprocal(jnp.sum(e, axis=-1, keepdims=True), approx=True)

        # sv[b,c,i] = sum_j p[b,i,j] v[b,c,j]   (batched MXU matmul; f_sv*bn_output
        # scale is already folded into the v channels' qkv BN)
        sv = lax.dot_general(v, p.astype(jnp.bfloat16),
                             (((2,), (2,)), ((0,), (0,))),
                             preferred_element_type=jnp.float32)             # (TB, gp, L)

        # sve[b,c,i] = sum_j p[b,i,j] vemb[c,i,j]: per-channel loop, no (TB,gp,L,L)
        # temp; per-channel f_sve*bn_output scale and summed bn_output shift come
        # as scalars from SMEM.
        cols = []
        for c in range(gp):
            col = jnp.sum(p * vemb_ref[c], axis=-1)                          # (TB, L)
            cols.append(col * s_sve_ref[g * gp + c] + b_out_ref[g * gp + c])
        sve = jnp.stack(cols, axis=1)                                        # (TB, gp, L)

        # per-group direct store (bounded live ranges, no concat over groups)
        o_ref[:, g * gp:(g + 1) * gp, :] = (sv + sve).astype(o_ref.dtype)


def _axial_attention(qkv, ap, *, groups):
    """qkv: (B, 2*out_planes, L) post-BN qkv -> (B, out_planes, L) attention out."""
    B, C2, L = qkv.shape
    out_planes = C2 // 2
    gp = out_planes // groups
    gph = gp // 2
    TB = _pick_tb(B)

    # Only the q half is needed query-major (for the qr positional term); this is
    # 1/4 the size of a full transposed qkv copy.
    qkv4 = qkv.reshape(B, groups, 2 * gp, L)
    q_t = jnp.swapaxes(qkv4[:, :, :gph, :].reshape(B, groups * gph, L), 1, 2)

    kernel = functools.partial(_axial_attn_kernel, groups=groups, gp=gp)
    smem = pl.BlockSpec(memory_space=pltpu.MemorySpace.SMEM)
    c3 = lambda i: (0, 0, 0)

    return pl.pallas_call(
        kernel,
        out_shape=jax.ShapeDtypeStruct((B, out_planes, L), jnp.bfloat16),
        grid=(B // TB,),
        in_specs=[
            pl.BlockSpec((TB, C2, L), lambda i: (i, 0, 0)),            # qkv (bf16)
            pl.BlockSpec((TB, L, groups * gph), lambda i: (i, 0, 0)),  # q half, query-major
            pl.BlockSpec((gph, L, L), c3),                             # q_embedding
            pl.BlockSpec((gph, L, L), c3),                             # k_embedding^T
            pl.BlockSpec((gp, L, L), c3),                              # v_embedding
            smem, smem, smem, smem,                                    # folded bn_similarity
            smem, smem,                                                # folded bn_output (sve scale, shift)
        ],
        out_specs=pl.BlockSpec((TB, out_planes, L), lambda i: (i, 0, 0)),
        compiler_params=pltpu.CompilerParams(
            dimension_semantics=("parallel",),
            vmem_limit_bytes=_VMEM_LIMIT),
    )(qkv, q_t, ap["q_emb"], ap["k_emb_t"], ap["v_emb"],
      ap["s_qk"], ap["s_qr"], ap["s_kr"], ap["b_sim"],
      ap["s_sve"], ap["b_out"])


# ---------------------------------------------------------------------------
# Full AxialBlock_dynamic forward
# ---------------------------------------------------------------------------
def axial_block_forward(x, params, *, groups=1):
    """x: NCHW float32. Returns NCHW float32."""
    N, Cin, H, W = x.shape
    width = params["w_down"].shape[0]
    Cout = params["w_up"].shape[0]
    M = H * W
    x3 = x.reshape(N, Cin, M)

    ph = params["attn_h"]
    pw = params["attn_w"]

    # conv_down + bn1 + ReLU fused with the height block's qkv projection (bf16 out)
    qkv_h = _per_position_call(
        _down_qkv_kernel, [x3],
        [params["w_down"], params["bn1_scale"], params["bn1_shift"],
         ph["wqkv"], ph["bn_qkv_scale"], ph["bn_qkv_shift"]],
        out_channels=2 * width, out_dtype=jnp.bfloat16)                   # (N, 2w, M)

    # height attention (along H): layout (N*W, 2w, H); hand-offs stay bf16
    # TODO(synk): fuse these layout transposes into the producing/consuming kernels.
    qh = jnp.transpose(qkv_h.reshape(N, 2 * width, H, W),
                       (0, 3, 1, 2)).reshape(N * W, 2 * width, H)
    ah = _axial_attention(qh, ph, groups=groups)                          # (N*W, w, H)
    a_nchw = jnp.transpose(ah.reshape(N, W, width, H),
                           (0, 2, 3, 1)).reshape(N, width, M)

    # width block's qkv projection (per-position channel matmul, NCHW layout)
    qkv_w = _per_position_call(
        _proj_bn_kernel, [a_nchw],
        [pw["wqkv"], pw["bn_qkv_scale"], pw["bn_qkv_shift"]],
        out_channels=2 * width, out_dtype=jnp.bfloat16)                   # (N, 2w, M)

    # width attention (along W): layout (N*H, 2w, W)
    qw = jnp.transpose(qkv_w.reshape(N, 2 * width, H, W),
                       (0, 2, 1, 3)).reshape(N * H, 2 * width, W)
    aw = _axial_attention(qw, pw, groups=groups)                          # (N*H, w, W)
    a2 = jnp.transpose(aw.reshape(N, H, width, W),
                       (0, 2, 1, 3)).reshape(N, width, M)

    # ReLU + conv_up + bn2 + identity residual + ReLU (final output in f32)
    out = _per_position_call(
        _up_res_kernel, [a2, x3],
        [params["w_up"], params["bn2_scale"], params["bn2_shift"]],
        out_channels=Cout, out_dtype=jnp.float32)                         # (N, Cout, M)
    return out.reshape(N, Cout, H, W)


# ---------------------------------------------------------------------------
# Deterministic parameter init (shapes from the module's __init__), with BN
# folding, gate folding and the relative-position gather done once here.
# ---------------------------------------------------------------------------
def _bn_eval_scale_shift(c, eps=1e-5):
    gamma = jnp.ones((c,), jnp.float32)
    beta = jnp.zeros((c,), jnp.float32)
    mean = jnp.zeros((c,), jnp.float32)
    var = jnp.ones((c,), jnp.float32)
    scale = gamma / jnp.sqrt(var + eps)
    shift = beta - mean * scale
    return scale, shift


def init_params(key, inplanes, planes, groups, ks):
    width = planes  # base_width=64 -> width = planes
    expansion = 2
    f_qr, f_kr, f_sv, f_sve = 0.1, 0.1, 1.0, 0.1

    def attn_params(k, in_planes, out_planes):
        gp = out_planes // groups
        gph = gp // 2
        k1, k2 = jax.random.split(k)
        wqkv = (jax.random.normal(k1, (out_planes * 2, in_planes), jnp.float32)
                * math.sqrt(1.0 / in_planes))
        relative = (jax.random.normal(k2, (gp * 2, ks * 2 - 1), jnp.float32)
                    * math.sqrt(1.0 / gp))
        s_qkv, b_qkv = _bn_eval_scale_shift(out_planes * 2)
        s_sim, b_sim = _bn_eval_scale_shift(groups * 3)
        s_out, b_out = _bn_eval_scale_shift(out_planes * 2)

        # Fold f_sv * bn_output(sv channels) into the v channels of the qkv BN
        # (exact: softmax rows sum to 1 and v only feeds sv).
        sv_scale = (f_sv * s_out[0::2]).reshape(groups, gp)
        fold = jnp.ones((groups, 2 * gp), jnp.float32)
        fold = fold.at[:, gp:].set(sv_scale).reshape(-1)
        bn_qkv_scale = (s_qkv * fold).reshape(-1, 1)
        bn_qkv_shift = (b_qkv * fold).reshape(-1, 1)

        # relative-position embeddings, precomputed once per parameter set
        idx = jnp.arange(ks)[:, None] - jnp.arange(ks)[None, :] + ks - 1
        all_emb = jnp.take(relative, idx, axis=1)                  # (2*gp, ks, ks)
        q_emb = all_emb[:gph]
        k_emb_t = jnp.swapaxes(all_emb[gph:gp], 1, 2)
        v_emb = all_emb[gp:2 * gp]

        return dict(
            wqkv=wqkv.astype(jnp.bfloat16),
            bn_qkv_scale=bn_qkv_scale, bn_qkv_shift=bn_qkv_shift,
            q_emb=q_emb, k_emb_t=k_emb_t, v_emb=v_emb,
            s_qk=s_sim[:groups],
            s_qr=f_qr * s_sim[groups:2 * groups],
            s_kr=f_kr * s_sim[2 * groups:],
            b_sim=b_sim[:groups] + b_sim[groups:2 * groups] + b_sim[2 * groups:],
            s_sve=f_sve * s_out[1::2],                 # (out_planes,) SMEM scalars
            b_out=b_out[0::2] + b_out[1::2],           # (out_planes,) SMEM scalars
        )

    k0, k1, k2, k3 = jax.random.split(key, 4)
    w_down = (jax.random.normal(k0, (width, inplanes), jnp.float32)
              * math.sqrt(1.0 / inplanes))
    w_up = (jax.random.normal(k1, (planes * expansion, width), jnp.float32)
            * math.sqrt(1.0 / width))
    bn1_scale, bn1_shift = _bn_eval_scale_shift(width)
    bn2_scale, bn2_shift = _bn_eval_scale_shift(planes * expansion)
    return dict(
        w_down=w_down.astype(jnp.bfloat16),
        bn1_scale=bn1_scale.reshape(-1, 1), bn1_shift=bn1_shift.reshape(-1, 1),
        attn_h=attn_params(k2, width, width),
        attn_w=attn_params(k3, width, width),
        w_up=w_up.astype(jnp.bfloat16),
        bn2_scale=bn2_scale.reshape(-1, 1), bn2_shift=bn2_shift.reshape(-1, 1),
    )


# ---------------------------------------------------------------------------
if __name__ == "__main__":
    N = 2
    planes = 4
    kernel_size = 16          # feature-map spatial size (H = W = kernel_size)
    groups = 1                # AxialBlock_dynamic default
    inplanes = planes * 2     # == planes * expansion so the identity residual is valid

    key = jax.random.PRNGKey(0)
    kx, kp = jax.random.split(key)
    x = jax.random.normal(kx, (N, inplanes, kernel_size, kernel_size), jnp.float32)
    params = init_params(kp, inplanes, planes, groups, kernel_size)

    forward = jax.jit(functools.partial(axial_block_forward, groups=groups))
    out = jax.block_until_ready(forward(x, params))
    assert out.shape == (N, planes * 2, kernel_size, kernel_size)
    assert bool(jnp.all(jnp.isfinite(out)))
    print("KERNEL_OK")
</pallas_src>

<mosaic_0001>
module attributes {stable_mosaic.version = 11 : i64} {
  func.func @_down_qkv_kernel(%arg0: i32, %arg1: i32, %arg2: memref<1x8x256xf32, #tpu.memory_space<vmem>>, %arg3: memref<4x8xbf16, #tpu.memory_space<vmem>>, %arg4: memref<4x1xf32, #tpu.memory_space<vmem>>, %arg5: memref<4x1xf32, #tpu.memory_space<vmem>>, %arg6: memref<8x4xbf16, #tpu.memory_space<vmem>>, %arg7: memref<8x1xf32, #tpu.memory_space<vmem>>, %arg8: memref<8x1xf32, #tpu.memory_space<vmem>>, %arg9: memref<1x8x256xbf16, #tpu.memory_space<vmem>>) attributes {dimension_semantics = [#tpu.dimension_semantics<parallel>, #tpu.dimension_semantics<parallel>], iteration_bounds = array<i64: 2, 1>, scalar_prefetch = 0 : i64, scratch_operands = 0 : i64, tpu.core_type = #tpu.core_type<tc>, window_params = [{transform_indices = @transform_0, window_bounds = array<i64: 1, 8, 256>}, {pipeline_mode = #tpu.pipeline_mode<synchronous>, transform_indices = @transform_1, window_bounds = array<i64: 4, 8>}, {pipeline_mode = #tpu.pipeline_mode<synchronous>, transform_indices = @transform_2, window_bounds = array<i64: 4, 1>}, {pipeline_mode = #tpu.pipeline_mode<synchronous>, transform_indices = @transform_3, window_bounds = array<i64: 4, 1>}, {pipeline_mode = #tpu.pipeline_mode<synchronous>, transform_indices = @transform_4, window_bounds = array<i64: 8, 4>}, {pipeline_mode = #tpu.pipeline_mode<synchronous>, transform_indices = @transform_5, window_bounds = array<i64: 8, 1>}, {pipeline_mode = #tpu.pipeline_mode<synchronous>, transform_indices = @transform_6, window_bounds = array<i64: 8, 1>}, {transform_indices = @transform_7, window_bounds = array<i64: 1, 8, 256>}]} {
    %c0 = arith.constant 0 : index
    %c0_0 = arith.constant 0 : index
    %c0_1 = arith.constant 0 : index
    %0 = vector.load %arg2[%c0, %c0_0, %c0_1] : memref<1x8x256xf32, #tpu.memory_space<vmem>>, vector<1x8x256xf32>
    %1 = vector.shape_cast %0 : vector<1x8x256xf32> to vector<8x256xf32>
    %2 = arith.truncf %1 : vector<8x256xf32> to vector<8x256xbf16>
    %c0_2 = arith.constant 0 : index
    %c0_3 = arith.constant 0 : index
    %3 = vector.load %arg3[%c0_2, %c0_3] : memref<4x8xbf16, #tpu.memory_space<vmem>>, vector<4x8xbf16>
    %cst = arith.constant dense<0.000000e+00> : vector<4x256xf32>
    %4 = tpu.matmul %3, %2, %cst {dimension_numbers = #tpu.dot_dimension_numbers<[1], [0], [0], [1], [0, 0, 1, 1], [], []>} : vector<4x8xbf16>, vector<8x256xbf16>, vector<4x256xf32> -> vector<4x256xf32>
    %c0_4 = arith.constant 0 : index
    %c0_5 = arith.constant 0 : index
    %5 = vector.load %arg4[%c0_4, %c0_5] : memref<4x1xf32, #tpu.memory_space<vmem>>, vector<4x1xf32>
    %6 = vector.broadcast %5 : vector<4x1xf32> to vector<4x256xf32>
    %7 = arith.mulf %4, %6 : vector<4x256xf32>
    %c0_6 = arith.constant 0 : index
    %c0_7 = arith.constant 0 : index
    %8 = vector.load %arg5[%c0_6, %c0_7] : memref<4x1xf32, #tpu.memory_space<vmem>>, vector<4x1xf32>
    %9 = vector.broadcast %8 : vector<4x1xf32> to vector<4x256xf32>
    %10 = arith.addf %7, %9 : vector<4x256xf32>
    %cst_8 = arith.constant 0.000000e+00 : f32
    %11 = vector.broadcast %cst_8 : f32 to vector<4x256xf32>
    %12 = arith.maximumf %10, %11 : vector<4x256xf32>
    %c0_9 = arith.constant 0 : index
    %c0_10 = arith.constant 0 : index
    %13 = vector.load %arg6[%c0_9, %c0_10] : memref<8x4xbf16, #tpu.memory_space<vmem>>, vector<8x4xbf16>
    %14 = arith.truncf %12 : vector<4x256xf32> to vector<4x256xbf16>
    %cst_11 = arith.constant dense<0.000000e+00> : vector<8x256xf32>
    %15 = tpu.matmul %13, %14, %cst_11 {dimension_numbers = #tpu.dot_dimension_numbers<[1], [0], [0], [1], [0, 0, 1, 1], [], []>} : vector<8x4xbf16>, vector<4x256xbf16>, vector<8x256xf32> -> vector<8x256xf32>
    %c0_12 = arith.constant 0 : index
    %c0_13 = arith.constant 0 : index
    %16 = vector.load %arg7[%c0_12, %c0_13] : memref<8x1xf32, #tpu.memory_space<vmem>>, vector<8x1xf32>
    %17 = vector.broadcast %16 : vector<8x1xf32> to vector<8x256xf32>
    %18 = arith.mulf %15, %17 : vector<8x256xf32>
    %c0_14 = arith.constant 0 : index
    %c0_15 = arith.constant 0 : index
    %19 = vector.load %arg8[%c0_14, %c0_15] : memref<8x1xf32, #tpu.memory_space<vmem>>, vector<8x1xf32>
    %20 = vector.broadcast %19 : vector<8x1xf32> to vector<8x256xf32>
    %21 = arith.addf %18, %20 : vector<8x256xf32>
    %22 = arith.truncf %21 : vector<8x256xf32> to vector<8x256xbf16>
    %c0_16 = arith.constant 0 : index
    %c0_17 = arith.constant 0 : index
    %c0_18 = arith.constant 0 : index
    %23 = vector.load %arg9[%c0_16, %c0_17, %c0_18] : memref<1x8x256xbf16, #tpu.memory_space<vmem>>, vector<1x8x256xbf16>
    %24 = vector.shape_cast %23 : vector<1x8x256xbf16> to vector<8x256xbf16>
    %25 = vector.shape_cast %22 : vector<8x256xbf16> to vector<1x8x256xbf16>
    tpu.vector_store %arg9[%c0_16, %c0_17, %c0_18], %25 {strides = array<i32>} : memref<1x8x256xbf16, #tpu.memory_space<vmem>>, vector<1x8x256xbf16>,
    return
  }
  func.func @transform_0(%arg0: i32, %arg1: i32) -> (i32, i32, i32) {
    %c0_i32 = arith.constant 0 : i32
    %c0_i32_0 = arith.constant 0 : i32
    return %arg0, %c0_i32, %arg1 : i32, i32, i32
  }
  func.func @transform_1(%arg0: i32, %arg1: i32) -> (i32, i32) {
    %c0_i32 = arith.constant 0 : i32
    %c0_i32_0 = arith.constant 0 : i32
    %c0_i32_1 = arith.constant 0 : i32
    return %c0_i32, %c0_i32_0 : i32, i32
  }
  func.func @transform_2(%arg0: i32, %arg1: i32) -> (i32, i32) {
    %c0_i32 = arith.constant 0 : i32
    %c0_i32_0 = arith.constant 0 : i32
    %c0_i32_1 = arith.constant 0 : i32
    return %c0_i32, %c0_i32_0 : i32, i32
  }
  func.func @transform_3(%arg0: i32, %arg1: i32) -> (i32, i32) {
    %c0_i32 = arith.constant 0 : i32
    %c0_i32_0 = arith.constant 0 : i32
    %c0_i32_1 = arith.constant 0 : i32
    return %c0_i32, %c0_i32_0 : i32, i32
  }
  func.func @transform_4(%arg0: i32, %arg1: i32) -> (i32, i32) {
    %c0_i32 = arith.constant 0 : i32
    %c0_i32_0 = arith.constant 0 : i32
    %c0_i32_1 = arith.constant 0 : i32
    return %c0_i32, %c0_i32_0 : i32, i32
  }
  func.func @transform_5(%arg0: i32, %arg1: i32) -> (i32, i32) {
    %c0_i32 = arith.constant 0 : i32
    %c0_i32_0 = arith.constant 0 : i32
    %c0_i32_1 = arith.constant 0 : i32
    return %c0_i32, %c0_i32_0 : i32, i32
  }
  func.func @transform_6(%arg0: i32, %arg1: i32) -> (i32, i32) {
    %c0_i32 = arith.constant 0 : i32
    %c0_i32_0 = arith.constant 0 : i32
    %c0_i32_1 = arith.constant 0 : i32
    return %c0_i32, %c0_i32_0 : i32, i32
  }
  func.func @transform_7(%arg0: i32, %arg1: i32) -> (i32, i32, i32) {
    %c0_i32 = arith.constant 0 : i32
    %c0_i32_0 = arith.constant 0 : i32
    return %arg0, %c0_i32, %arg1 : i32, i32, i32
  }
}

module attributes {stable_mosaic.version = 11 : i64} {
  func.func @_axial_attn_kernel(%arg0: i32, %arg1: memref<8x8x16xbf16, #tpu.memory_space<vmem>>, %arg2: memref<8x16x2xbf16, #tpu.memory_space<vmem>>, %arg3: memref<2x16x16xf32, #tpu.memory_space<vmem>>, %arg4: memref<2x16x16xf32, #tpu.memory_space<vmem>>, %arg5: memref<4x16x16xf32, #tpu.memory_space<vmem>>, %arg6: memref<1xf32, #tpu.memory_space<smem>>, %arg7: memref<1xf32, #tpu.memory_space<smem>>, %arg8: memref<1xf32, #tpu.memory_space<smem>>, %arg9: memref<1xf32, #tpu.memory_space<smem>>, %arg10: memref<4xf32, #tpu.memory_space<smem>>, %arg11: memref<4xf32, #tpu.memory_space<smem>>, %arg12: memref<8x4x16xbf16, #tpu.memory_space<vmem>>) attributes {dimension_semantics = [#tpu.dimension_semantics<parallel>], iteration_bounds = array<i64: 4>, scalar_prefetch = 0 : i64, scratch_operands = 0 : i64, tpu.core_type = #tpu.core_type<tc>, window_params = [{transform_indices = @transform_0, window_bounds = array<i64: 8, 8, 16>}, {transform_indices = @transform_1, window_bounds = array<i64: 8, 16, 2>}, {pipeline_mode = #tpu.pipeline_mode<synchronous>, transform_indices = @transform_2, window_bounds = array<i64: 2, 16, 16>}, {pipeline_mode = #tpu.pipeline_mode<synchronous>, transform_indices = @transform_3, window_bounds = array<i64: 2, 16, 16>}, {pipeline_mode = #tpu.pipeline_mode<synchronous>, transform_indices = @transform_4, window_bounds = array<i64: 4, 16, 16>}, {transform_indices = @transform_5, window_bounds = array<i64: 1>}, {transform_indices = @transform_6, window_bounds = array<i64: 1>}, {transform_indices = @transform_7, window_bounds = array<i64: 1>}, {transform_indices = @transform_8, window_bounds = array<i64: 1>}, {transform_indices = @transform_9, window_bounds = array<i64: 4>}, {transform_indices = @transform_10, window_bounds = array<i64: 4>}, {transform_indices = @transform_11, window_bounds = array<i64: 8, 4, 16>}]} {
    %c0 = arith.constant 0 : index
    %c0_0 = arith.constant 0 : index
    %c0_1 = arith.constant 0 : index
    %0 = vector.load %arg1[%c0, %c0_0, %c0_1] : memref<8x8x16xbf16, #tpu.memory_space<vmem>>, vector<8x8x16xbf16>
    %c0_2 = arith.constant 0 : index
    %c0_3 = arith.constant 0 : index
    %c0_4 = arith.constant 0 : index
    %1 = vector.load %arg2[%c0_2, %c0_3, %c0_4] : memref<8x16x2xbf16, #tpu.memory_space<vmem>>, vector<8x16x2xbf16>
    %2 = vector.extract_strided_slice %0 {offsets = [0, 2, 0], sizes = [8, 2, 16], strides = [1, 1, 1]} : vector<8x8x16xbf16> to vector<8x2x16xbf16>
    %3 = vector.extract_strided_slice %0 {offsets = [0, 4, 0], sizes = [8, 4, 16], strides = [1, 1, 1]} : vector<8x8x16xbf16> to vector<8x4x16xbf16>
    %cst = arith.constant dense<0.000000e+00> : vector<8x16x16xf32>
    %4 = tpu.matmul %1, %2, %cst {dimension_numbers = #tpu.dot_dimension_numbers<[2], [1], [1], [2], [0, 0, 0, 1, 1, 2], [0], [0]>} : vector<8x16x2xbf16>, vector<8x2x16xbf16>, vector<8x16x16xf32> -> vector<8x16x16xf32>
    %5 = vector.extract_strided_slice %1 {offsets = [0, 0, 0], sizes = [8, 16, 1], strides = [1, 1, 1]} : vector<8x16x2xbf16> to vector<8x16x1xbf16>
    %c0_5 = arith.constant 0 : index
    %c0_6 = arith.constant 0 : index
    %c0_7 = arith.constant 0 : index
    %6 = vector.load %arg3[%c0_5, %c0_6, %c0_7] : memref<2x16x16xf32, #tpu.memory_space<vmem>>, vector<1x16x16xf32>
    %7 = vector.shape_cast %6 : vector<1x16x16xf32> to vector<16x16xf32>
    %8 = arith.extf %5 : vector<8x16x1xbf16> to vector<8x16x1xf32>
    %9 = vector.shape_cast %7 : vector<16x16xf32> to vector<1x16x16xf32>
    %10 = vector.broadcast %8 : vector<8x16x1xf32> to vector<8x16x16xf32>
    %11 = vector.broadcast %9 : vector<1x16x16xf32> to vector<8x16x16xf32>
    %12 = arith.mulf %10, %11 : vector<8x16x16xf32>
    %13 = vector.extract_strided_slice %2 {offsets = [0, 0, 0], sizes = [8, 1, 16], strides = [1, 1, 1]} : vector<8x2x16xbf16> to vector<8x1x16xbf16>
    %c0_8 = arith.constant 0 : index
    %c0_9 = arith.constant 0 : index
    %c0_10 = arith.constant 0 : index
    %14 = vector.load %arg4[%c0_8, %c0_9, %c0_10] : memref<2x16x16xf32, #tpu.memory_space<vmem>>, vector<1x16x16xf32>
    %15 = vector.shape_cast %14 : vector<1x16x16xf32> to vector<16x16xf32>
    %16 = arith.extf %13 : vector<8x1x16xbf16> to vector<8x1x16xf32>
    %17 = vector.shape_cast %15 : vector<16x16xf32> to vector<1x16x16xf32>
    %18 = vector.broadcast %16 : vector<8x1x16xf32> to vector<8x16x16xf32>
    %19 = vector.broadcast %17 : vector<1x16x16xf32> to vector<8x16x16xf32>
    %20 = arith.mulf %18, %19 : vector<8x16x16xf32>
    %21 = vector.extract_strided_slice %1 {offsets = [0, 0, 1], sizes = [8, 16, 1], strides = [1, 1, 1]} : vector<8x16x2xbf16> to vector<8x16x1xbf16>
    %c1 = arith.constant 1 : index
    %c0_11 = arith.constant 0 : index
    %c0_12 = arith.constant 0 : index
    %22 = vector.load %arg3[%c1, %c0_11, %c0_12] : memref<2x16x16xf32, #tpu.memory_space<vmem>>, vector<1x16x16xf32>
    %23 = vector.shape_cast %22 : vector<1x16x16xf32> to vector<16x16xf32>
    %24 = arith.extf %21 : vector<8x16x1xbf16> to vector<8x16x1xf32>
    %25 = vector.shape_cast %23 : vector<16x16xf32> to vector<1x16x16xf32>
    %26 = vector.broadcast %24 : vector<8x16x1xf32> to vector<8x16x16xf32>
    %27 = vector.broadcast %25 : vector<1x16x16xf32> to vector<8x16x16xf32>
    %28 = arith.mulf %26, %27 : vector<8x16x16xf32>
    %29 = arith.addf %12, %28 : vector<8x16x16xf32>
    %30 = vector.extract_strided_slice %2 {offsets = [0, 1, 0], sizes = [8, 1, 16], strides = [1, 1, 1]} : vector<8x2x16xbf16> to vector<8x1x16xbf16>
    %c1_13 = arith.constant 1 : index
    %c0_14 = arith.constant 0 : index
    %c0_15 = arith.constant 0 : index
    %31 = vector.load %arg4[%c1_13, %c0_14, %c0_15] : memref<2x16x16xf32, #tpu.memory_space<vmem>>, vector<1x16x16xf32>
    %32 = vector.shape_cast %31 : vector<1x16x16xf32> to vector<16x16xf32>
    %33 = arith.extf %30 : vector<8x1x16xbf16> to vector<8x1x16xf32>
    %34 = vector.shape_cast %32 : vector<16x16xf32> to vector<1x16x16xf32>
    %35 = vector.broadcast %33 : vector<8x1x16xf32> to vector<8x16x16xf32>
    %36 = vector.broadcast %34 : vector<1x16x16xf32> to vector<8x16x16xf32>
    %37 = arith.mulf %35, %36 : vector<8x16x16xf32>
    %38 = arith.addf %20, %37 : vector<8x16x16xf32>
    %c0_16 = arith.constant 0 : index
    %39 = memref.load %arg6[%c0_16] : memref<1xf32, #tpu.memory_space<smem>>
    %40 = vector.broadcast %39 : f32 to vector<8x16x16xf32>
    %41 = arith.mulf %4, %40 : vector<8x16x16xf32>
    %c0_17 = arith.constant 0 : index
    %42 = memref.load %arg7[%c0_17] : memref<1xf32, #tpu.memory_space<smem>>
    %43 = vector.broadcast %42 : f32 to vector<8x16x16xf32>
    %44 = arith.mulf %29, %43 : vector<8x16x16xf32>
    %45 = arith.addf %41, %44 : vector<8x16x16xf32>
    %c0_18 = arith.constant 0 : index
    %46 = memref.load %arg8[%c0_18] : memref<1xf32, #tpu.memory_space<smem>>
    %47 = vector.broadcast %46 : f32 to vector<8x16x16xf32>
    %48 = arith.mulf %38, %47 : vector<8x16x16xf32>
    %49 = arith.addf %45, %48 : vector<8x16x16xf32>
    %c0_19 = arith.constant 0 : index
    %50 = memref.load %arg9[%c0_19] : memref<1xf32, #tpu.memory_space<smem>>
    %51 = vector.broadcast %50 : f32 to vector<8x16x16xf32>
    %52 = arith.addf %49, %51 : vector<8x16x16xf32>
    %cst_20 = arith.constant dense<0xFF800000> : vector<8x16xf32>
    %53 = vector.multi_reduction <maximumf>, %52, %cst_20 [2] : vector<8x16x16xf32> to vector<8x16xf32>
    %54 = vector.shape_cast %53 : vector<8x16xf32> to vector<8x16x1xf32>
    %55 = vector.broadcast %54 : vector<8x16x1xf32> to vector<8x16x16xf32>
    %56 = arith.subf %52, %55 : vector<8x16x16xf32>
    %57 = math.exp %56 : vector<8x16x16xf32>
    %cst_21 = arith.constant dense<0.000000e+00> : vector<8x16xf32>
    %58 = vector.multi_reduction <add>, %57, %cst_21 [2] : vector<8x16x16xf32> to vector<8x16xf32>
    %59 = vector.shape_cast %58 : vector<8x16xf32> to vector<8x16x1xf32>
    %60 = tpu.reciprocal %59 {approx = true} : vector<8x16x1xf32> -> vector<8x16x1xf32>
    %61 = vector.broadcast %60 : vector<8x16x1xf32> to vector<8x16x16xf32>
    %62 = arith.mulf %57, %61 : vector<8x16x16xf32>
    %63 = arith.truncf %62 : vector<8x16x16xf32> to vector<8x16x16xbf16>
    %cst_22 = arith.constant dense<0.000000e+00> : vector<8x4x16xf32>
    %64 = tpu.matmul %3, %63, %cst_22 {dimension_numbers = #tpu.dot_dimension_numbers<[2], [2], [1], [1], [0, 0, 0, 1, 1, 1], [0], [0]>} : vector<8x4x16xbf16>, vector<8x16x16xbf16>, vector<8x4x16xf32> -> vector<8x4x16xf32>
    %c0_23 = arith.constant 0 : index
    %c0_24 = arith.constant 0 : index
    %c0_25 = arith.constant 0 : index
    %65 = vector.load %arg5[%c0_23, %c0_24, %c0_25] : memref<4x16x16xf32, #tpu.memory_space<vmem>>, vector<1x16x16xf32>
    %66 = vector.shape_cast %65 : vector<1x16x16xf32> to vector<16x16xf32>
    %67 = vector.shape_cast %66 : vector<16x16xf32> to vector<1x16x16xf32>
    %68 = vector.broadcast %67 : vector<1x16x16xf32> to vector<8x16x16xf32>
    %69 = arith.mulf %62, %68 : vector<8x16x16xf32>
    %cst_26 = arith.constant dense<0.000000e+00> : vector<8x16xf32>
    %70 = vector.multi_reduction <add>, %69, %cst_26 [2] : vector<8x16x16xf32> to vector<8x16xf32>
    %c0_27 = arith.constant 0 : index
    %71 = memref.load %arg10[%c0_27] : memref<4xf32, #tpu.memory_space<smem>>
    %72 = vector.broadcast %71 : f32 to vector<8x16xf32>
    %73 = arith.mulf %70, %72 : vector<8x16xf32>
    %c0_28 = arith.constant 0 : index
    %74 = memref.load %arg11[%c0_28] : memref<4xf32, #tpu.memory_space<smem>>
    %75 = vector.broadcast %74 : f32 to vector<8x16xf32>
    %76 = arith.addf %73, %75 : vector<8x16xf32>
    %c1_29 = arith.constant 1 : index
    %c0_30 = arith.constant 0 : index
    %c0_31 = arith.constant 0 : index
    %77 = vector.load %arg5[%c1_29, %c0_30, %c0_31] : memref<4x16x16xf32, #tpu.memory_space<vmem>>, vector<1x16x16xf32>
    %78 = vector.shape_cast %77 : vector<1x16x16xf32> to vector<16x16xf32>
    %79 = vector.shape_cast %78 : vector<16x16xf32> to vector<1x16x16xf32>
    %80 = vector.broadcast %79 : vector<1x16x16xf32> to vector<8x16x16xf32>
    %81 = arith.mulf %62, %80 : vector<8x16x16xf32>
    %cst_32 = arith.constant dense<0.000000e+00> : vector<8x16xf32>
    %82 = vector.multi_reduction <add>, %81, %cst_32 [2] : vector<8x16x16xf32> to vector<8x16xf32>
    %c1_33 = arith.constant 1 : index
    %83 = memref.load %arg10[%c1_33] : memref<4xf32, #tpu.memory_space<smem>>
    %84 = vector.broadcast %83 : f32 to vector<8x16xf32>
    %85 = arith.mulf %82, %84 : vector<8x16xf32>
    %c1_34 = arith.constant 1 : index
    %86 = memref.load %arg11[%c1_34] : memref<4xf32, #tpu.memory_space<smem>>
    %87 = vector.broadcast %86 : f32 to vector<8x16xf32>
    %88 = arith.addf %85, %87 : vector<8x16xf32>
    %c2 = arith.constant 2 : index
    %c0_35 = arith.constant 0 : index
    %c0_36 = arith.constant 0 : index
    %89 = vector.load %arg5[%c2, %c0_35, %c0_36] : memref<4x16x16xf32, #tpu.memory_space<vmem>>, vector<1x16x16xf32>
    %90 = vector.shape_cast %89 : vector<1x16x16xf32> to vector<16x16xf32>
    %91 = vector.shape_cast %90 : vector<16x16xf32> to vector<1x16x16xf32>
    %92 = vector.broadcast %91 : vector<1x16x16xf32> to vector<8x16x16xf32>
    %93 = arith.mulf %62, %92 : vector<8x16x16xf32>
    %cst_37 = arith.constant dense<0.000000e+00> : vector<8x16xf32>
    %94 = vector.multi_reduction <add>, %93, %cst_37 [2] : vector<8x16x16xf32> to vector<8x16xf32>
    %c2_38 = arith.constant 2 : index
    %95 = memref.load %arg10[%c2_38] : memref<4xf32, #tpu.memory_space<smem>>
    %96 = vector.broadcast %95 : f32 to vector<8x16xf32>
    %97 = arith.mulf %94, %96 : vector<8x16xf32>
    %c2_39 = arith.constant 2 : index
    %98 = memref.load %arg11[%c2_39] : memref<4xf32, #tpu.memory_space<smem>>
    %99 = vector.broadcast %98 : f32 to vector<8x16xf32>
    %100 = arith.addf %97, %99 : vector<8x16xf32>
    %c3 = arith.constant 3 : index
    %c0_40 = arith.constant 0 : index
    %c0_41 = arith.constant 0 : index
    %101 = vector.load %arg5[%c3, %c0_40, %c0_41] : memref<4x16x16xf32, #tpu.memory_space<vmem>>, vector<1x16x16xf32>
    %102 = vector.shape_cast %101 : vector<1x16x16xf32> to vector<16x16xf32>
    %103 = vector.shape_cast %102 : vector<16x16xf32> to vector<1x16x16xf32>
    %104 = vector.broadcast %103 : vector<1x16x16xf32> to vector<8x16x16xf32>
    %105 = arith.mulf %62, %104 : vector<8x16x16xf32>
    %cst_42 = arith.constant dense<0.000000e+00> : vector<8x16xf32>
    %106 = vector.multi_reduction <add>, %105, %cst_42 [2] : vector<8x16x16xf32> to vector<8x16xf32>
    %c3_43 = arith.constant 3 : index
    %107 = memref.load %arg10[%c3_43] : memref<4xf32, #tpu.memory_space<smem>>
    %108 = vector.broadcast %107 : f32 to vector<8x16xf32>
    %109 = arith.mulf %106, %108 : vector<8x16xf32>
    %c3_44 = arith.constant 3 : index
    %110 = memref.load %arg11[%c3_44] : memref<4xf32, #tpu.memory_space<smem>>
    %111 = vector.broadcast %110 : f32 to vector<8x16xf32>
    %112 = arith.addf %109, %111 : vector<8x16xf32>
    %113 = vector.shape_cast %76 : vector<8x16xf32> to vector<8x1x16xf32>
    %114 = vector.shape_cast %88 : vector<8x16xf32> to vector<8x1x16xf32>
    %115 = vector.shape_cast %100 : vector<8x16xf32> to vector<8x1x16xf32>
    %116 = vector.shape_cast %112 : vector<8x16xf32> to vector<8x1x16xf32>
    %117 = tpu.concatenate %113, %114, %115, %116 in 1 : vector<8x1x16xf32>, vector<8x1x16xf32>, vector<8x1x16xf32>, vector<8x1x16xf32> -> vector<8x4x16xf32>
    %118 = arith.addf %64, %117 : vector<8x4x16xf32>
    %119 = arith.truncf %118 : vector<8x4x16xf32> to vector<8x4x16xbf16>
    %c0_45 = arith.constant 0 : index
    %c0_46 = arith.constant 0 : index
    %c0_47 = arith.constant 0 : index
    %120 = vector.load %arg12[%c0_45, %c0_46, %c0_47] : memref<8x4x16xbf16, #tpu.memory_space<vmem>>, vector<8x4x16xbf16>
    tpu.vector_store %arg12[%c0_45, %c0_46, %c0_47], %119 {strides = array<i32>} : memref<8x4x16xbf16, #tpu.memory_space<vmem>>, vector<8x4x16xbf16>,
    return
  }
  func.func @transform_0(%arg0: i32) -> (i32, i32, i32) {
    %c0_i32 = arith.constant 0 : i32
    %c0_i32_0 = arith.constant 0 : i32
    %c0_i32_1 = arith.constant 0 : i32
    return %arg0, %c0_i32, %c0_i32_0 : i32, i32, i32
  }
  func.func @transform_1(%arg0: i32) -> (i32, i32, i32) {
    %c0_i32 = arith.constant 0 : i32
    %c0_i32_0 = arith.constant 0 : i32
    %c0_i32_1 = arith.constant 0 : i32
    return %arg0, %c0_i32, %c0_i32_0 : i32, i32, i32
  }
  func.func @transform_2(%arg0: i32) -> (i32, i32, i32) {
    %c0_i32 = arith.constant 0 : i32
    %c0_i32_0 = arith.constant 0 : i32
    %c0_i32_1 = arith.constant 0 : i32
    %c0_i32_2 = arith.constant 0 : i32
    return %c0_i32, %c0_i32_0, %c0_i32_1 : i32, i32, i32
  }
  func.func @transform_3(%arg0: i32) -> (i32, i32, i32) {
    %c0_i32 = arith.constant 0 : i32
    %c0_i32_0 = arith.constant 0 : i32
    %c0_i32_1 = arith.constant 0 : i32
    %c0_i32_2 = arith.constant 0 : i32
    return %c0_i32, %c0_i32_0, %c0_i32_1 : i32, i32, i32
  }
  func.func @transform_4(%arg0: i32) -> (i32, i32, i32) {
    %c0_i32 = arith.constant 0 : i32
    %c0_i32_0 = arith.constant 0 : i32
    %c0_i32_1 = arith.constant 0 : i32
    %c0_i32_2 = arith.constant 0 : i32
    return %c0_i32, %c0_i32_0, %c0_i32_1 : i32, i32, i32
  }
  func.func @transform_5(%arg0: i32) -> i32 {
    %c0_i32 = arith.constant 0 : i32
    %c0_i32_0 = arith.constant 0 : i32
    return %c0_i32 : i32
  }
  func.func @transform_6(%arg0: i32) -> i32 {
    %c0_i32 = arith.constant 0 : i32
    %c0_i32_0 = arith.constant 0 : i32
    return %c0_i32 : i32
  }
  func.func @transform_7(%arg0: i32) -> i32 {
    %c0_i32 = arith.constant 0 : i32
    %c0_i32_0 = arith.constant 0 : i32
    return %c0_i32 : i32
  }
  func.func @transform_8(%arg0: i32) -> i32 {
    %c0_i32 = arith.constant 0 : i32
    %c0_i32_0 = arith.constant 0 : i32
    return %c0_i32 : i32
  }
  func.func @transform_9(%arg0: i32) -> i32 {
    %c0_i32 = arith.constant 0 : i32
    %c0_i32_0 = arith.constant 0 : i32
    return %c0_i32 : i32
  }
  func.func @transform_10(%arg0: i32) -> i32 {
    %c0_i32 = arith.constant 0 : i32
    %c0_i32_0 = arith.constant 0 : i32
    return %c0_i32 : i32
  }
  func.func @transform_11(%arg0: i32) -> (i32, i32, i32) {
    %c0_i32 = arith.constant 0 : i32
    %c0_i32_0 = arith.constant 0 : i32
    %c0_i32_1 = arith.constant 0 : i32
    return %arg0, %c0_i32, %c0_i32_0 : i32, i32, i32
  }
}

module attributes {stable_mosaic.version = 11 : i64} {
  func.func @_proj_bn_kernel(%arg0: i32, %arg1: i32, %arg2: memref<1x4x256xbf16, #tpu.memory_space<vmem>>, %arg3: memref<8x4xbf16, #tpu.memory_space<vmem>>, %arg4: memref<8x1xf32, #tpu.memory_space<vmem>>, %arg5: memref<8x1xf32, #tpu.memory_space<vmem>>, %arg6: memref<1x8x256xbf16, #tpu.memory_space<vmem>>) attributes {dimension_semantics = [#tpu.dimension_semantics<parallel>, #tpu.dimension_semantics<parallel>], iteration_bounds = array<i64: 2, 1>, scalar_prefetch = 0 : i64, scratch_operands = 0 : i64, tpu.core_type = #tpu.core_type<tc>, window_params = [{transform_indices = @transform_0, window_bounds = array<i64: 1, 4, 256>}, {pipeline_mode = #tpu.pipeline_mode<synchronous>, transform_indices = @transform_1, window_bounds = array<i64: 8, 4>}, {pipeline_mode = #tpu.pipeline_mode<synchronous>, transform_indices = @transform_2, window_bounds = array<i64: 8, 1>}, {pipeline_mode = #tpu.pipeline_mode<synchronous>, transform_indices = @transform_3, window_bounds = array<i64: 8, 1>}, {transform_indices = @transform_4, window_bounds = array<i64: 1, 8, 256>}]} {
    %c0 = arith.constant 0 : index
    %c0_0 = arith.constant 0 : index
    %0 = vector.load %arg3[%c0, %c0_0] : memref<8x4xbf16, #tpu.memory_space<vmem>>, vector<8x4xbf16>
    %c0_1 = arith.constant 0 : index
    %c0_2 = arith.constant 0 : index
    %c0_3 = arith.constant 0 : index
    %1 = vector.load %arg2[%c0_1, %c0_2, %c0_3] : memref<1x4x256xbf16, #tpu.memory_space<vmem>>, vector<1x4x256xbf16>
    %2 = vector.shape_cast %1 : vector<1x4x256xbf16> to vector<4x256xbf16>
    %cst = arith.constant dense<0.000000e+00> : vector<8x256xf32>
    %3 = tpu.matmul %0, %2, %cst {dimension_numbers = #tpu.dot_dimension_numbers<[1], [0], [0], [1], [0, 0, 1, 1], [], []>} : vector<8x4xbf16>, vector<4x256xbf16>, vector<8x256xf32> -> vector<8x256xf32>
    %c0_4 = arith.constant 0 : index
    %c0_5 = arith.constant 0 : index
    %4 = vector.load %arg4[%c0_4, %c0_5] : memref<8x1xf32, #tpu.memory_space<vmem>>, vector<8x1xf32>
    %5 = vector.broadcast %4 : vector<8x1xf32> to vector<8x256xf32>
    %6 = arith.mulf %3, %5 : vector<8x256xf32>
    %c0_6 = arith.constant 0 : index
    %c0_7 = arith.constant 0 : index
    %7 = vector.load %arg5[%c0_6, %c0_7] : memref<8x1xf32, #tpu.memory_space<vmem>>, vector<8x1xf32>
    %8 = vector.broadcast %7 : vector<8x1xf32> to vector<8x256xf32>
    %9 = arith.addf %6, %8 : vector<8x256xf32>
    %10 = arith.truncf %9 : vector<8x256xf32> to vector<8x256xbf16>
    %c0_8 = arith.constant 0 : index
    %c0_9 = arith.constant 0 : index
    %c0_10 = arith.constant 0 : index
    %11 = vector.load %arg6[%c0_8, %c0_9, %c0_10] : memref<1x8x256xbf16, #tpu.memory_space<vmem>>, vector<1x8x256xbf16>
    %12 = vector.shape_cast %11 : vector<1x8x256xbf16> to vector<8x256xbf16>
    %13 = vector.shape_cast %10 : vector<8x256xbf16> to vector<1x8x256xbf16>
    tpu.vector_store %arg6[%c0_8, %c0_9, %c0_10], %13 {strides = array<i32>} : memref<1x8x256xbf16, #tpu.memory_space<vmem>>, vector<1x8x256xbf16>,
    return
  }
  func.func @transform_0(%arg0: i32, %arg1: i32) -> (i32, i32, i32) {
    %c0_i32 = arith.constant 0 : i32
    %c0_i32_0 = arith.constant 0 : i32
    return %arg0, %c0_i32, %arg1 : i32, i32, i32
  }
  func.func @transform_1(%arg0: i32, %arg1: i32) -> (i32, i32) {
    %c0_i32 = arith.constant 0 : i32
    %c0_i32_0 = arith.constant 0 : i32
    %c0_i32_1 = arith.constant 0 : i32
    return %c0_i32, %c0_i32_0 : i32, i32
  }
  func.func @transform_2(%arg0: i32, %arg1: i32) -> (i32, i32) {
    %c0_i32 = arith.constant 0 : i32
    %c0_i32_0 = arith.constant 0 : i32
    %c0_i32_1 = arith.constant 0 : i32
    return %c0_i32, %c0_i32_0 : i32, i32
  }
  func.func @transform_3(%arg0: i32, %arg1: i32) -> (i32, i32) {
    %c0_i32 = arith.constant 0 : i32
    %c0_i32_0 = arith.constant 0 : i32
    %c0_i32_1 = arith.constant 0 : i32
    return %c0_i32, %c0_i32_0 : i32, i32
  }
  func.func @transform_4(%arg0: i32, %arg1: i32) -> (i32, i32, i32) {
    %c0_i32 = arith.constant 0 : i32
    %c0_i32_0 = arith.constant 0 : i32
    return %arg0, %c0_i32, %arg1 : i32, i32, i32
  }
}

module attributes {stable_mosaic.version = 11 : i64} {
  func.func @_up_res_kernel(%arg0: i32, %arg1: i32, %arg2: memref<1x4x256xbf16, #tpu.memory_space<vmem>>, %arg3: memref<1x8x256xf32, #tpu.memory_space<vmem>>, %arg4: memref<8x4xbf16, #tpu.memory_space<vmem>>, %arg5: memref<8x1xf32, #tpu.memory_space<vmem>>, %arg6: memref<8x1xf32, #tpu.memory_space<vmem>>, %arg7: memref<1x8x256xf32, #tpu.memory_space<vmem>>) attributes {dimension_semantics = [#tpu.dimension_semantics<parallel>, #tpu.dimension_semantics<parallel>], iteration_bounds = array<i64: 2, 1>, scalar_prefetch = 0 : i64, scratch_operands = 0 : i64, tpu.core_type = #tpu.core_type<tc>, window_params = [{transform_indices = @transform_0, window_bounds = array<i64: 1, 4, 256>}, {transform_indices = @transform_1, window_bounds = array<i64: 1, 8, 256>}, {pipeline_mode = #tpu.pipeline_mode<synchronous>, transform_indices = @transform_2, window_bounds = array<i64: 8, 4>}, {pipeline_mode = #tpu.pipeline_mode<synchronous>, transform_indices = @transform_3, window_bounds = array<i64: 8, 1>}, {pipeline_mode = #tpu.pipeline_mode<synchronous>, transform_indices = @transform_4, window_bounds = array<i64: 8, 1>}, {transform_indices = @transform_5, window_bounds = array<i64: 1, 8, 256>}]} {
    %c0 = arith.constant 0 : index
    %c0_0 = arith.constant 0 : index
    %c0_1 = arith.constant 0 : index
    %0 = vector.load %arg2[%c0, %c0_0, %c0_1] : memref<1x4x256xbf16, #tpu.memory_space<vmem>>, vector<1x4x256xbf16>
    %1 = vector.shape_cast %0 : vector<1x4x256xbf16> to vector<4x256xbf16>
    %cst = arith.constant 0.000000e+00 : bf16
    %2 = vector.broadcast %cst : bf16 to vector<4x256xbf16>
    %3 = arith.maximumf %1, %2 : vector<4x256xbf16>
    %c0_2 = arith.constant 0 : index
    %c0_3 = arith.constant 0 : index
    %4 = vector.load %arg4[%c0_2, %c0_3] : memref<8x4xbf16, #tpu.memory_space<vmem>>, vector<8x4xbf16>
    %cst_4 = arith.constant dense<0.000000e+00> : vector<8x256xf32>
    %5 = tpu.matmul %4, %3, %cst_4 {dimension_numbers = #tpu.dot_dimension_numbers<[1], [0], [0], [1], [0, 0, 1, 1], [], []>} : vector<8x4xbf16>, vector<4x256xbf16>, vector<8x256xf32> -> vector<8x256xf32>
    %c0_5 = arith.constant 0 : index
    %c0_6 = arith.constant 0 : index
    %6 = vector.load %arg5[%c0_5, %c0_6] : memref<8x1xf32, #tpu.memory_space<vmem>>, vector<8x1xf32>
    %7 = vector.broadcast %6 : vector<8x1xf32> to vector<8x256xf32>
    %8 = arith.mulf %5, %7 : vector<8x256xf32>
    %c0_7 = arith.constant 0 : index
    %c0_8 = arith.constant 0 : index
    %9 = vector.load %arg6[%c0_7, %c0_8] : memref<8x1xf32, #tpu.memory_space<vmem>>, vector<8x1xf32>
    %10 = vector.broadcast %9 : vector<8x1xf32> to vector<8x256xf32>
    %11 = arith.addf %8, %10 : vector<8x256xf32>
    %c0_9 = arith.constant 0 : index
    %c0_10 = arith.constant 0 : index
    %c0_11 = arith.constant 0 : index
    %12 = vector.load %arg3[%c0_9, %c0_10, %c0_11] : memref<1x8x256xf32, #tpu.memory_space<vmem>>, vector<1x8x256xf32>
    %13 = vector.shape_cast %12 : vector<1x8x256xf32> to vector<8x256xf32>
    %14 = arith.addf %11, %13 : vector<8x256xf32>
    %cst_12 = arith.constant 0.000000e+00 : f32
    %15 = vector.broadcast %cst_12 : f32 to vector<8x256xf32>
    %16 = arith.maximumf %14, %15 : vector<8x256xf32>
    %c0_13 = arith.constant 0 : index
    %c0_14 = arith.constant 0 : index
    %c0_15 = arith.constant 0 : index
    %17 = vector.load %arg7[%c0_13, %c0_14, %c0_15] : memref<1x8x256xf32, #tpu.memory_space<vmem>>, vector<1x8x256xf32>
    %18 = vector.shape_cast %17 : vector<1x8x256xf32> to vector<8x256xf32>
    %19 = vector.shape_cast %16 : vector<8x256xf32> to vector<1x8x256xf32>
    tpu.vector_store %arg7[%c0_13, %c0_14, %c0_15], %19 {strides = array<i32>} : memref<1x8x256xf32, #tpu.memory_space<vmem>>, vector<1x8x256xf32>,
    return
  }
  func.func @transform_0(%arg0: i32, %arg1: i32) -> (i32, i32, i32) {
    %c0_i32 = arith.constant 0 : i32
    %c0_i32_0 = arith.constant 0 : i32
    return %arg0, %c0_i32, %arg1 : i32, i32, i32
  }
  func.func @transform_1(%arg0: i32, %arg1: i32) -> (i32, i32, i32) {
    %c0_i32 = arith.constant 0 : i32
    %c0_i32_0 = arith.constant 0 : i32
    return %arg0, %c0_i32, %arg1 : i32, i32, i32
  }
  func.func @transform_2(%arg0: i32, %arg1: i32) -> (i32, i32) {
    %c0_i32 = arith.constant 0 : i32
    %c0_i32_0 = arith.constant 0 : i32
    %c0_i32_1 = arith.constant 0 : i32
    return %c0_i32, %c0_i32_0 : i32, i32
  }
  func.func @transform_3(%arg0: i32, %arg1: i32) -> (i32, i32) {
    %c0_i32 = arith.constant 0 : i32
    %c0_i32_0 = arith.constant 0 : i32
    %c0_i32_1 = arith.constant 0 : i32
    return %c0_i32, %c0_i32_0 : i32, i32
  }
  func.func @transform_4(%arg0: i32, %arg1: i32) -> (i32, i32) {
    %c0_i32 = arith.constant 0 : i32
    %c0_i32_0 = arith.constant 0 : i32
    %c0_i32_1 = arith.constant 0 : i32
    return %c0_i32, %c0_i32_0 : i32, i32
  }
  func.func @transform_5(%arg0: i32, %arg1: i32) -> (i32, i32, i32) {
    %c0_i32 = arith.constant 0 : i32
    %c0_i32_0 = arith.constant 0 : i32
    return %arg0, %c0_i32, %arg1 : i32, i32, i32
  }
}

</mosaic_0001>

<llo_original>
// kernel: axial_block_forward.5
$region0: #{axial_block_forward.5}
  #allocation0 [shape = 'u32[]', space=smem, size = 0x4, offset = 0x4, fixed_abs, tag = 'smem constant byte address 0x4 - core index']
  #allocation1 [shape = 'u32[144,128]{1,0:T(1,128)}', space=vmem, size = 0x12000, scoped, tag = 'internal scratch']
  %s0 = inlined_call_operand.hbm [shape: f32[2,8,256], index: 0, kind: input, shape index: {}]
  %s1 = inlined_call_operand.hbm [shape: bf16[4,8], index: 1, kind: input, shape index: {}]
  %s2 = inlined_call_operand.hbm [shape: f32[4,1], index: 2, kind: input, shape index: {}]
  %s3 = inlined_call_operand.hbm [shape: f32[4,1], index: 3, kind: input, shape index: {}]
  %s4 = inlined_call_operand.hbm [shape: bf16[8,4], index: 4, kind: input, shape index: {}]
  %s5 = inlined_call_operand.hbm [shape: f32[8,1], index: 5, kind: input, shape index: {}]
  %s6 = inlined_call_operand.hbm [shape: f32[8,1], index: 6, kind: input, shape index: {}]
  %s7 = inlined_call_operand.hbm [shape: bf16[2,8,256], index: 7, kind: output, shape index: {}]
  %s8 = sld [smem:[#allocation0]]
  $region89: #{axial_block_forward.5} parent=0
    _
  %s10 = ssub.s32 1, %s8
  %s11 = scalar_select 0, %s10, %s8
  $region1: #{axial_block_forward.5} parent=0
    #allocation2 [shape = 'u8[16384]{0}', space=vmem, size = 0x4000, scoped, tag = 'input window, operand 0']
    #allocation3 [shape = 's32[2]{0}', space=sflag, size = 0x8, scoped, tag = 'scoped memory for axial_block_forward.5']
    #allocation4 [shape = 's32[2]{0}', space=sflag, size = 0x8, scoped, tag = 'scoped memory for axial_block_forward.5']
    #allocation5 [shape = 'u8[1024]{0}', space=vmem, size = 0x400, scoped, tag = 'input window, operand 1, single buffered']
    #allocation6 [shape = 's32[1]{0}', space=sflag, size = 0x4, scoped, tag = 'scoped memory for axial_block_forward.5']
    #allocation7 [shape = 'u8[2048]{0}', space=vmem, size = 0x800, scoped, tag = 'input window, operand 2, single buffered']
    #allocation8 [shape = 'u8[2048]{0}', space=vmem, size = 0x800, scoped, tag = 'input window, operand 3, single buffered']
    #allocation9 [shape = 's32[1]{0}', space=sflag, size = 0x4, scoped, tag = 'scoped memory for axial_block_forward.5']
    #allocation10 [shape = 'u8[2048]{0}', space=vmem, size = 0x800, scoped, tag = 'input window, operand 4, single buffered']
    #allocation11 [shape = 'u8[4096]{0}', space=vmem, size = 0x1000, scoped, tag = 'input window, operand 5, single buffered']
    #allocation12 [shape = 's32[1]{0}', space=sflag, size = 0x4, scoped, tag = 'scoped memory for axial_block_forward.5']
    #allocation13 [shape = 'u8[4096]{0}', space=vmem, size = 0x1000, scoped, tag = 'input window, operand 6, single buffered']
    #allocation14 [shape = 'u8[8192]{0}', space=vmem, size = 0x2000, scoped, tag = 'output window, operand 0']
    %12 = vsyncpa [#allocation3], 0
    %s13 = scalar_lea.sflag [#allocation3], 1
    %14 = vsyncpa %s13, 0
    %15 = vsyncpa [#allocation6], 0
    %16 = vsyncpa [#allocation9], 0
    %17 = vsyncpa [#allocation12], 0
    %18 = vsyncpa [#allocation4], 0
    %s19 = scalar_lea.sflag [#allocation4], 1
    %20 = vsyncpa %s19, 0
    loop: start=0, step=1, limit=4
    $region2: #{axial_block_forward.5} parent=1 // loop_pre_header
      _
    $region3: #{axial_block_forward.5} parent=1 // loop_header
      %s22 = sphi 0, %s26
      %p23 = scmp.ge.s32.totalorder %s22, 4
      %s29 = sphi 0, %s41
      %s30 = sphi 0, %s37
      %s31 = sphi 0, %s29
      %s32 = sphi 0, %s30
      %s33 = sphi 0, %s31
      %s34 = sphi 0, %s32
      %s46 = sphi 0, %s48
      %s49 = sphi 0, %s46
      %s50 = sphi 0, %s49
      %s66 = sphi 0, %s50
      %s70 = sphi 0, %s70
      %s72 = sphi 0, %s70
      %s73 = sphi 0, %s72
      %s87 = sphi 0, %s73
      %s91 = sphi 0, %s91
      %s93 = sphi 0, %s91
      %s94 = sphi 0, %s93
      %s108 = sphi 0, %s94
      %s112 = sphi 0, %s112
      %s114 = sphi 0, %s112
      %s115 = sphi 0, %s114
      %s129 = sphi 0, %s115
      %s133 = sphi 0, %s133
      %s135 = sphi 0, %s133
      %s136 = sphi 0, %s135
      %s150 = sphi 0, %s136
      %s154 = sphi 0, %s154
      %s156 = sphi 0, %s154
      %s157 = sphi 0, %s156
      %s171 = sphi 0, %s157
      %s175 = sphi 0, %s175
      %s177 = sphi 0, %s175
      %s178 = sphi 0, %s177
      %s192 = sphi 0, %s178
      %s200 = sphi 0, %s202
      %s203 = sphi 0, %s200
      %s204 = sphi 0, %s203
      %s220 = sphi 0, %s204
    $region4: #{axial_block_forward.5} parent=1 // loop_header_branch
      %25 = sbr.rel (%p23) target = $region8
    $region5: #{axial_block_forward.5} parent=1 // loop_body
      %s27 = ssub.s32 %s22, 1
      %s28 = ssub.s32 %s22, 2
      %s35 = sadd.s32 1, %s30
      %p36 = scmp.ge.s32.totalorder %s35, 1
      %s37 = scalar_select %p36, 0, %s35
      %s38 = sadd.s32 1, %s29
      %s39 = scalar_select %p36, %s38, %s29
      %p40 = scmp.ge.s32.totalorder %s39, 2
      %s41 = scalar_select %p40, 0, %s39
      %s42 = ssub.s32 %s29, %s41
      %s43 = ssub.s32 %s30, %s37
      %s44 = sor.u32 %s42, %s43
      %p45 = scmp.eq.s32.totalorder %s44, 0
      %s47 = sadd.s32 %s46, 1
      %s48 = scalar_select %p45, %s46, %s47
      %p51 = pneg %p45
      %p52 = scmp.eq.s32.totalorder %s22, 1
      %p53 = por %p51, %p52
      %p54 = scmp.ne.s32.totalorder %s46, %s49
      %p55 = scmp.eq.s32.totalorder %s22, 0
      %p56 = por %p54, %p55
      %p57 = scmp.ne.s32.totalorder %s46, %s49
      %p58 = scmp.eq.s32.totalorder %s27, 1
      %p59 = por %p57, %p58
      %p60 = scmp.ne.s32.totalorder %s49, %s50
      %p61 = scmp.eq.s32.totalorder %s27, 0
      %p62 = por %p60, %p61
      %p63 = scmp.ne.s32.totalorder %s49, %s50
      %p64 = scmp.eq.s32.totalorder %s28, 1
      %p65 = por %p63, %p64
      %p67 = scmp.ne.s32.totalorder %s50, %s66
      %p68 = scmp.eq.s32.totalorder %s28, 0
      %p69 = por %p67, %p68
      %s71 = sadd.s32 %s70, 1
      %p74 = scmp.eq.s32.totalorder %s22, 1
      %p75 = scmp.ne.s32.totalorder %s70, %s72
      %p76 = scmp.eq.s32.totalorder %s22, 0
      %p77 = por %p75, %p76
      %p78 = scmp.ne.s32.totalorder %s70, %s72
      %p79 = scmp.eq.s32.totalorder %s27, 1
      %p80 = por %p78, %p79
      %p81 = scmp.ne.s32.totalorder %s72, %s73
      %p82 = scmp.eq.s32.totalorder %s27, 0
      %p83 = por %p81, %p82
      %p84 = scmp.ne.s32.totalorder %s72, %s73
      %p85 = scmp.eq.s32.totalorder %s28, 1
      %p86 = por %p84, %p85
      %p88 = scmp.ne.s32.totalorder %s73, %s87
      %p89 = scmp.eq.s32.totalorder %s28, 0
      %p90 = por %p88, %p89
      %s92 = sadd.s32 %s91, 1
      %p95 = scmp.eq.s32.totalorder %s22, 1
      %p96 = scmp.ne.s32.totalorder %s91, %s93
      %p97 = scmp.eq.s32.totalorder %s22, 0
      %p98 = por %p96, %p97
      %p99 = scmp.ne.s32.totalorder %s91, %s93
      %p100 = scmp.eq.s32.totalorder %s27, 1
      %p101 = por %p99, %p100
      %p102 = scmp.ne.s32.totalorder %s93, %s94
      %p103 = scmp.eq.s32.totalorder %s27, 0
      %p104 = por %p102, %p103
      %p105 = scmp.ne.s32.totalorder %s93, %s94
      %p106 = scmp.eq.s32.totalorder %s28, 1
      %p107 = por %p105, %p106
      %p109 = scmp.ne.s32.totalorder %s94, %s108
      %p110 = scmp.eq.s32.totalorder %s28, 0
      %p111 = por %p109, %p110
      %s113 = sadd.s32 %s112, 1
      %p116 = scmp.eq.s32.totalorder %s22, 1
      %p117 = scmp.ne.s32.totalorder %s112, %s114
      %p118 = scmp.eq.s32.totalorder %s22, 0
      %p119 = por %p117, %p118
      %p120 = scmp.ne.s32.totalorder %s112, %s114
      %p121 = scmp.eq.s32.totalorder %s27, 1
      %p122 = por %p120, %p121
      %p123 = scmp.ne.s32.totalorder %s114, %s115
      %p124 = scmp.eq.s32.totalorder %s27, 0
      %p125 = por %p123, %p124
      %p126 = scmp.ne.s32.totalorder %s114, %s115
      %p127 = scmp.eq.s32.totalorder %s28, 1
      %p128 = por %p126, %p127
      %p130 = scmp.ne.s32.totalorder %s115, %s129
      %p131 = scmp.eq.s32.totalorder %s28, 0
      %p132 = por %p130, %p131
      %s134 = sadd.s32 %s133, 1
      %p137 = scmp.eq.s32.totalorder %s22, 1
      %p138 = scmp.ne.s32.totalorder %s133, %s135
      %p139 = scmp.eq.s32.totalorder %s22, 0
      %p140 = por %p138, %p139
      %p141 = scmp.ne.s32.totalorder %s133, %s135
      %p142 = scmp.eq.s32.totalorder %s27, 1
      %p143 = por %p141, %p142
      %p144 = scmp.ne.s32.totalorder %s135, %s136
      %p145 = scmp.eq.s32.totalorder %s27, 0
      %p146 = por %p144, %p145
      %p147 = scmp.ne.s32.totalorder %s135, %s136
      %p148 = scmp.eq.s32.totalorder %s28, 1
      %p149 = por %p147, %p148
      %p151 = scmp.ne.s32.totalorder %s136, %s150
      %p152 = scmp.eq.s32.totalorder %s28, 0
      %p153 = por %p151, %p152
      %s155 = sadd.s32 %s154, 1
      %p158 = scmp.eq.s32.totalorder %s22, 1
      %p159 = scmp.ne.s32.totalorder %s154, %s156
      %p160 = scmp.eq.s32.totalorder %s22, 0
      %p161 = por %p159, %p160
      %p162 = scmp.ne.s32.totalorder %s154, %s156
      %p163 = scmp.eq.s32.totalorder %s27, 1
      %p164 = por %p162, %p163
      %p165 = scmp.ne.s32.totalorder %s156, %s157
      %p166 = scmp.eq.s32.totalorder %s27, 0
      %p167 = por %p165, %p166
      %p168 = scmp.ne.s32.totalorder %s156, %s157
      %p169 = scmp.eq.s32.totalorder %s28, 1
      %p170 = por %p168, %p169
      %p172 = scmp.ne.s32.totalorder %s157, %s171
      %p173 = scmp.eq.s32.totalorder %s28, 0
      %p174 = por %p172, %p173
      %s176 = sadd.s32 %s175, 1
      %p179 = scmp.eq.s32.totalorder %s22, 1
      %p180 = scmp.ne.s32.totalorder %s175, %s177
      %p181 = scmp.eq.s32.totalorder %s22, 0
      %p182 = por %p180, %p181
      %p183 = scmp.ne.s32.totalorder %s175, %s177
      %p184 = scmp.eq.s32.totalorder %s27, 1
      %p185 = por %p183, %p184
      %p186 = scmp.ne.s32.totalorder %s177, %s178
      %p187 = scmp.eq.s32.totalorder %s27, 0
      %p188 = por %p186, %p187
      %p189 = scmp.ne.s32.totalorder %s177, %s178
      %p190 = scmp.eq.s32.totalorder %s28, 1
      %p191 = por %p189, %p190
      %p193 = scmp.ne.s32.totalorder %s178, %s192
      %p194 = scmp.eq.s32.totalorder %s28, 0
      %p195 = por %p193, %p194
      %s196 = ssub.s32 %s29, %s41
      %s197 = ssub.s32 %s30, %s37
      %s198 = sor.u32 %s196, %s197
      %p199 = scmp.eq.s32.totalorder %s198, 0
      %s201 = sadd.s32 %s200, 1
      %s202 = scalar_select %p199, %s200, %s201
      %p205 = pneg %p199
      %p206 = scmp.eq.s32.totalorder %s22, 1
      %p207 = por %p205, %p206
      %p208 = scmp.ne.s32.totalorder %s200, %s203
      %p209 = scmp.eq.s32.totalorder %s22, 0
      %p210 = por %p208, %p209
      %p211 = scmp.ne.s32.totalorder %s200, %s203
      %p212 = scmp.eq.s32.totalorder %s27, 1
      %p213 = por %p211, %p212
      %p214 = scmp.ne.s32.totalorder %s203, %s204
      %p215 = scmp.eq.s32.totalorder %s27, 0
      %p216 = por %p214, %p215
      %p217 = scmp.ne.s32.totalorder %s203, %s204
      %p218 = scmp.eq.s32.totalorder %s28, 1
      %p219 = por %p217, %p218
      %p221 = scmp.ne.s32.totalorder %s204, %s220
      %p222 = scmp.eq.s32.totalorder %s28, 0
      %p223 = por %p221, %p222
      %p224 = scmp.le.s32.totalorder 1, %s22
      %p225 = scmp.lt.s32.totalorder %s22, 3
      %p226 = pnand %p224, %p225
      %p227 = pneg %p226
      // Predicated region
      $region9: #{axial_block_forward.5} parent=5 // pred_check
        _
      $region10: #{axial_block_forward.5} parent=5 // pred_check_branch
        %229 = sbr.rel (%p226) target = $region12
      $region11: #{axial_block_forward.5} parent=5 // pred_region
        %s230 = ssub.s32 %s22, 1
        // Predicated region
        $region13: #{axial_block_forward.5} parent=11 // pred_check
          %p231 = pneg %p83
        $region14: #{axial_block_forward.5} parent=11 // pred_check_branch
          %233 = sbr.rel (%p231) target = $region16
        $region15: #{axial_block_forward.5} parent=11 // pred_region
          %s235 = ssub.s32 32, 32
          %236 = vsyncadd [#allocation6], %s235
          %s238 = sshll.u32 [#allocation5], 4
          %s239 = int_to_ptr.vmem [resolvable:$true] %s238
          %241 = dma.hbm_to_vmem [thread:$0]  %s1, 32, %s239, [#allocation6]
        $region16: #{axial_block_forward.5} parent=11 // pred_fallthru
          _
        // Predicated region
        $region17: #{axial_block_forward.5} parent=11 // pred_check
          %p242 = pneg %p104
        $region18: #{axial_block_forward.5} parent=11 // pred_check_branch
          %244 = sbr.rel (%p242) target = $region20
        $region19: #{axial_block_forward.5} parent=11 // pred_region
          %s246 = ssub.s32 64, 64
          %247 = vsyncadd [#allocation6], %s246
          %s249 = sshll.u32 [#allocation7], 4
          %s250 = int_to_ptr.vmem [resolvable:$true] %s249
          %252 = dma.hbm_to_vmem [thread:$0]  %s2, 64, %s250, [#allocation6]
        $region20: #{axial_block_forward.5} parent=11 // pred_fallthru
          _
        // Predicated region
        $region21: #{axial_block_forward.5} parent=11 // pred_check
          %p253 = pneg %p125
        $region22: #{axial_block_forward.5} parent=11 // pred_check_branch
          %255 = sbr.rel (%p253) target = $region24
        $region23: #{axial_block_forward.5} parent=11 // pred_region
          %s257 = ssub.s32 64, 64
          %258 = vsyncadd [#allocation9], %s257
          %s260 = sshll.u32 [#allocation8], 4
          %s261 = int_to_ptr.vmem [resolvable:$true] %s260
          %263 = dma.hbm_to_vmem [thread:$0]  %s3, 64, %s261, [#allocation9]
        $region24: #{axial_block_forward.5} parent=11 // pred_fallthru
          _
        // Predicated region
        $region25: #{axial_block_forward.5} parent=11 // pred_check
          %p264 = pneg %p146
        $region26: #{axial_block_forward.5} parent=11 // pred_check_branch
          %266 = sbr.rel (%p264) target = $region28
        $region27: #{axial_block_forward.5} parent=11 // pred_region
          %s268 = ssub.s32 64, 64
          %269 = vsyncadd [#allocation9], %s268
          %s271 = sshll.u32 [#allocation10], 4
          %s272 = int_to_ptr.vmem [resolvable:$true] %s271
          %274 = dma.hbm_to_vmem [thread:$0]  %s4, 64, %s272, [#allocation9]
        $region28: #{axial_block_forward.5} parent=11 // pred_fallthru
          _
        // Predicated region
        $region29: #{axial_block_forward.5} parent=11 // pred_check
          %p275 = pneg %p167
        $region30: #{axial_block_forward.5} parent=11 // pred_check_branch
          %277 = sbr.rel (%p275) target = $region32
        $region31: #{axial_block_forward.5} parent=11 // pred_region
          %s279 = ssub.s32 128, 128
          %280 = vsyncadd [#allocation12], %s279
          %s282 = sshll.u32 [#allocation11], 4
          %s283 = int_to_ptr.vmem [resolvable:$true] %s282
          %285 = dma.hbm_to_vmem [thread:$0]  %s5, 128, %s283, [#allocation12]
        $region32: #{axial_block_forward.5} parent=11 // pred_fallthru
          _
        // Predicated region
        $region33: #{axial_block_forward.5} parent=11 // pred_check
          %p286 = pneg %p188
        $region34: #{axial_block_forward.5} parent=11 // pred_check_branch
          %288 = sbr.rel (%p286) target = $region36
        $region35: #{axial_block_forward.5} parent=11 // pred_region
          %s290 = ssub.s32 128, 128
          %291 = vsyncadd [#allocation12], %s290
          %s293 = sshll.u32 [#allocation13], 4
          %s294 = int_to_ptr.vmem [resolvable:$true] %s293
          %296 = dma.hbm_to_vmem [thread:$0]  %s6, 128, %s294, [#allocation12]
        $region36: #{axial_block_forward.5} parent=11 // pred_fallthru
          _
      $region12: #{axial_block_forward.5} parent=5 // pred_fallthru
        _
      %p297 = scmp.lt.s32.totalorder %s22, 2
      // Predicated region
      $region37: #{axial_block_forward.5} parent=5 // pred_check
        %p298 = pneg %p297
      $region38: #{axial_block_forward.5} parent=5 // pred_check_branch
        %300 = sbr.rel (%p298) target = $region40
      $region39: #{axial_block_forward.5} parent=5 // pred_region
        // Predicated region
        $region41: #{axial_block_forward.5} parent=39 // pred_check
          %p301 = pneg %p56
        $region42: #{axial_block_forward.5} parent=39 // pred_check_branch
          %303 = sbr.rel (%p301) target = $region44
        $region43: #{axial_block_forward.5} parent=39 // pred_region
          %s304 = sand.u32 %s46, 1
          %s305 = scalar_lea.sflag [#allocation3], %s304
          %s306 = sand.u32 %s46, 1
          %s307 = smul.addr %s306, 16
          %s308 = scalar_lea.vmem [#allocation2], %s307
          %s309 = smul.u32 2, %s30
          %s311 = ssub.s32 256, 256
          %312 = vsyncadd %s305, %s311
          %s313 = smul.addr %s29, 2
          %s314 = sadd.s32 %s309, %s313
          %s315 = smul.addr %s314, 128
          %s316 = scalar_lea.hbm %s0, %s315
          %s318 = sshll.u32 %s308, 4
          %s319 = int_to_ptr.vmem [resolvable:$true] %s318
          %321 = dma.hbm_to_vmem [thread:$0]  %s316, 256, %s319, %s305
        $region44: #{axial_block_forward.5} parent=39 // pred_fallthru
          _
      $region40: #{axial_block_forward.5} parent=5 // pred_fallthru
        _
      %p322 = scmp.le.s32.totalorder 1, %s22
      %p323 = scmp.lt.s32.totalorder %s22, 3
      %p324 = pnand %p322, %p323
      %p325 = pneg %p324
      // Predicated region
      $region45: #{axial_block_forward.5} parent=5 // pred_check
        _
      $region46: #{axial_block_forward.5} parent=5 // pred_check_branch
        %327 = sbr.rel (%p324) target = $region48
      $region47: #{axial_block_forward.5} parent=5 // pred_region
        %s328 = ssub.s32 %s22, 1
        %s329 = sand.u32 %s49, 1
        %s330 = scalar_lea.sflag [#allocation3], %s329
        %s331 = sand.u32 %s49, 1
        %s332 = smul.addr %s331, 16
        %s333 = scalar_lea.vmem [#allocation2], %s332
        // Predicated region
        $region49: #{axial_block_forward.5} parent=47 // pred_check
          %p334 = pneg %p62
        $region50: #{axial_block_forward.5} parent=47 // pred_check_branch
          %336 = sbr.rel (%p334) target = $region52
        $region51: #{axial_block_forward.5} parent=47 // pred_region
          %337 = dma.done %s330, 256
        $region52: #{axial_block_forward.5} parent=47 // pred_fallthru
          _
        // Predicated region
        $region53: #{axial_block_forward.5} parent=47 // pred_check
          %p338 = pneg %p83
        $region54: #{axial_block_forward.5} parent=47 // pred_check_branch
          %340 = sbr.rel (%p338) target = $region56
        $region55: #{axial_block_forward.5} parent=47 // pred_region
          %341 = dma.done [#allocation6], 32
        $region56: #{axial_block_forward.5} parent=47 // pred_fallthru
          _
        // Predicated region
        $region57: #{axial_block_forward.5} parent=47 // pred_check
          %p342 = pneg %p104
        $region58: #{axial_block_forward.5} parent=47 // pred_check_branch
          %344 = sbr.rel (%p342) target = $region60
        $region59: #{axial_block_forward.5} parent=47 // pred_region
          %345 = dma.done [#allocation6], 64
        $region60: #{axial_block_forward.5} parent=47 // pred_fallthru
          _
        // Predicated region
        $region61: #{axial_block_forward.5} parent=47 // pred_check
          %p346 = pneg %p125
        $region62: #{axial_block_forward.5} parent=47 // pred_check_branch
          %348 = sbr.rel (%p346) target = $region64
        $region63: #{axial_block_forward.5} parent=47 // pred_region
          %349 = dma.done [#allocation9], 64
        $region64: #{axial_block_forward.5} parent=47 // pred_fallthru
          _
        // Predicated region
        $region65: #{axial_block_forward.5} parent=47 // pred_check
          %p350 = pneg %p146
        $region66: #{axial_block_forward.5} parent=47 // pred_check_branch
          %352 = sbr.rel (%p350) target = $region68
        $region67: #{axial_block_forward.5} parent=47 // pred_region
          %353 = dma.done [#allocation9], 64
        $region68: #{axial_block_forward.5} parent=47 // pred_fallthru
          _
        // Predicated region
        $region69: #{axial_block_forward.5} parent=47 // pred_check
          %p354 = pneg %p167
        $region70: #{axial_block_forward.5} parent=47 // pred_check_branch
          %356 = sbr.rel (%p354) target = $region72
        $region71: #{axial_block_forward.5} parent=47 // pred_region
          %357 = dma.done [#allocation12], 128
        $region72: #{axial_block_forward.5} parent=47 // pred_fallthru
          _
        // Predicated region
        $region73: #{axial_block_forward.5} parent=47 // pred_check
          %p358 = pneg %p188
        $region74: #{axial_block_forward.5} parent=47 // pred_check_branch
          %360 = sbr.rel (%p358) target = $region76
        $region75: #{axial_block_forward.5} parent=47 // pred_region
          %361 = dma.done [#allocation12], 128
        $region76: #{axial_block_forward.5} parent=47 // pred_fallthru
          _
        %s362 = sand.u32 %s49, 1
        %s363 = scalar_lea.sflag [#allocation3], %s362
        %s364 = sand.u32 %s49, 1
        %s365 = smul.addr %s364, 16
        %s366 = scalar_lea.vmem [#allocation2], %s365
        %p367 = pneg %p62
        %p368 = pneg %p59
        %p369 = pneg %p83
        %p370 = pneg %p80
        %p371 = pneg %p104
        %p372 = pneg %p101
        %p373 = pneg %p125
        %p374 = pneg %p122
        %p375 = pneg %p146
        %p376 = pneg %p143
        %p377 = pneg %p167
        %p378 = pneg %p164
        %p379 = pneg %p188
        %p380 = pneg %p185
        %p381 = pneg %p216
        %p382 = pneg %p213
        %s383 = sand.u32 %s203, 1
        %s384 = scalar_lea.sflag [#allocation4], %s383
        %s385 = sand.u32 %s203, 1
        %s386 = smul.addr %s385, 8
        %s387 = scalar_lea.vmem [#allocation14], %s386
        %s388 = smul.u32 2, %s32
        %s389 = smul.u32 2, %s32
        %v391 = vld [vmem:[%s333] sm:$0xff]
        %v392 = vld [vmem:[%s333 + $0x8] sm:$0xff]
        %v393 = vpack.c.bf16 %v391, %v391
        %v394 = vpack.c.bf16 %v392, %v392
        %v395 = vld [vmem:[#allocation5] sm:$0x3]
        %vm396 = vcmask 64512
        %v398 = vsel %vm396, %v395, 0
        %vm400 = vcmask 1043456
        %v402 = vsel %vm400, %v393, 0
        %v405 = vsel %vm400, %v394, 0
        %407 = vmatprep.subr.bf16.mxu0 %v405
        %408 = vmatpush1.bf16.msra.mxu0 %v402
        %409 = vmatprep.subr.bf16.mxu0 0
        %410 = vmatpush1.bf16.msra.mxu0 0
        %411 = vmatprep.subr.bf16.mxu0 0
        %412 = vmatpush1.bf16.msra.mxu0 0
        %413 = vmatprep.subr.bf16.mxu0 0
        %414 = vmatpush1.bf16.msra.mxu0 0
        %415 = vmatprep.subr.bf16.mxu0 0
        %416 = vmatpush1.bf16.msra.mxu0 0
        %417 = vmatprep.subr.bf16.mxu0 0
        %418 = vmatpush1.bf16.msra.mxu0 0
        %419 = vmatprep.subr.bf16.mxu0 0
        %420 = vmatpush1.bf16.msra.mxu0 0
        %421 = vmatprep.subr.bf16.mxu0 0
        %422 = vmatpush1.bf16.msra.mxu0 0
        %423 = vmatprep.subr.bf16.mxu0 0
        %424 = vmatpush1.bf16.msra.mxu0 0
        %425 = vmatprep.subr.bf16.mxu0 0
        %426 = vmatpush1.bf16.msra.mxu0 0
        %427 = vmatprep.subr.bf16.mxu0 0
        %428 = vmatpush1.bf16.msra.mxu0 0
        %429 = vmatprep.subr.bf16.mxu0 0
        %430 = vmatpush1.bf16.msra.mxu0 0
        %431 = vmatprep.subr.bf16.mxu0 0
        %432 = vmatpush1.bf16.msra.mxu0 0
        %433 = vmatprep.subr.bf16.mxu0 0
        %434 = vmatpush1.bf16.msra.mxu0 0
        %435 = vmatprep.subr.bf16.mxu0 0
        %436 = vmatpush1.bf16.msra.mxu0 0
        %437 = vmatprep.subr.bf16.mxu0 0
        %438 = vmatpush1.bf16.msra.mxu0 0
        %439 = vmatprep.mubr.bf16.mxu0 0
        %440 = vmatmul.mubr.bf16.gmra.mrb[0].mxu0 %v398
        %v441 = vpop.f32.mrb[0].mxu0
        %v442 = vadd.f32 0.0, %v441
        %v443 = vpop.f32.mrb[0].mxu0
        %v444 = vadd.f32 0.0, %v443
        %v445 = vpop.f32.mrb[0].mxu0
        %v446 = vpop.f32.mrb[0].mxu0
        %447 = vdwg.mxu0
        %v448 = vld [vmem:[#allocation7] sm:$0xf]
        %450 = vset.pattern.permute.xlu0 0
        %451 = vperm.xlu0 %450, %v448
        %v452 = vpop.permute.xlu0 %451
        %v454 = vmul.f32 %v442, %v452
        %v455 = vmul.f32 %v444, %v452
        %v456 = vld [vmem:[#allocation8] sm:$0xf]
        %458 = vset.pattern.permute.xlu0 0
        %459 = vperm.xlu0 %458, %v456
        %v460 = vpop.permute.xlu0 %459
        %v462 = vadd.f32 %v454, %v460
        %v463 = vadd.f32 %v455, %v460
        %v464 = vmax.f32 %v462, 0.0
        %v465 = vmax.f32 %v463, 0.0
        %v466 = vld [vmem:[#allocation10] sm:$0xf]
        %v467 = vpack.c.bf16 %v464, %v464
        %v468 = vpack.c.bf16 %v465, %v465
        %vm469 = vcmask 31744
        %v471 = vsel %vm469, %v466, 0
        %vm473 = vcmask 1041408
        %v475 = vsel %vm473, %v467, 0
        %v478 = vsel %vm473, %v468, 0
        %480 = vmatprep.subr.bf16.mxu0 %v478
        %481 = vmatpush1.bf16.msra.mxu0 %v475
        %482 = vmatprep.subr.bf16.mxu0 0
        %483 = vmatpush1.bf16.msra.mxu0 0
        %484 = vmatprep.subr.bf16.mxu0 0
        %485 = vmatpush1.bf16.msra.mxu0 0
        %486 = vmatprep.subr.bf16.mxu0 0
        %487 = vmatpush1.bf16.msra.mxu0 0
        %488 = vmatprep.subr.bf16.mxu0 0
        %489 = vmatpush1.bf16.msra.mxu0 0
        %490 = vmatprep.subr.bf16.mxu0 0
        %491 = vmatpush1.bf16.msra.mxu0 0
        %492 = vmatprep.subr.bf16.mxu0 0
        %493 = vmatpush1.bf16.msra.mxu0 0
        %494 = vmatprep.subr.bf16.mxu0 0
        %495 = vmatpush1.bf16.msra.mxu0 0
        %496 = vmatprep.subr.bf16.mxu0 0
        %497 = vmatpush1.bf16.msra.mxu0 0
        %498 = vmatprep.subr.bf16.mxu0 0
        %499 = vmatpush1.bf16.msra.mxu0 0
        %500 = vmatprep.subr.bf16.mxu0 0
        %501 = vmatpush1.bf16.msra.mxu0 0
        %502 = vmatprep.subr.bf16.mxu0 0
        %503 = vmatpush1.bf16.msra.mxu0 0
        %504 = vmatprep.subr.bf16.mxu0 0
        %505 = vmatpush1.bf16.msra.mxu0 0
        %506 = vmatprep.subr.bf16.mxu0 0
        %507 = vmatpush1.bf16.msra.mxu0 0
        %508 = vmatprep.subr.bf16.mxu0 0
        %509 = vmatpush1.bf16.msra.mxu0 0
        %510 = vmatprep.subr.bf16.mxu0 0
        %511 = vmatpush1.bf16.msra.mxu0 0
        %512 = vmatprep.mubr.bf16.mxu0 0
        %513 = vmatmul.mubr.bf16.gmra.mrb[0].mxu0 %v471
        %v514 = vpop.f32.mrb[0].mxu0
        %v515 = vadd.f32 0.0, %v514
        %v516 = vpop.f32.mrb[0].mxu0
        %v517 = vadd.f32 0.0, %v516
        %v518 = vpop.f32.mrb[0].mxu0
        %v519 = vpop.f32.mrb[0].mxu0
        %520 = vdwg.mxu0
        %v521 = vld [vmem:[#allocation11] sm:$0xff]
        %523 = vset.pattern.permute.xlu0 0
        %524 = vperm.xlu0 %523, %v521
        %v525 = vpop.permute.xlu0 %524
        %v527 = vmul.f32 %v515, %v525
        %v528 = vmul.f32 %v517, %v525
        %v529 = vld [vmem:[#allocation13] sm:$0xff]
        %531 = vset.pattern.permute.xlu0 0
        %532 = vperm.xlu0 %531, %v529
        %v533 = vpop.permute.xlu0 %532
        %v535 = vadd.f32 %v527, %v533
        %v536 = vadd.f32 %v528, %v533
        %v537 = vpack.c.bf16 %v535, %v535
        %v538 = vpack.c.bf16 %v536, %v536
        %v541 = vunpack.c.l.b16 %v537
        %v542 = vunpack.c.l.b16 %v538
        %v543 = vpack.c.b16 %v542, %v541
        %545 = vst [vmem:[%s387] sm:$0xff] %v543
        %s546 = sand.u32 %s203, 1
        %s547 = scalar_lea.sflag [#allocation4], %s546
        %s548 = sand.u32 %s203, 1
        %s549 = smul.addr %s548, 8
        %s550 = scalar_lea.vmem [#allocation14], %s549
        // Predicated region
        $region77: #{axial_block_forward.5} parent=47 // pred_check
          %p551 = pneg %p213
        $region78: #{axial_block_forward.5} parent=47 // pred_check_branch
          %553 = sbr.rel (%p551) target = $region80
        $region79: #{axial_block_forward.5} parent=47 // pred_region
          %s554 = smul.u32 2, %s32
          %s556 = ssub.s32 128, 128
          %557 = vsyncadd %s547, %s556
          %s558 = smul.addr %s31, 2
          %s559 = sadd.s32 %s554, %s558
          %s560 = smul.addr %s559, 64
          %s561 = scalar_lea.hbm %s7, %s560
          %s563 = sshll.u32 %s550, 4
          %s564 = int_to_ptr.vmem [resolvable:$true] %s563
          %566 = dma.vmem_to_hbm [thread:$0]  %s564, 128, %s561, %s547
        $region80: #{axial_block_forward.5} parent=47 // pred_fallthru
          _
      $region48: #{axial_block_forward.5} parent=5 // pred_fallthru
        _
      %p567 = scmp.le.s32.totalorder 2, %s22
      // Predicated region
      $region81: #{axial_block_forward.5} parent=5 // pred_check
        %p568 = pneg %p567
      $region82: #{axial_block_forward.5} parent=5 // pred_check_branch
        %570 = sbr.rel (%p568) target = $region84
      $region83: #{axial_block_forward.5} parent=5 // pred_region
        %s571 = ssub.s32 %s22, 2
        // Predicated region
        $region85: #{axial_block_forward.5} parent=83 // pred_check
          %p572 = pneg %p219
        $region86: #{axial_block_forward.5} parent=83 // pred_check_branch
          %574 = sbr.rel (%p572) target = $region88
        $region87: #{axial_block_forward.5} parent=83 // pred_region
          %s575 = sand.u32 %s204, 1
          %s576 = scalar_lea.sflag [#allocation4], %s575
          %s577 = sand.u32 %s204, 1
          %s578 = smul.addr %s577, 8
          %s579 = scalar_lea.vmem [#allocation14], %s578
          %580 = dma.done %s576, 128
        $region88: #{axial_block_forward.5} parent=83 // pred_fallthru
          _
      $region84: #{axial_block_forward.5} parent=5 // pred_fallthru
        _
    $region6: #{axial_block_forward.5} parent=1 // loop_footer
      %s26 = sadd.s32 1, %s22
    $region7: #{axial_block_forward.5} parent=1 // loop_footer_branch
      %21 = sbr.rel target = $region3
    $region8: #{axial_block_forward.5} parent=1 // loop_exit
      _
    %581 = vsyncpa [#allocation3], 1
    %s582 = scalar_lea.sflag [#allocation3], 1
    %583 = vsyncpa %s582, 1
    %584 = vsyncpa [#allocation6], 1
    %585 = vsyncpa [#allocation9], 1
    %586 = vsyncpa [#allocation12], 1
    %587 = vsyncpa [#allocation4], 1
    %s588 = scalar_lea.sflag [#allocation4], 1
    %589 = vsyncpa %s588, 1

// kernel: axial_block_forward.7
$region0: #{axial_block_forward.7}
  #allocation0 [shape = 'u32[]', space=smem, size = 0x4, offset = 0x4, fixed_abs, tag = 'smem constant byte address 0x4 - core index']
  #allocation1 [shape = 'u32[144,128]{1,0:T(1,128)}', space=vmem, size = 0x12000, scoped, tag = 'internal scratch']
  %s0 = inlined_call_operand.hbm [shape: bf16[2,4,256], index: 0, kind: input, shape index: {}]
  %s1 = inlined_call_operand.hbm [shape: bf16[8,4], index: 1, kind: input, shape index: {}]
  %s2 = inlined_call_operand.hbm [shape: f32[8,1], index: 2, kind: input, shape index: {}]
  %s3 = inlined_call_operand.hbm [shape: f32[8,1], index: 3, kind: input, shape index: {}]
  %s4 = inlined_call_operand.hbm [shape: bf16[2,8,256], index: 4, kind: output, shape index: {}]
  %s5 = sld [smem:[#allocation0]]
  $region65: #{axial_block_forward.7} parent=0
    _
  %s7 = ssub.s32 1, %s5
  %s8 = scalar_select 0, %s7, %s5
  $region1: #{axial_block_forward.7} parent=0
    #allocation2 [shape = 'u8[4096]{0}', space=vmem, size = 0x1000, scoped, tag = 'input window, operand 0']
    #allocation3 [shape = 's32[2]{0}', space=sflag, size = 0x8, scoped, tag = 'scoped memory for axial_block_forward.7']
    #allocation4 [shape = 's32[2]{0}', space=sflag, size = 0x8, scoped, tag = 'scoped memory for axial_block_forward.7']
    #allocation5 [shape = 'u8[2048]{0}', space=vmem, size = 0x800, scoped, tag = 'input window, operand 1, single buffered']
    #allocation6 [shape = 's32[1]{0}', space=sflag, size = 0x4, scoped, tag = 'scoped memory for axial_block_forward.7']
    #allocation7 [shape = 'u8[4096]{0}', space=vmem, size = 0x1000, scoped, tag = 'input window, operand 2, single buffered']
    #allocation8 [shape = 'u8[4096]{0}', space=vmem, size = 0x1000, scoped, tag = 'input window, operand 3, single buffered']
    #allocation9 [shape = 's32[1]{0}', space=sflag, size = 0x4, scoped, tag = 'scoped memory for axial_block_forward.7']
    #allocation10 [shape = 'u8[8192]{0}', space=vmem, size = 0x2000, scoped, tag = 'output window, operand 0']
    %9 = vsyncpa [#allocation3], 0
    %s10 = scalar_lea.sflag [#allocation3], 1
    %11 = vsyncpa %s10, 0
    %12 = vsyncpa [#allocation6], 0
    %13 = vsyncpa [#allocation9], 0
    %14 = vsyncpa [#allocation4], 0
    %s15 = scalar_lea.sflag [#allocation4], 1
    %16 = vsyncpa %s15, 0
    loop: start=0, step=1, limit=4
    $region2: #{axial_block_forward.7} parent=1 // loop_pre_header
      _
    $region3: #{axial_block_forward.7} parent=1 // loop_header
      %s18 = sphi 0, %s22
      %p19 = scmp.ge.s32.totalorder %s18, 4
      %s25 = sphi 0, %s37
      %s26 = sphi 0, %s33
      %s27 = sphi 0, %s25
      %s28 = sphi 0, %s26
      %s29 = sphi 0, %s27
      %s30 = sphi 0, %s28
      %s42 = sphi 0, %s44
      %s45 = sphi 0, %s42
      %s46 = sphi 0, %s45
      %s62 = sphi 0, %s46
      %s66 = sphi 0, %s66
      %s68 = sphi 0, %s66
      %s69 = sphi 0, %s68
      %s83 = sphi 0, %s69
      %s87 = sphi 0, %s87
      %s89 = sphi 0, %s87
      %s90 = sphi 0, %s89
      %s104 = sphi 0, %s90
      %s108 = sphi 0, %s108
      %s110 = sphi 0, %s108
      %s111 = sphi 0, %s110
      %s125 = sphi 0, %s111
      %s133 = sphi 0, %s135
      %s136 = sphi 0, %s133
      %s137 = sphi 0, %s136
      %s153 = sphi 0, %s137
    $region4: #{axial_block_forward.7} parent=1 // loop_header_branch
      %21 = sbr.rel (%p19) target = $region8
    $region5: #{axial_block_forward.7} parent=1 // loop_body
      %s23 = ssub.s32 %s18, 1
      %s24 = ssub.s32 %s18, 2
      %s31 = sadd.s32 1, %s26
      %p32 = scmp.ge.s32.totalorder %s31, 1
      %s33 = scalar_select %p32, 0, %s31
      %s34 = sadd.s32 1, %s25
      %s35 = scalar_select %p32, %s34, %s25
      %p36 = scmp.ge.s32.totalorder %s35, 2
      %s37 = scalar_select %p36, 0, %s35
      %s38 = ssub.s32 %s25, %s37
      %s39 = ssub.s32 %s26, %s33
      %s40 = sor.u32 %s38, %s39
      %p41 = scmp.eq.s32.totalorder %s40, 0
      %s43 = sadd.s32 %s42, 1
      %s44 = scalar_select %p41, %s42, %s43
      %p47 = pneg %p41
      %p48 = scmp.eq.s32.totalorder %s18, 1
      %p49 = por %p47, %p48
      %p50 = scmp.ne.s32.totalorder %s42, %s45
      %p51 = scmp.eq.s32.totalorder %s18, 0
      %p52 = por %p50, %p51
      %p53 = scmp.ne.s32.totalorder %s42, %s45
      %p54 = scmp.eq.s32.totalorder %s23, 1
      %p55 = por %p53, %p54
      %p56 = scmp.ne.s32.totalorder %s45, %s46
      %p57 = scmp.eq.s32.totalorder %s23, 0
      %p58 = por %p56, %p57
      %p59 = scmp.ne.s32.totalorder %s45, %s46
      %p60 = scmp.eq.s32.totalorder %s24, 1
      %p61 = por %p59, %p60
      %p63 = scmp.ne.s32.totalorder %s46, %s62
      %p64 = scmp.eq.s32.totalorder %s24, 0
      %p65 = por %p63, %p64
      %s67 = sadd.s32 %s66, 1
      %p70 = scmp.eq.s32.totalorder %s18, 1
      %p71 = scmp.ne.s32.totalorder %s66, %s68
      %p72 = scmp.eq.s32.totalorder %s18, 0
      %p73 = por %p71, %p72
      %p74 = scmp.ne.s32.totalorder %s66, %s68
      %p75 = scmp.eq.s32.totalorder %s23, 1
      %p76 = por %p74, %p75
      %p77 = scmp.ne.s32.totalorder %s68, %s69
      %p78 = scmp.eq.s32.totalorder %s23, 0
      %p79 = por %p77, %p78
      %p80 = scmp.ne.s32.totalorder %s68, %s69
      %p81 = scmp.eq.s32.totalorder %s24, 1
      %p82 = por %p80, %p81
      %p84 = scmp.ne.s32.totalorder %s69, %s83
      %p85 = scmp.eq.s32.totalorder %s24, 0
      %p86 = por %p84, %p85
      %s88 = sadd.s32 %s87, 1
      %p91 = scmp.eq.s32.totalorder %s18, 1
      %p92 = scmp.ne.s32.totalorder %s87, %s89
      %p93 = scmp.eq.s32.totalorder %s18, 0
      %p94 = por %p92, %p93
      %p95 = scmp.ne.s32.totalorder %s87, %s89
      %p96 = scmp.eq.s32.totalorder %s23, 1
      %p97 = por %p95, %p96
      %p98 = scmp.ne.s32.totalorder %s89, %s90
      %p99 = scmp.eq.s32.totalorder %s23, 0
      %p100 = por %p98, %p99
      %p101 = scmp.ne.s32.totalorder %s89, %s90
      %p102 = scmp.eq.s32.totalorder %s24, 1
      %p103 = por %p101, %p102
      %p105 = scmp.ne.s32.totalorder %s90, %s104
      %p106 = scmp.eq.s32.totalorder %s24, 0
      %p107 = por %p105, %p106
      %s109 = sadd.s32 %s108, 1
      %p112 = scmp.eq.s32.totalorder %s18, 1
      %p113 = scmp.ne.s32.totalorder %s108, %s110
      %p114 = scmp.eq.s32.totalorder %s18, 0
      %p115 = por %p113, %p114
      %p116 = scmp.ne.s32.totalorder %s108, %s110
      %p117 = scmp.eq.s32.totalorder %s23, 1
      %p118 = por %p116, %p117
      %p119 = scmp.ne.s32.totalorder %s110, %s111
      %p120 = scmp.eq.s32.totalorder %s23, 0
      %p121 = por %p119, %p120
      %p122 = scmp.ne.s32.totalorder %s110, %s111
      %p123 = scmp.eq.s32.totalorder %s24, 1
      %p124 = por %p122, %p123
      %p126 = scmp.ne.s32.totalorder %s111, %s125
      %p127 = scmp.eq.s32.totalorder %s24, 0
      %p128 = por %p126, %p127
      %s129 = ssub.s32 %s25, %s37
      %s130 = ssub.s32 %s26, %s33
      %s131 = sor.u32 %s129, %s130
      %p132 = scmp.eq.s32.totalorder %s131, 0
      %s134 = sadd.s32 %s133, 1
      %s135 = scalar_select %p132, %s133, %s134
      %p138 = pneg %p132
      %p139 = scmp.eq.s32.totalorder %s18, 1
      %p140 = por %p138, %p139
      %p141 = scmp.ne.s32.totalorder %s133, %s136
      %p142 = scmp.eq.s32.totalorder %s18, 0
      %p143 = por %p141, %p142
      %p144 = scmp.ne.s32.totalorder %s133, %s136
      %p145 = scmp.eq.s32.totalorder %s23, 1
      %p146 = por %p144, %p145
      %p147 = scmp.ne.s32.totalorder %s136, %s137
      %p148 = scmp.eq.s32.totalorder %s23, 0
      %p149 = por %p147, %p148
      %p150 = scmp.ne.s32.totalorder %s136, %s137
      %p151 = scmp.eq.s32.totalorder %s24, 1
      %p152 = por %p150, %p151
      %p154 = scmp.ne.s32.totalorder %s137, %s153
      %p155 = scmp.eq.s32.totalorder %s24, 0
      %p156 = por %p154, %p155
      %p157 = scmp.le.s32.totalorder 1, %s18
      %p158 = scmp.lt.s32.totalorder %s18, 3
      %p159 = pnand %p157, %p158
      %p160 = pneg %p159
      // Predicated region
      $region9: #{axial_block_forward.7} parent=5 // pred_check
        _
      $region10: #{axial_block_forward.7} parent=5 // pred_check_branch
        %162 = sbr.rel (%p159) target = $region12
      $region11: #{axial_block_forward.7} parent=5 // pred_region
        %s163 = ssub.s32 %s18, 1
        // Predicated region
        $region13: #{axial_block_forward.7} parent=11 // pred_check
          %p164 = pneg %p79
        $region14: #{axial_block_forward.7} parent=11 // pred_check_branch
          %166 = sbr.rel (%p164) target = $region16
        $region15: #{axial_block_forward.7} parent=11 // pred_region
          %s168 = ssub.s32 64, 64
          %169 = vsyncadd [#allocation6], %s168
          %s171 = sshll.u32 [#allocation5], 4
          %s172 = int_to_ptr.vmem [resolvable:$true] %s171
          %174 = dma.hbm_to_vmem [thread:$0]  %s1, 64, %s172, [#allocation6]
        $region16: #{axial_block_forward.7} parent=11 // pred_fallthru
          _
        // Predicated region
        $region17: #{axial_block_forward.7} parent=11 // pred_check
          %p175 = pneg %p100
        $region18: #{axial_block_forward.7} parent=11 // pred_check_branch
          %177 = sbr.rel (%p175) target = $region20
        $region19: #{axial_block_forward.7} parent=11 // pred_region
          %s179 = ssub.s32 128, 128
          %180 = vsyncadd [#allocation6], %s179
          %s182 = sshll.u32 [#allocation7], 4
          %s183 = int_to_ptr.vmem [resolvable:$true] %s182
          %185 = dma.hbm_to_vmem [thread:$0]  %s2, 128, %s183, [#allocation6]
        $region20: #{axial_block_forward.7} parent=11 // pred_fallthru
          _
        // Predicated region
        $region21: #{axial_block_forward.7} parent=11 // pred_check
          %p186 = pneg %p121
        $region22: #{axial_block_forward.7} parent=11 // pred_check_branch
          %188 = sbr.rel (%p186) target = $region24
        $region23: #{axial_block_forward.7} parent=11 // pred_region
          %s190 = ssub.s32 128, 128
          %191 = vsyncadd [#allocation9], %s190
          %s193 = sshll.u32 [#allocation8], 4
          %s194 = int_to_ptr.vmem [resolvable:$true] %s193
          %196 = dma.hbm_to_vmem [thread:$0]  %s3, 128, %s194, [#allocation9]
        $region24: #{axial_block_forward.7} parent=11 // pred_fallthru
          _
      $region12: #{axial_block_forward.7} parent=5 // pred_fallthru
        _
      %p197 = scmp.lt.s32.totalorder %s18, 2
      // Predicated region
      $region25: #{axial_block_forward.7} parent=5 // pred_check
        %p198 = pneg %p197
      $region26: #{axial_block_forward.7} parent=5 // pred_check_branch
        %200 = sbr.rel (%p198) target = $region28
      $region27: #{axial_block_forward.7} parent=5 // pred_region
        // Predicated region
        $region29: #{axial_block_forward.7} parent=27 // pred_check
          %p201 = pneg %p52
        $region30: #{axial_block_forward.7} parent=27 // pred_check_branch
          %203 = sbr.rel (%p201) target = $region32
        $region31: #{axial_block_forward.7} parent=27 // pred_region
          %s204 = sand.u32 %s42, 1
          %s205 = scalar_lea.sflag [#allocation3], %s204
          %s206 = sand.u32 %s42, 1
          %s207 = smul.addr %s206, 4
          %s208 = scalar_lea.vmem [#allocation2], %s207
          %s209 = smul.u32 2, %s26
          %s211 = ssub.s32 64, 64
          %212 = vsyncadd %s205, %s211
          %s213 = smul.addr %s25, 2
          %s214 = sadd.s32 %s209, %s213
          %s215 = smul.addr %s214, 32
          %s216 = scalar_lea.hbm %s0, %s215
          %s218 = sshll.u32 %s208, 4
          %s219 = int_to_ptr.vmem [resolvable:$true] %s218
          %221 = dma.hbm_to_vmem [thread:$0]  %s216, 64, %s219, %s205
        $region32: #{axial_block_forward.7} parent=27 // pred_fallthru
          _
      $region28: #{axial_block_forward.7} parent=5 // pred_fallthru
        _
      %p222 = scmp.le.s32.totalorder 1, %s18
      %p223 = scmp.lt.s32.totalorder %s18, 3
      %p224 = pnand %p222, %p223
      %p225 = pneg %p224
      // Predicated region
      $region33: #{axial_block_forward.7} parent=5 // pred_check
        _
      $region34: #{axial_block_forward.7} parent=5 // pred_check_branch
        %227 = sbr.rel (%p224) target = $region36
      $region35: #{axial_block_forward.7} parent=5 // pred_region
        %s228 = ssub.s32 %s18, 1
        %s229 = sand.u32 %s45, 1
        %s230 = scalar_lea.sflag [#allocation3], %s229
        %s231 = sand.u32 %s45, 1
        %s232 = smul.addr %s231, 4
        %s233 = scalar_lea.vmem [#allocation2], %s232
        // Predicated region
        $region37: #{axial_block_forward.7} parent=35 // pred_check
          %p234 = pneg %p58
        $region38: #{axial_block_forward.7} parent=35 // pred_check_branch
          %236 = sbr.rel (%p234) target = $region40
        $region39: #{axial_block_forward.7} parent=35 // pred_region
          %237 = dma.done %s230, 64
        $region40: #{axial_block_forward.7} parent=35 // pred_fallthru
          _
        // Predicated region
        $region41: #{axial_block_forward.7} parent=35 // pred_check
          %p238 = pneg %p79
        $region42: #{axial_block_forward.7} parent=35 // pred_check_branch
          %240 = sbr.rel (%p238) target = $region44
        $region43: #{axial_block_forward.7} parent=35 // pred_region
          %241 = dma.done [#allocation6], 64
        $region44: #{axial_block_forward.7} parent=35 // pred_fallthru
          _
        // Predicated region
        $region45: #{axial_block_forward.7} parent=35 // pred_check
          %p242 = pneg %p100
        $region46: #{axial_block_forward.7} parent=35 // pred_check_branch
          %244 = sbr.rel (%p242) target = $region48
        $region47: #{axial_block_forward.7} parent=35 // pred_region
          %245 = dma.done [#allocation6], 128
        $region48: #{axial_block_forward.7} parent=35 // pred_fallthru
          _
        // Predicated region
        $region49: #{axial_block_forward.7} parent=35 // pred_check
          %p246 = pneg %p121
        $region50: #{axial_block_forward.7} parent=35 // pred_check_branch
          %248 = sbr.rel (%p246) target = $region52
        $region51: #{axial_block_forward.7} parent=35 // pred_region
          %249 = dma.done [#allocation9], 128
        $region52: #{axial_block_forward.7} parent=35 // pred_fallthru
          _
        %s250 = sand.u32 %s45, 1
        %s251 = scalar_lea.sflag [#allocation3], %s250
        %s252 = sand.u32 %s45, 1
        %s253 = smul.addr %s252, 4
        %s254 = scalar_lea.vmem [#allocation2], %s253
        %p255 = pneg %p58
        %p256 = pneg %p55
        %p257 = pneg %p79
        %p258 = pneg %p76
        %p259 = pneg %p100
        %p260 = pneg %p97
        %p261 = pneg %p121
        %p262 = pneg %p118
        %p263 = pneg %p149
        %p264 = pneg %p146
        %s265 = sand.u32 %s136, 1
        %s266 = scalar_lea.sflag [#allocation4], %s265
        %s267 = sand.u32 %s136, 1
        %s268 = smul.addr %s267, 8
        %s269 = scalar_lea.vmem [#allocation10], %s268
        %s270 = smul.u32 2, %s28
        %s271 = smul.u32 2, %s28
        %v273 = vld [vmem:[#allocation5] sm:$0xf]
        %v274 = vld [vmem:[%s233] sm:$0xf]
        %v277 = vunpack.c.l.s4 1983009808
        %v278 = vunpack.c.0.s8 %v277
        %v279 = vlaneseq
        %v280 = vshrl.u32 %v279, 7
        %v281 = vsub.s32 %v278, %v280
        %v282 = vrot.slane %v274, %v281
        %v283 = vcombine.high %v282, %v282
        %vm284 = vcmask 31744
        %v286 = vsel %vm284, %v273, 0
        %vm288 = vcmask 1041408
        %v290 = vsel %vm288, %v282, 0
        %v293 = vsel %vm288, %v283, 0
        %295 = vmatprep.subr.bf16.mxu0 %v293
        %296 = vmatpush1.bf16.msra.mxu0 %v290
        %297 = vmatprep.subr.bf16.mxu0 0
        %298 = vmatpush1.bf16.msra.mxu0 0
        %299 = vmatprep.subr.bf16.mxu0 0
        %300 = vmatpush1.bf16.msra.mxu0 0
        %301 = vmatprep.subr.bf16.mxu0 0
        %302 = vmatpush1.bf16.msra.mxu0 0
        %303 = vmatprep.subr.bf16.mxu0 0
        %304 = vmatpush1.bf16.msra.mxu0 0
        %305 = vmatprep.subr.bf16.mxu0 0
        %306 = vmatpush1.bf16.msra.mxu0 0
        %307 = vmatprep.subr.bf16.mxu0 0
        %308 = vmatpush1.bf16.msra.mxu0 0
        %309 = vmatprep.subr.bf16.mxu0 0
        %310 = vmatpush1.bf16.msra.mxu0 0
        %311 = vmatprep.subr.bf16.mxu0 0
        %312 = vmatpush1.bf16.msra.mxu0 0
        %313 = vmatprep.subr.bf16.mxu0 0
        %314 = vmatpush1.bf16.msra.mxu0 0
        %315 = vmatprep.subr.bf16.mxu0 0
        %316 = vmatpush1.bf16.msra.mxu0 0
        %317 = vmatprep.subr.bf16.mxu0 0
        %318 = vmatpush1.bf16.msra.mxu0 0
        %319 = vmatprep.subr.bf16.mxu0 0
        %320 = vmatpush1.bf16.msra.mxu0 0
        %321 = vmatprep.subr.bf16.mxu0 0
        %322 = vmatpush1.bf16.msra.mxu0 0
        %323 = vmatprep.subr.bf16.mxu0 0
        %324 = vmatpush1.bf16.msra.mxu0 0
        %325 = vmatprep.subr.bf16.mxu0 0
        %326 = vmatpush1.bf16.msra.mxu0 0
        %327 = vmatprep.mubr.bf16.mxu0 0
        %328 = vmatmul.mubr.bf16.gmra.mrb[0].mxu0 %v286
        %v329 = vpop.f32.mrb[0].mxu0
        %v330 = vadd.f32 0.0, %v329
        %v331 = vpop.f32.mrb[0].mxu0
        %v332 = vadd.f32 0.0, %v331
        %v333 = vpop.f32.mrb[0].mxu0
        %v334 = vpop.f32.mrb[0].mxu0
        %335 = vdwg.mxu0
        %v336 = vld [vmem:[#allocation7] sm:$0xff]
        %338 = vset.pattern.permute.xlu0 0
        %339 = vperm.xlu0 %338, %v336
        %v340 = vpop.permute.xlu0 %339
        %v342 = vmul.f32 %v330, %v340
        %v343 = vmul.f32 %v332, %v340
        %v344 = vld [vmem:[#allocation8] sm:$0xff]
        %346 = vset.pattern.permute.xlu0 0
        %347 = vperm.xlu0 %346, %v344
        %v348 = vpop.permute.xlu0 %347
        %v350 = vadd.f32 %v342, %v348
        %v351 = vadd.f32 %v343, %v348
        %v352 = vpack.c.bf16 %v350, %v350
        %v353 = vpack.c.bf16 %v351, %v351
        %v356 = vunpack.c.l.b16 %v352
        %v357 = vunpack.c.l.b16 %v353
        %v358 = vpack.c.b16 %v357, %v356
        %360 = vst [vmem:[%s269] sm:$0xff] %v358
        %s361 = sand.u32 %s136, 1
        %s362 = scalar_lea.sflag [#allocation4], %s361
        %s363 = sand.u32 %s136, 1
        %s364 = smul.addr %s363, 8
        %s365 = scalar_lea.vmem [#allocation10], %s364
        // Predicated region
        $region53: #{axial_block_forward.7} parent=35 // pred_check
          %p366 = pneg %p146
        $region54: #{axial_block_forward.7} parent=35 // pred_check_branch
          %368 = sbr.rel (%p366) target = $region56
        $region55: #{axial_block_forward.7} parent=35 // pred_region
          %s369 = smul.u32 2, %s28
          %s371 = ssub.s32 128, 128
          %372 = vsyncadd %s362, %s371
          %s373 = smul.addr %s27, 2
          %s374 = sadd.s32 %s369, %s373
          %s375 = smul.addr %s374, 64
          %s376 = scalar_lea.hbm %s4, %s375
          %s378 = sshll.u32 %s365, 4
          %s379 = int_to_ptr.vmem [resolvable:$true] %s378
          %381 = dma.vmem_to_hbm [thread:$0]  %s379, 128, %s376, %s362
        $region56: #{axial_block_forward.7} parent=35 // pred_fallthru
          _
      $region36: #{axial_block_forward.7} parent=5 // pred_fallthru
        _
      %p382 = scmp.le.s32.totalorder 2, %s18
      // Predicated region
      $region57: #{axial_block_forward.7} parent=5 // pred_check
        %p383 = pneg %p382
      $region58: #{axial_block_forward.7} parent=5 // pred_check_branch
        %385 = sbr.rel (%p383) target = $region60
      $region59: #{axial_block_forward.7} parent=5 // pred_region
        %s386 = ssub.s32 %s18, 2
        // Predicated region
        $region61: #{axial_block_forward.7} parent=59 // pred_check
          %p387 = pneg %p152
        $region62: #{axial_block_forward.7} parent=59 // pred_check_branch
          %389 = sbr.rel (%p387) target = $region64
        $region63: #{axial_block_forward.7} parent=59 // pred_region
          %s390 = sand.u32 %s137, 1
          %s391 = scalar_lea.sflag [#allocation4], %s390
          %s392 = sand.u32 %s137, 1
          %s393 = smul.addr %s392, 8
          %s394 = scalar_lea.vmem [#allocation10], %s393
          %395 = dma.done %s391, 128
        $region64: #{axial_block_forward.7} parent=59 // pred_fallthru
          _
      $region60: #{axial_block_forward.7} parent=5 // pred_fallthru
        _
    $region6: #{axial_block_forward.7} parent=1 // loop_footer
      %s22 = sadd.s32 1, %s18
    $region7: #{axial_block_forward.7} parent=1 // loop_footer_branch
      %17 = sbr.rel target = $region3
    $region8: #{axial_block_forward.7} parent=1 // loop_exit
      _
    %396 = vsyncpa [#allocation3], 1
    %s397 = scalar_lea.sflag [#allocation3], 1
    %398 = vsyncpa %s397, 1
    %399 = vsyncpa [#allocation6], 1
    %400 = vsyncpa [#allocation9], 1
    %401 = vsyncpa [#allocation4], 1
    %s402 = scalar_lea.sflag [#allocation4], 1
    %403 = vsyncpa %s402, 1

// kernel: axial_block_forward.6
$region0: #{axial_block_forward.6}
  #allocation0 [shape = 'u32[]', space=smem, size = 0x4, offset = 0x4, fixed_abs, tag = 'smem constant byte address 0x4 - core index']
  #allocation1 [shape = 'u32[144,128]{1,0:T(1,128)}', space=vmem, size = 0x12000, scoped, tag = 'internal scratch']
  #allocation2 [shape = 'f32[1]{0:T(128)S(6)}', space=smem, size = 0x200, scoped, tag = 'scoped memory for axial_block_forward.6']
  #allocation3 [shape = 'f32[1]{0:T(128)S(6)}', space=smem, size = 0x200, scoped, tag = 'scoped memory for axial_block_forward.6']
  #allocation4 [shape = 'f32[1]{0:T(128)S(6)}', space=smem, size = 0x200, scoped, tag = 'scoped memory for axial_block_forward.6']
  #allocation5 [shape = 'f32[1]{0:T(128)S(6)}', space=smem, size = 0x200, scoped, tag = 'scoped memory for axial_block_forward.6']
  %s0 = inlined_call_operand.hbm [shape: bf16[32,8,16], index: 0, kind: input, shape index: {}]
  %s1 = inlined_call_operand.hbm [shape: bf16[32,16,2], index: 1, kind: input, shape index: {}]
  %s2 = inlined_call_operand.hbm [shape: f32[2,16,16], index: 2, kind: input, shape index: {}]
  %s3 = inlined_call_operand.hbm [shape: f32[2,16,16], index: 3, kind: input, shape index: {}]
  %s4 = inlined_call_operand.hbm [shape: f32[4,16,16], index: 4, kind: input, shape index: {}]
  %s5 = inlined_call_operand.<no memory space> [shape: f32[1], index: 5, kind: input, shape index: {}]
  %s6 = inlined_call_operand.<no memory space> [shape: f32[1], index: 6, kind: input, shape index: {}]
  %s7 = inlined_call_operand.<no memory space> [shape: f32[1], index: 7, kind: input, shape index: {}]
  %s8 = inlined_call_operand.<no memory space> [shape: f32[1], index: 8, kind: input, shape index: {}]
  %s9 = inlined_call_operand.hbm [shape: f32[4], index: 9, kind: input, shape index: {}]
  %s10 = inlined_call_operand.hbm [shape: f32[4], index: 10, kind: input, shape index: {}]
  %s11 = inlined_call_operand.hbm [shape: bf16[32,4,16], index: 11, kind: output, shape index: {}]
  %s12 = sld [smem:[#allocation0]]
  $region105: #{axial_block_forward.6} parent=0
    _
  %s14 = ssub.s32 1, %s12
  %s15 = scalar_select 0, %s14, %s12
  %16 = sst [smem:[#allocation2]] %s5
  %17 = sst [smem:[#allocation3]] %s6
  %18 = sst [smem:[#allocation4]] %s7
  %19 = sst [smem:[#allocation5]] %s8
  $region1: #{axial_block_forward.6} parent=0
    #allocation6 [shape = 'u8[32768]{0}', space=vmem, size = 0x8000, scoped, tag = 'input window, operand 0']
    #allocation7 [shape = 's32[2]{0}', space=sflag, size = 0x8, scoped, tag = 'scoped memory for axial_block_forward.6']
    #allocation8 [shape = 's32[2]{0}', space=sflag, size = 0x8, scoped, tag = 'scoped memory for axial_block_forward.6']
    #allocation9 [shape = 's32[2]{0}', space=sflag, size = 0x8, scoped, tag = 'scoped memory for axial_block_forward.6']
    #allocation10 [shape = 'u8[65536]{0}', space=vmem, size = 0x10000, scoped, tag = 'input window, operand 1']
    #allocation11 [shape = 's32[2]{0}', space=sflag, size = 0x8, scoped, tag = 'scoped memory for axial_block_forward.6']
    #allocation12 [shape = 'u8[16384]{0}', space=vmem, size = 0x4000, scoped, tag = 'input window, operand 2, single buffered']
    #allocation13 [shape = 'u8[16384]{0}', space=vmem, size = 0x4000, scoped, tag = 'input window, operand 3, single buffered']
    #allocation14 [shape = 's32[1]{0}', space=sflag, size = 0x4, scoped, tag = 'scoped memory for axial_block_forward.6']
    #allocation15 [shape = 'u8[32768]{0}', space=vmem, size = 0x8000, scoped, tag = 'input window, operand 4, single buffered']
    #allocation16 [shape = 'u8[512]{0}', space=smem, size = 0x200, scoped, tag = 'input window, operand 9, single buffered']
    #allocation17 [shape = 'u8[512]{0}', space=smem, size = 0x200, scoped, tag = 'input window, operand 10, single buffered']
    #allocation18 [shape = 's32[1]{0}', space=sflag, size = 0x4, scoped, tag = 'scoped memory for axial_block_forward.6']
    #allocation19 [shape = 'u8[16384]{0}', space=vmem, size = 0x4000, scoped, tag = 'output window, operand 0']
    %20 = vsyncpa [#allocation7], 0
    %s21 = scalar_lea.sflag [#allocation7], 1
    %22 = vsyncpa %s21, 0
    %23 = vsyncpa [#allocation11], 0
    %s24 = scalar_lea.sflag [#allocation11], 1
    %25 = vsyncpa %s24, 0
    %26 = vsyncpa [#allocation14], 0
    %27 = vsyncpa [#allocation9], 0
    %28 = vsyncpa [#allocation18], 0
    %29 = vsyncpa [#allocation8], 0
    %s30 = scalar_lea.sflag [#allocation8], 1
    %31 = vsyncpa %s30, 0
    loop: start=0, step=1, limit=6
    $region2: #{axial_block_forward.6} parent=1 // loop_pre_header
      _
    $region3: #{axial_block_forward.6} parent=1 // loop_header
      %s33 = sphi 0, %s37
      %p34 = scmp.ge.s32.totalorder %s33, 6
      %s43 = sphi 0, %s45
      %s46 = sphi 0, %s43
      %s47 = sphi 0, %s46
      %s63 = sphi 0, %s47
      %s69 = sphi 0, %s71
      %s72 = sphi 0, %s69
      %s73 = sphi 0, %s72
      %s89 = sphi 0, %s73
      %s93 = sphi 0, %s93
      %s95 = sphi 0, %s93
      %s96 = sphi 0, %s95
      %s110 = sphi 0, %s96
      %s114 = sphi 0, %s114
      %s116 = sphi 0, %s114
      %s117 = sphi 0, %s116
      %s131 = sphi 0, %s117
      %s135 = sphi 0, %s135
      %s137 = sphi 0, %s135
      %s138 = sphi 0, %s137
      %s152 = sphi 0, %s138
      %s156 = sphi 0, %s156
      %s158 = sphi 0, %s156
      %s159 = sphi 0, %s158
      %s173 = sphi 0, %s159
      %s177 = sphi 0, %s177
      %s179 = sphi 0, %s177
      %s180 = sphi 0, %s179
      %s194 = sphi 0, %s180
      %s198 = sphi 0, %s198
      %s200 = sphi 0, %s198
      %s201 = sphi 0, %s200
      %s215 = sphi 0, %s201
      %s219 = sphi 0, %s219
      %s221 = sphi 0, %s219
      %s222 = sphi 0, %s221
      %s236 = sphi 0, %s222
      %s240 = sphi 0, %s240
      %s242 = sphi 0, %s240
      %s243 = sphi 0, %s242
      %s257 = sphi 0, %s243
      %s261 = sphi 0, %s261
      %s263 = sphi 0, %s261
      %s264 = sphi 0, %s263
      %s278 = sphi 0, %s264
      %s284 = sphi 0, %s286
      %s287 = sphi 0, %s284
      %s288 = sphi 0, %s287
      %s304 = sphi 0, %s288
    $region4: #{axial_block_forward.6} parent=1 // loop_header_branch
      %36 = sbr.rel (%p34) target = $region8
    $region5: #{axial_block_forward.6} parent=1 // loop_body
      %s38 = ssub.s32 %s33, 1
      %s39 = ssub.s32 %s33, 2
      %s40 = sadd.s32 %s33, 1
      %s41 = ssub.s32 %s33, %s40
      %p42 = scmp.eq.s32.totalorder %s41, 0
      %s44 = sadd.s32 %s43, 1
      %s45 = scalar_select %p42, %s43, %s44
      %p48 = pneg %p42
      %p49 = scmp.eq.s32.totalorder %s33, 3
      %p50 = por %p48, %p49
      %p51 = scmp.ne.s32.totalorder %s43, %s46
      %p52 = scmp.eq.s32.totalorder %s33, 0
      %p53 = por %p51, %p52
      %p54 = scmp.ne.s32.totalorder %s43, %s46
      %p55 = scmp.eq.s32.totalorder %s38, 3
      %p56 = por %p54, %p55
      %p57 = scmp.ne.s32.totalorder %s46, %s47
      %p58 = scmp.eq.s32.totalorder %s38, 0
      %p59 = por %p57, %p58
      %p60 = scmp.ne.s32.totalorder %s46, %s47
      %p61 = scmp.eq.s32.totalorder %s39, 3
      %p62 = por %p60, %p61
      %p64 = scmp.ne.s32.totalorder %s47, %s63
      %p65 = scmp.eq.s32.totalorder %s39, 0
      %p66 = por %p64, %p65
      %s67 = ssub.s32 %s33, %s40
      %p68 = scmp.eq.s32.totalorder %s67, 0
      %s70 = sadd.s32 %s69, 1
      %s71 = scalar_select %p68, %s69, %s70
      %p74 = pneg %p68
      %p75 = scmp.eq.s32.totalorder %s33, 3
      %p76 = por %p74, %p75
      %p77 = scmp.ne.s32.totalorder %s69, %s72
      %p78 = scmp.eq.s32.totalorder %s33, 0
      %p79 = por %p77, %p78
      %p80 = scmp.ne.s32.totalorder %s69, %s72
      %p81 = scmp.eq.s32.totalorder %s38, 3
      %p82 = por %p80, %p81
      %p83 = scmp.ne.s32.totalorder %s72, %s73
      %p84 = scmp.eq.s32.totalorder %s38, 0
      %p85 = por %p83, %p84
      %p86 = scmp.ne.s32.totalorder %s72, %s73
      %p87 = scmp.eq.s32.totalorder %s39, 3
      %p88 = por %p86, %p87
      %p90 = scmp.ne.s32.totalorder %s73, %s89
      %p91 = scmp.eq.s32.totalorder %s39, 0
      %p92 = por %p90, %p91
      %s94 = sadd.s32 %s93, 1
      %p97 = scmp.eq.s32.totalorder %s33, 3
      %p98 = scmp.ne.s32.totalorder %s93, %s95
      %p99 = scmp.eq.s32.totalorder %s33, 0
      %p100 = por %p98, %p99
      %p101 = scmp.ne.s32.totalorder %s93, %s95
      %p102 = scmp.eq.s32.totalorder %s38, 3
      %p103 = por %p101, %p102
      %p104 = scmp.ne.s32.totalorder %s95, %s96
      %p105 = scmp.eq.s32.totalorder %s38, 0
      %p106 = por %p104, %p105
      %p107 = scmp.ne.s32.totalorder %s95, %s96
      %p108 = scmp.eq.s32.totalorder %s39, 3
      %p109 = por %p107, %p108
      %p111 = scmp.ne.s32.totalorder %s96, %s110
      %p112 = scmp.eq.s32.totalorder %s39, 0
      %p113 = por %p111, %p112
      %s115 = sadd.s32 %s114, 1
      %p118 = scmp.eq.s32.totalorder %s33, 3
      %p119 = scmp.ne.s32.totalorder %s114, %s116
      %p120 = scmp.eq.s32.totalorder %s33, 0
      %p121 = por %p119, %p120
      %p122 = scmp.ne.s32.totalorder %s114, %s116
      %p123 = scmp.eq.s32.totalorder %s38, 3
      %p124 = por %p122, %p123
      %p125 = scmp.ne.s32.totalorder %s116, %s117
      %p126 = scmp.eq.s32.totalorder %s38, 0
      %p127 = por %p125, %p126
      %p128 = scmp.ne.s32.totalorder %s116, %s117
      %p129 = scmp.eq.s32.totalorder %s39, 3
      %p130 = por %p128, %p129
      %p132 = scmp.ne.s32.totalorder %s117, %s131
      %p133 = scmp.eq.s32.totalorder %s39, 0
      %p134 = por %p132, %p133
      %s136 = sadd.s32 %s135, 1
      %p139 = scmp.eq.s32.totalorder %s33, 3
      %p140 = scmp.ne.s32.totalorder %s135, %s137
      %p141 = scmp.eq.s32.totalorder %s33, 0
      %p142 = por %p140, %p141
      %p143 = scmp.ne.s32.totalorder %s135, %s137
      %p144 = scmp.eq.s32.totalorder %s38, 3
      %p145 = por %p143, %p144
      %p146 = scmp.ne.s32.totalorder %s137, %s138
      %p147 = scmp.eq.s32.totalorder %s38, 0
      %p148 = por %p146, %p147
      %p149 = scmp.ne.s32.totalorder %s137, %s138
      %p150 = scmp.eq.s32.totalorder %s39, 3
      %p151 = por %p149, %p150
      %p153 = scmp.ne.s32.totalorder %s138, %s152
      %p154 = scmp.eq.s32.totalorder %s39, 0
      %p155 = por %p153, %p154
      %s157 = sadd.s32 %s156, 1
      %p160 = scmp.eq.s32.totalorder %s33, 3
      %p161 = scmp.ne.s32.totalorder %s156, %s158
      %p162 = scmp.eq.s32.totalorder %s33, 0
      %p163 = por %p161, %p162
      %p164 = scmp.ne.s32.totalorder %s156, %s158
      %p165 = scmp.eq.s32.totalorder %s38, 3
      %p166 = por %p164, %p165
      %p167 = scmp.ne.s32.totalorder %s158, %s159
      %p168 = scmp.eq.s32.totalorder %s38, 0
      %p169 = por %p167, %p168
      %p170 = scmp.ne.s32.totalorder %s158, %s159
      %p171 = scmp.eq.s32.totalorder %s39, 3
      %p172 = por %p170, %p171
      %p174 = scmp.ne.s32.totalorder %s159, %s173
      %p175 = scmp.eq.s32.totalorder %s39, 0
      %p176 = por %p174, %p175
      %s178 = sadd.s32 %s177, 1
      %p181 = scmp.eq.s32.totalorder %s33, 3
      %p182 = scmp.ne.s32.totalorder %s177, %s179
      %p183 = scmp.eq.s32.totalorder %s33, 0
      %p184 = por %p182, %p183
      %p185 = scmp.ne.s32.totalorder %s177, %s179
      %p186 = scmp.eq.s32.totalorder %s38, 3
      %p187 = por %p185, %p186
      %p188 = scmp.ne.s32.totalorder %s179, %s180
      %p189 = scmp.eq.s32.totalorder %s38, 0
      %p190 = por %p188, %p189
      %p191 = scmp.ne.s32.totalorder %s179, %s180
      %p192 = scmp.eq.s32.totalorder %s39, 3
      %p193 = por %p191, %p192
      %p195 = scmp.ne.s32.totalorder %s180, %s194
      %p196 = scmp.eq.s32.totalorder %s39, 0
      %p197 = por %p195, %p196
      %s199 = sadd.s32 %s198, 1
      %p202 = scmp.eq.s32.totalorder %s33, 3
      %p203 = scmp.ne.s32.totalorder %s198, %s200
      %p204 = scmp.eq.s32.totalorder %s33, 0
      %p205 = por %p203, %p204
      %p206 = scmp.ne.s32.totalorder %s198, %s200
      %p207 = scmp.eq.s32.totalorder %s38, 3
      %p208 = por %p206, %p207
      %p209 = scmp.ne.s32.totalorder %s200, %s201
      %p210 = scmp.eq.s32.totalorder %s38, 0
      %p211 = por %p209, %p210
      %p212 = scmp.ne.s32.totalorder %s200, %s201
      %p213 = scmp.eq.s32.totalorder %s39, 3
      %p214 = por %p212, %p213
      %p216 = scmp.ne.s32.totalorder %s201, %s215
      %p217 = scmp.eq.s32.totalorder %s39, 0
      %p218 = por %p216, %p217
      %s220 = sadd.s32 %s219, 1
      %p223 = scmp.eq.s32.totalorder %s33, 3
      %p224 = scmp.ne.s32.totalorder %s219, %s221
      %p225 = scmp.eq.s32.totalorder %s33, 0
      %p226 = por %p224, %p225
      %p227 = scmp.ne.s32.totalorder %s219, %s221
      %p228 = scmp.eq.s32.totalorder %s38, 3
      %p229 = por %p227, %p228
      %p230 = scmp.ne.s32.totalorder %s221, %s222
      %p231 = scmp.eq.s32.totalorder %s38, 0
      %p232 = por %p230, %p231
      %p233 = scmp.ne.s32.totalorder %s221, %s222
      %p234 = scmp.eq.s32.totalorder %s39, 3
      %p235 = por %p233, %p234
      %p237 = scmp.ne.s32.totalorder %s222, %s236
      %p238 = scmp.eq.s32.totalorder %s39, 0
      %p239 = por %p237, %p238
      %s241 = sadd.s32 %s240, 1
      %p244 = scmp.eq.s32.totalorder %s33, 3
      %p245 = scmp.ne.s32.totalorder %s240, %s242
      %p246 = scmp.eq.s32.totalorder %s33, 0
      %p247 = por %p245, %p246
      %p248 = scmp.ne.s32.totalorder %s240, %s242
      %p249 = scmp.eq.s32.totalorder %s38, 3
      %p250 = por %p248, %p249
      %p251 = scmp.ne.s32.totalorder %s242, %s243
      %p252 = scmp.eq.s32.totalorder %s38, 0
      %p253 = por %p251, %p252
      %p254 = scmp.ne.s32.totalorder %s242, %s243
      %p255 = scmp.eq.s32.totalorder %s39, 3
      %p256 = por %p254, %p255
      %p258 = scmp.ne.s32.totalorder %s243, %s257
      %p259 = scmp.eq.s32.totalorder %s39, 0
      %p260 = por %p258, %p259
      %s262 = sadd.s32 %s261, 1
      %p265 = scmp.eq.s32.totalorder %s33, 3
      %p266 = scmp.ne.s32.totalorder %s261, %s263
      %p267 = scmp.eq.s32.totalorder %s33, 0
      %p268 = por %p266, %p267
      %p269 = scmp.ne.s32.totalorder %s261, %s263
      %p270 = scmp.eq.s32.totalorder %s38, 3
      %p271 = por %p269, %p270
      %p272 = scmp.ne.s32.totalorder %s263, %s264
      %p273 = scmp.eq.s32.totalorder %s38, 0
      %p274 = por %p272, %p273
      %p275 = scmp.ne.s32.totalorder %s263, %s264
      %p276 = scmp.eq.s32.totalorder %s39, 3
      %p277 = por %p275, %p276
      %p279 = scmp.ne.s32.totalorder %s264, %s278
      %p280 = scmp.eq.s32.totalorder %s39, 0
      %p281 = por %p279, %p280
      %s282 = ssub.s32 %s33, %s40
      %p283 = scmp.eq.s32.totalorder %s282, 0
      %s285 = sadd.s32 %s284, 1
      %s286 = scalar_select %p283, %s284, %s285
      %p289 = pneg %p283
      %p290 = scmp.eq.s32.totalorder %s33, 3
      %p291 = por %p289, %p290
      %p292 = scmp.ne.s32.totalorder %s284, %s287
      %p293 = scmp.eq.s32.totalorder %s33, 0
      %p294 = por %p292, %p293
      %p295 = scmp.ne.s32.totalorder %s284, %s287
      %p296 = scmp.eq.s32.totalorder %s38, 3
      %p297 = por %p295, %p296
      %p298 = scmp.ne.s32.totalorder %s287, %s288
      %p299 = scmp.eq.s32.totalorder %s38, 0
      %p300 = por %p298, %p299
      %p301 = scmp.ne.s32.totalorder %s287, %s288
      %p302 = scmp.eq.s32.totalorder %s39, 3
      %p303 = por %p301, %p302
      %p305 = scmp.ne.s32.totalorder %s288, %s304
      %p306 = scmp.eq.s32.totalorder %s39, 0
      %p307 = por %p305, %p306
      %p308 = scmp.le.s32.totalorder 1, %s33
      %p309 = scmp.lt.s32.totalorder %s33, 5
      %p310 = pnand %p308, %p309
      %p311 = pneg %p310
      // Predicated region
      $region9: #{axial_block_forward.6} parent=5 // pred_check
        _
      $region10: #{axial_block_forward.6} parent=5 // pred_check_branch
        %313 = sbr.rel (%p310) target = $region12
      $region11: #{axial_block_forward.6} parent=5 // pred_region
        %s314 = ssub.s32 %s33, 1
        // Predicated region
        $region13: #{axial_block_forward.6} parent=11 // pred_check
          %p315 = pneg %p106
        $region14: #{axial_block_forward.6} parent=11 // pred_check_branch
          %317 = sbr.rel (%p315) target = $region16
        $region15: #{axial_block_forward.6} parent=11 // pred_region
          %s319 = ssub.s32 512, 512
          %320 = vsyncadd [#allocation11], %s319
          %s321 = sshll.u32 [#allocation12], 4
          %s322 = int_to_ptr.vmem [resolvable:$true] %s321
          %327 = dma.hbm_to_vmem [thread:$0]  %s2, 512, %s322, [#allocation11], 128, 128, 8
        $region16: #{axial_block_forward.6} parent=11 // pred_fallthru
          _
        // Predicated region
        $region17: #{axial_block_forward.6} parent=11 // pred_check
          %p328 = pneg %p127
        $region18: #{axial_block_forward.6} parent=11 // pred_check_branch
          %330 = sbr.rel (%p328) target = $region20
        $region19: #{axial_block_forward.6} parent=11 // pred_region
          %s332 = ssub.s32 512, 512
          %333 = vsyncadd [#allocation14], %s332
          %s334 = sshll.u32 [#allocation13], 4
          %s335 = int_to_ptr.vmem [resolvable:$true] %s334
          %340 = dma.hbm_to_vmem [thread:$0]  %s3, 512, %s335, [#allocation14], 128, 128, 8
        $region20: #{axial_block_forward.6} parent=11 // pred_fallthru
          _
        // Predicated region
        $region21: #{axial_block_forward.6} parent=11 // pred_check
          %p341 = pneg %p148
        $region22: #{axial_block_forward.6} parent=11 // pred_check_branch
          %343 = sbr.rel (%p341) target = $region24
        $region23: #{axial_block_forward.6} parent=11 // pred_region
          %s345 = ssub.s32 1024, 1024
          %346 = vsyncadd [#allocation14], %s345
          %s347 = sshll.u32 [#allocation15], 4
          %s348 = int_to_ptr.vmem [resolvable:$true] %s347
          %353 = dma.hbm_to_vmem [thread:$0]  %s4, 1024, %s348, [#allocation14], 128, 128, 8
        $region24: #{axial_block_forward.6} parent=11 // pred_fallthru
          _
        // Predicated region
        $region25: #{axial_block_forward.6} parent=11 // pred_check
          %p354 = pneg %p169
        $region26: #{axial_block_forward.6} parent=11 // pred_check_branch
          %356 = sbr.rel (%p354) target = $region28
        $region27: #{axial_block_forward.6} parent=11 // pred_region
          _
        $region28: #{axial_block_forward.6} parent=11 // pred_fallthru
          _
        // Predicated region
        $region29: #{axial_block_forward.6} parent=11 // pred_check
          %p357 = pneg %p190
        $region30: #{axial_block_forward.6} parent=11 // pred_check_branch
          %359 = sbr.rel (%p357) target = $region32
        $region31: #{axial_block_forward.6} parent=11 // pred_region
          _
        $region32: #{axial_block_forward.6} parent=11 // pred_fallthru
          _
        // Predicated region
        $region33: #{axial_block_forward.6} parent=11 // pred_check
          %p360 = pneg %p211
        $region34: #{axial_block_forward.6} parent=11 // pred_check_branch
          %362 = sbr.rel (%p360) target = $region36
        $region35: #{axial_block_forward.6} parent=11 // pred_region
          _
        $region36: #{axial_block_forward.6} parent=11 // pred_fallthru
          _
        // Predicated region
        $region37: #{axial_block_forward.6} parent=11 // pred_check
          %p363 = pneg %p232
        $region38: #{axial_block_forward.6} parent=11 // pred_check_branch
          %365 = sbr.rel (%p363) target = $region40
        $region39: #{axial_block_forward.6} parent=11 // pred_region
          _
        $region40: #{axial_block_forward.6} parent=11 // pred_fallthru
          _
        // Predicated region
        $region41: #{axial_block_forward.6} parent=11 // pred_check
          %p366 = pneg %p253
        $region42: #{axial_block_forward.6} parent=11 // pred_check_branch
          %368 = sbr.rel (%p366) target = $region44
        $region43: #{axial_block_forward.6} parent=11 // pred_region
          %s370 = ssub.s32 16, 16
          %371 = vsyncadd [#allocation9], %s370
          %374 = dma.hbm_to_smem %s9, 16, [#allocation16], [#allocation9]
        $region44: #{axial_block_forward.6} parent=11 // pred_fallthru
          _
        // Predicated region
        $region45: #{axial_block_forward.6} parent=11 // pred_check
          %p375 = pneg %p274
        $region46: #{axial_block_forward.6} parent=11 // pred_check_branch
          %377 = sbr.rel (%p375) target = $region48
        $region47: #{axial_block_forward.6} parent=11 // pred_region
          %s379 = ssub.s32 16, 16
          %380 = vsyncadd [#allocation18], %s379
          %383 = dma.hbm_to_smem %s10, 16, [#allocation17], [#allocation18]
        $region48: #{axial_block_forward.6} parent=11 // pred_fallthru
          _
      $region12: #{axial_block_forward.6} parent=5 // pred_fallthru
        _
      %p384 = scmp.lt.s32.totalorder %s33, 4
      // Predicated region
      $region49: #{axial_block_forward.6} parent=5 // pred_check
        %p385 = pneg %p384
      $region50: #{axial_block_forward.6} parent=5 // pred_check_branch
        %387 = sbr.rel (%p385) target = $region52
      $region51: #{axial_block_forward.6} parent=5 // pred_region
        // Predicated region
        $region53: #{axial_block_forward.6} parent=51 // pred_check
          %p388 = pneg %p53
        $region54: #{axial_block_forward.6} parent=51 // pred_check_branch
          %390 = sbr.rel (%p388) target = $region56
        $region55: #{axial_block_forward.6} parent=51 // pred_region
          %s391 = sand.u32 %s43, 1
          %s392 = scalar_lea.sflag [#allocation7], %s391
          %s393 = sand.u32 %s43, 1
          %s394 = smul.addr %s393, 32
          %s395 = scalar_lea.vmem [#allocation6], %s394
          %s396 = smul.u32 8, %s33
          %s398 = ssub.s32 512, 512
          %399 = vsyncadd %s392, %s398
          %s400 = smul.addr %s396, 64
          %s401 = scalar_lea.hbm %s0, %s400
          %s402 = sshll.u32 %s395, 4
          %s403 = int_to_ptr.vmem [resolvable:$true] %s402
          %408 = dma.hbm_to_vmem [thread:$0]  %s401, 512, %s403, %s392, 64, 64, 4
        $region56: #{axial_block_forward.6} parent=51 // pred_fallthru
          _
        // Predicated region
        $region57: #{axial_block_forward.6} parent=51 // pred_check
          %p409 = pneg %p79
        $region58: #{axial_block_forward.6} parent=51 // pred_check_branch
          %411 = sbr.rel (%p409) target = $region60
        $region59: #{axial_block_forward.6} parent=51 // pred_region
          %s412 = sand.u32 %s33, 1
          %s413 = scalar_lea.sflag [#allocation11], %s412
          %s414 = sand.u32 %s69, 1
          %s415 = smul.addr %s414, 64
          %s416 = scalar_lea.vmem [#allocation10], %s415
          %s417 = smul.u32 8, %s33
          %s419 = ssub.s32 1024, 1024
          %420 = vsyncadd %s413, %s419
          %s421 = smul.addr %s417, 2
          %s422 = smul.addr %s421, 64
          %s423 = scalar_lea.hbm %s1, %s422
          %s424 = sshll.u32 %s416, 4
          %s425 = int_to_ptr.vmem [resolvable:$true] %s424
          %430 = dma.hbm_to_vmem [thread:$0]  %s423, 1024, %s425, %s413, 64, 64, 4
        $region60: #{axial_block_forward.6} parent=51 // pred_fallthru
          _
      $region52: #{axial_block_forward.6} parent=5 // pred_fallthru
        _
      %p431 = scmp.le.s32.totalorder 1, %s33
      %p432 = scmp.lt.s32.totalorder %s33, 5
      %p433 = pnand %p431, %p432
      %p434 = pneg %p433
      // Predicated region
      $region61: #{axial_block_forward.6} parent=5 // pred_check
        _
      $region62: #{axial_block_forward.6} parent=5 // pred_check_branch
        %436 = sbr.rel (%p433) target = $region64
      $region63: #{axial_block_forward.6} parent=5 // pred_region
        %s437 = ssub.s32 %s33, 1
        %s438 = sand.u32 %s46, 1
        %s439 = scalar_lea.sflag [#allocation7], %s438
        %s440 = sand.u32 %s46, 1
        %s441 = smul.addr %s440, 32
        %s442 = scalar_lea.vmem [#allocation6], %s441
        // Predicated region
        $region65: #{axial_block_forward.6} parent=63 // pred_check
          %p443 = pneg %p59
        $region66: #{axial_block_forward.6} parent=63 // pred_check_branch
          %445 = sbr.rel (%p443) target = $region68
        $region67: #{axial_block_forward.6} parent=63 // pred_region
          %446 = dma.done %s439, 512
        $region68: #{axial_block_forward.6} parent=63 // pred_fallthru
          _
        %s447 = sand.u32 %s38, 1
        %s448 = scalar_lea.sflag [#allocation11], %s447
        %s449 = sand.u32 %s72, 1
        %s450 = smul.addr %s449, 64
        %s451 = scalar_lea.vmem [#allocation10], %s450
        // Predicated region
        $region69: #{axial_block_forward.6} parent=63 // pred_check
          %p452 = pneg %p85
        $region70: #{axial_block_forward.6} parent=63 // pred_check_branch
          %454 = sbr.rel (%p452) target = $region72
        $region71: #{axial_block_forward.6} parent=63 // pred_region
          %455 = dma.done %s448, 1024
        $region72: #{axial_block_forward.6} parent=63 // pred_fallthru
          _
        // Predicated region
        $region73: #{axial_block_forward.6} parent=63 // pred_check
          %p456 = pneg %p106
        $region74: #{axial_block_forward.6} parent=63 // pred_check_branch
          %458 = sbr.rel (%p456) target = $region76
        $region75: #{axial_block_forward.6} parent=63 // pred_region
          %459 = dma.done [#allocation11], 512
        $region76: #{axial_block_forward.6} parent=63 // pred_fallthru
          _
        // Predicated region
        $region77: #{axial_block_forward.6} parent=63 // pred_check
          %p460 = pneg %p127
        $region78: #{axial_block_forward.6} parent=63 // pred_check_branch
          %462 = sbr.rel (%p460) target = $region80
        $region79: #{axial_block_forward.6} parent=63 // pred_region
          %463 = dma.done [#allocation14], 512
        $region80: #{axial_block_forward.6} parent=63 // pred_fallthru
          _
        // Predicated region
        $region81: #{axial_block_forward.6} parent=63 // pred_check
          %p464 = pneg %p148
        $region82: #{axial_block_forward.6} parent=63 // pred_check_branch
          %466 = sbr.rel (%p464) target = $region84
        $region83: #{axial_block_forward.6} parent=63 // pred_region
          %467 = dma.done [#allocation14], 1024
        $region84: #{axial_block_forward.6} parent=63 // pred_fallthru
          _
        // Predicated region
        $region85: #{axial_block_forward.6} parent=63 // pred_check
          %p468 = pneg %p253
        $region86: #{axial_block_forward.6} parent=63 // pred_check_branch
          %470 = sbr.rel (%p468) target = $region88
        $region87: #{axial_block_forward.6} parent=63 // pred_region
          %471 = dma.done [#allocation9], 16
        $region88: #{axial_block_forward.6} parent=63 // pred_fallthru
          _
        // Predicated region
        $region89: #{axial_block_forward.6} parent=63 // pred_check
          %p472 = pneg %p274
        $region90: #{axial_block_forward.6} parent=63 // pred_check_branch
          %474 = sbr.rel (%p472) target = $region92
        $region91: #{axial_block_forward.6} parent=63 // pred_region
          %475 = dma.done [#allocation18], 16
        $region92: #{axial_block_forward.6} parent=63 // pred_fallthru
          _
        %476 = sfence
        %s477 = sand.u32 %s46, 1
        %s478 = scalar_lea.sflag [#allocation7], %s477
        %s479 = sand.u32 %s46, 1
        %s480 = smul.addr %s479, 32
        %s481 = scalar_lea.vmem [#allocation6], %s480
        %p482 = pneg %p59
        %p483 = pneg %p56
        %s484 = sand.u32 %s38, 1
        %s485 = scalar_lea.sflag [#allocation11], %s484
        %s486 = sand.u32 %s72, 1
        %s487 = smul.addr %s486, 64
        %s488 = scalar_lea.vmem [#allocation10], %s487
        %p489 = pneg %p85
        %p490 = pneg %p82
        %p491 = pneg %p106
        %p492 = pneg %p103
        %p493 = pneg %p127
        %p494 = pneg %p124
        %p495 = pneg %p148
        %p496 = pneg %p145
        %p497 = pneg %p169
        %p498 = pneg %p166
        %p499 = pneg %p190
        %p500 = pneg %p187
        %p501 = pneg %p211
        %p502 = pneg %p208
        %p503 = pneg %p232
        %p504 = pneg %p229
        %p505 = pneg %p253
        %p506 = pneg %p250
        %p507 = pneg %p274
        %p508 = pneg %p271
        %p509 = pneg %p300
        %p510 = pneg %p297
        %s511 = sand.u32 %s287, 1
        %s512 = scalar_lea.sflag [#allocation8], %s511
        %s513 = sand.u32 %s287, 1
        %s514 = smul.addr %s513, 16
        %s515 = scalar_lea.vmem [#allocation19], %s514
        %s516 = smul.u32 8, %s38
        %s517 = smul.u32 8, %s38
        %s518 = smul.u32 8, %s38
        %v520 = vld [vmem:[%s442] sm:$0xf]
        %v521 = vld [vmem:[%s442 + $0x4] sm:$0xf]
        %v522 = vld [vmem:[%s442 + $0x8] sm:$0xf]
        %v523 = vld [vmem:[%s442 + $0xc] sm:$0xf]
        %v524 = vld [vmem:[%s442 + $0x10] sm:$0xf]
        %v525 = vld [vmem:[%s442 + $0x14] sm:$0xf]
        %v526 = vld [vmem:[%s442 + $0x18] sm:$0xf]
        %v527 = vld [vmem:[%s442 + $0x1c] sm:$0xf]
        %v528 = vld [vmem:[%s451] sm:$0xf]
        %v529 = vld [vmem:[%s451 + $0x4] sm:$0xf]
        %v530 = vld [vmem:[%s451 + $0x8] sm:$0xf]
        %v531 = vld [vmem:[%s451 + $0xc] sm:$0xf]
        %v532 = vld [vmem:[%s451 + $0x10] sm:$0xf]
        %v533 = vld [vmem:[%s451 + $0x14] sm:$0xf]
        %v534 = vld [vmem:[%s451 + $0x18] sm:$0xf]
        %v535 = vld [vmem:[%s451 + $0x1c] sm:$0xf]
        %v536 = vld [vmem:[%s451 + $0x20] sm:$0xf]
        %v537 = vld [vmem:[%s451 + $0x24] sm:$0xf]
        %v538 = vld [vmem:[%s451 + $0x28] sm:$0xf]
        %v539 = vld [vmem:[%s451 + $0x2c] sm:$0xf]
        %v540 = vld [vmem:[%s451 + $0x30] sm:$0xf]
        %v541 = vld [vmem:[%s451 + $0x34] sm:$0xf]
        %v542 = vld [vmem:[%s451 + $0x38] sm:$0xf]
        %v543 = vld [vmem:[%s451 + $0x3c] sm:$0xf]
        %v546 = vunpack.c.l.b16 %v528
        %v547 = vunpack.c.l.b16 %v529
        %v548 = vpack.c.b16 %v547, %v546
        %v550 = vunpack.c.l.b16 %v520
        %v551 = vpack.c.b16 %v550, %v550
        %v552 = vrot.slane %v551, 1
        %vm553 = vcmask 15360
        %v555 = vsel %vm553, %v548, 0
        %vm557 = vcmask 1040384
        %v559 = vsel %vm557, %v552, 0
        %561 = vmatprep.subr.bf16.mxu0 0
        %562 = vmatpush1.bf16.msra.mxu0 %v559
        %563 = vmatprep.subr.bf16.mxu0 0
        %564 = vmatpush1.bf16.msra.mxu0 0
        %565 = vmatprep.subr.bf16.mxu0 0
        %566 = vmatpush1.bf16.msra.mxu0 0
        %567 = vmatprep.subr.bf16.mxu0 0
        %568 = vmatpush1.bf16.msra.mxu0 0
        %569 = vmatprep.subr.bf16.mxu0 0
        %570 = vmatpush1.bf16.msra.mxu0 0
        %571 = vmatprep.subr.bf16.mxu0 0
        %572 = vmatpush1.bf16.msra.mxu0 0
        %573 = vmatprep.subr.bf16.mxu0 0
        %574 = vmatpush1.bf16.msra.mxu0 0
        %575 = vmatprep.subr.bf16.mxu0 0
        %576 = vmatpush1.bf16.msra.mxu0 0
        %577 = vmatprep.subr.bf16.mxu0 0
        %578 = vmatpush1.bf16.msra.mxu0 0
        %579 = vmatprep.subr.bf16.mxu0 0
        %580 = vmatpush1.bf16.msra.mxu0 0
        %581 = vmatprep.subr.bf16.mxu0 0
        %582 = vmatpush1.bf16.msra.mxu0 0
        %583 = vmatprep.subr.bf16.mxu0 0
        %584 = vmatpush1.bf16.msra.mxu0 0
        %585 = vmatprep.subr.bf16.mxu0 0
        %586 = vmatpush1.bf16.msra.mxu0 0
        %587 = vmatprep.subr.bf16.mxu0 0
        %588 = vmatpush1.bf16.msra.mxu0 0
        %589 = vmatprep.subr.bf16.mxu0 0
        %590 = vmatpush1.bf16.msra.mxu0 0
        %591 = vmatprep.subr.bf16.mxu0 0
        %592 = vmatpush1.bf16.msra.mxu0 0
        %593 = vmatprep.mubr.bf16.mxu0 0
        %594 = vmatmul.mubr.bf16.gmra.mrb[0].mxu0 %v555
        %v595 = vpop.f32.mrb[0].mxu0
        %v596 = vadd.f32 0.0, %v595
        %v597 = vpop.f32.mrb[0].mxu0
        %v598 = vpop.f32.mrb[0].mxu0
        %v599 = vadd.f32 0.0, %v598
        %v600 = vpop.f32.mrb[0].mxu0
        %601 = vdwg.mxu0
        %v604 = vunpack.c.l.b16 %v530
        %v605 = vunpack.c.l.b16 %v531
        %v606 = vpack.c.b16 %v605, %v604
        %v608 = vunpack.c.l.b16 %v521
        %v609 = vpack.c.b16 %v608, %v608
        %v610 = vrot.slane %v609, 1
        %v612 = vsel %vm553, %v606, 0
        %v615 = vsel %vm557, %v610, 0
        %617 = vmatprep.subr.bf16.mxu0 0
        %618 = vmatpush1.bf16.msra.mxu0 %v615
        %619 = vmatprep.subr.bf16.mxu0 0
        %620 = vmatpush1.bf16.msra.mxu0 0
        %621 = vmatprep.subr.bf16.mxu0 0
        %622 = vmatpush1.bf16.msra.mxu0 0
        %623 = vmatprep.subr.bf16.mxu0 0
        %624 = vmatpush1.bf16.msra.mxu0 0
        %625 = vmatprep.subr.bf16.mxu0 0
        %626 = vmatpush1.bf16.msra.mxu0 0
        %627 = vmatprep.subr.bf16.mxu0 0
        %628 = vmatpush1.bf16.msra.mxu0 0
        %629 = vmatprep.subr.bf16.mxu0 0
        %630 = vmatpush1.bf16.msra.mxu0 0
        %631 = vmatprep.subr.bf16.mxu0 0
        %632 = vmatpush1.bf16.msra.mxu0 0
        %633 = vmatprep.subr.bf16.mxu0 0
        %634 = vmatpush1.bf16.msra.mxu0 0
        %635 = vmatprep.subr.bf16.mxu0 0
        %636 = vmatpush1.bf16.msra.mxu0 0
        %637 = vmatprep.subr.bf16.mxu0 0
        %638 = vmatpush1.bf16.msra.mxu0 0
        %639 = vmatprep.subr.bf16.mxu0 0
        %640 = vmatpush1.bf16.msra.mxu0 0
        %641 = vmatprep.subr.bf16.mxu0 0
        %642 = vmatpush1.bf16.msra.mxu0 0
        %643 = vmatprep.subr.bf16.mxu0 0
        %644 = vmatpush1.bf16.msra.mxu0 0
        %645 = vmatprep.subr.bf16.mxu0 0
        %646 = vmatpush1.bf16.msra.mxu0 0
        %647 = vmatprep.subr.bf16.mxu0 0
        %648 = vmatpush1.bf16.msra.mxu0 0
        %649 = vmatprep.mubr.bf16.mxu0 0
        %650 = vmatmul.mubr.bf16.gmra.mrb[0].mxu0 %v612
        %v651 = vpop.f32.mrb[0].mxu0
        %v652 = vadd.f32 0.0, %v651
        %v653 = vpop.f32.mrb[0].mxu0
        %v654 = vpop.f32.mrb[0].mxu0
        %v655 = vadd.f32 0.0, %v654
        %v656 = vpop.f32.mrb[0].mxu0
        %657 = vdwg.mxu0
        %v660 = vunpack.c.l.b16 %v532
        %v661 = vunpack.c.l.b16 %v533
        %v662 = vpack.c.b16 %v661, %v660
        %v664 = vunpack.c.l.b16 %v522
        %v665 = vpack.c.b16 %v664, %v664
        %v666 = vrot.slane %v665, 1
        %v668 = vsel %vm553, %v662, 0
        %v671 = vsel %vm557, %v666, 0
        %673 = vmatprep.subr.bf16.mxu0 0
        %674 = vmatpush1.bf16.msra.mxu0 %v671
        %675 = vmatprep.subr.bf16.mxu0 0
        %676 = vmatpush1.bf16.msra.mxu0 0
        %677 = vmatprep.subr.bf16.mxu0 0
        %678 = vmatpush1.bf16.msra.mxu0 0
        %679 = vmatprep.subr.bf16.mxu0 0
        %680 = vmatpush1.bf16.msra.mxu0 0
        %681 = vmatprep.subr.bf16.mxu0 0
        %682 = vmatpush1.bf16.msra.mxu0 0
        %683 = vmatprep.subr.bf16.mxu0 0
        %684 = vmatpush1.bf16.msra.mxu0 0
        %685 = vmatprep.subr.bf16.mxu0 0
        %686 = vmatpush1.bf16.msra.mxu0 0
        %687 = vmatprep.subr.bf16.mxu0 0
        %688 = vmatpush1.bf16.msra.mxu0 0
        %689 = vmatprep.subr.bf16.mxu0 0
        %690 = vmatpush1.bf16.msra.mxu0 0
        %691 = vmatprep.subr.bf16.mxu0 0
        %692 = vmatpush1.bf16.msra.mxu0 0
        %693 = vmatprep.subr.bf16.mxu0 0
        %694 = vmatpush1.bf16.msra.mxu0 0
        %695 = vmatprep.subr.bf16.mxu0 0
        %696 = vmatpush1.bf16.msra.mxu0 0
        %697 = vmatprep.subr.bf16.mxu0 0
        %698 = vmatpush1.bf16.msra.mxu0 0
        %699 = vmatprep.subr.bf16.mxu0 0
        %700 = vmatpush1.bf16.msra.mxu0 0
        %701 = vmatprep.subr.bf16.mxu0 0
        %702 = vmatpush1.bf16.msra.mxu0 0
        %703 = vmatprep.subr.bf16.mxu0 0
        %704 = vmatpush1.bf16.msra.mxu0 0
        %705 = vmatprep.mubr.bf16.mxu0 0
        %706 = vmatmul.mubr.bf16.gmra.mrb[0].mxu0 %v668
        %v707 = vpop.f32.mrb[0].mxu0
        %v708 = vadd.f32 0.0, %v707
        %v709 = vpop.f32.mrb[0].mxu0
        %v710 = vpop.f32.mrb[0].mxu0
        %v711 = vadd.f32 0.0, %v710
        %v712 = vpop.f32.mrb[0].mxu0
        %713 = vdwg.mxu0
        %v716 = vunpack.c.l.b16 %v534
        %v717 = vunpack.c.l.b16 %v535
        %v718 = vpack.c.b16 %v717, %v716
        %v720 = vunpack.c.l.b16 %v523
        %v721 = vpack.c.b16 %v720, %v720
        %v722 = vrot.slane %v721, 1
        %v724 = vsel %vm553, %v718, 0
        %v727 = vsel %vm557, %v722, 0
        %729 = vmatprep.subr.bf16.mxu0 0
        %730 = vmatpush1.bf16.msra.mxu0 %v727
        %731 = vmatprep.subr.bf16.mxu0 0
        %732 = vmatpush1.bf16.msra.mxu0 0
        %733 = vmatprep.subr.bf16.mxu0 0
        %734 = vmatpush1.bf16.msra.mxu0 0
        %735 = vmatprep.subr.bf16.mxu0 0
        %736 = vmatpush1.bf16.msra.mxu0 0
        %737 = vmatprep.subr.bf16.mxu0 0
        %738 = vmatpush1.bf16.msra.mxu0 0
        %739 = vmatprep.subr.bf16.mxu0 0
        %740 = vmatpush1.bf16.msra.mxu0 0
        %741 = vmatprep.subr.bf16.mxu0 0
        %742 = vmatpush1.bf16.msra.mxu0 0
        %743 = vmatprep.subr.bf16.mxu0 0
        %744 = vmatpush1.bf16.msra.mxu0 0
        %745 = vmatprep.subr.bf16.mxu0 0
        %746 = vmatpush1.bf16.msra.mxu0 0
        %747 = vmatprep.subr.bf16.mxu0 0
        %748 = vmatpush1.bf16.msra.mxu0 0
        %749 = vmatprep.subr.bf16.mxu0 0
        %750 = vmatpush1.bf16.msra.mxu0 0
        %751 = vmatprep.subr.bf16.mxu0 0
        %752 = vmatpush1.bf16.msra.mxu0 0
        %753 = vmatprep.subr.bf16.mxu0 0
        %754 = vmatpush1.bf16.msra.mxu0 0
        %755 = vmatprep.subr.bf16.mxu0 0
        %756 = vmatpush1.bf16.msra.mxu0 0
        %757 = vmatprep.subr.bf16.mxu0 0
        %758 = vmatpush1.bf16.msra.mxu0 0
        %759 = vmatprep.subr.bf16.mxu0 0
        %760 = vmatpush1.bf16.msra.mxu0 0
        %761 = vmatprep.mubr.bf16.mxu0 0
        %762 = vmatmul.mubr.bf16.gmra.mrb[0].mxu0 %v724
        %v763 = vpop.f32.mrb[0].mxu0
        %v764 = vadd.f32 0.0, %v763
        %v765 = vpop.f32.mrb[0].mxu0
        %v766 = vpop.f32.mrb[0].mxu0
        %v767 = vadd.f32 0.0, %v766
        %v768 = vpop.f32.mrb[0].mxu0
        %769 = vdwg.mxu0
        %v772 = vunpack.c.l.b16 %v536
        %v773 = vunpack.c.l.b16 %v537
        %v774 = vpack.c.b16 %v773, %v772
        %v776 = vunpack.c.l.b16 %v524
        %v777 = vpack.c.b16 %v776, %v776
        %v778 = vrot.slane %v777, 1
        %v780 = vsel %vm553, %v774, 0
        %v783 = vsel %vm557, %v778, 0
        %785 = vmatprep.subr.bf16.mxu0 0
        %786 = vmatpush1.bf16.msra.mxu0 %v783
        %787 = vmatprep.subr.bf16.mxu0 0
        %788 = vmatpush1.bf16.msra.mxu0 0
        %789 = vmatprep.subr.bf16.mxu0 0
        %790 = vmatpush1.bf16.msra.mxu0 0
        %791 = vmatprep.subr.bf16.mxu0 0
        %792 = vmatpush1.bf16.msra.mxu0 0
        %793 = vmatprep.subr.bf16.mxu0 0
        %794 = vmatpush1.bf16.msra.mxu0 0
        %795 = vmatprep.subr.bf16.mxu0 0
        %796 = vmatpush1.bf16.msra.mxu0 0
        %797 = vmatprep.subr.bf16.mxu0 0
        %798 = vmatpush1.bf16.msra.mxu0 0
        %799 = vmatprep.subr.bf16.mxu0 0
        %800 = vmatpush1.bf16.msra.mxu0 0
        %801 = vmatprep.subr.bf16.mxu0 0
        %802 = vmatpush1.bf16.msra.mxu0 0
        %803 = vmatprep.subr.bf16.mxu0 0
        %804 = vmatpush1.bf16.msra.mxu0 0
        %805 = vmatprep.subr.bf16.mxu0 0
        %806 = vmatpush1.bf16.msra.mxu0 0
        %807 = vmatprep.subr.bf16.mxu0 0
        %808 = vmatpush1.bf16.msra.mxu0 0
        %809 = vmatprep.subr.bf16.mxu0 0
        %810 = vmatpush1.bf16.msra.mxu0 0
        %811 = vmatprep.subr.bf16.mxu0 0
        %812 = vmatpush1.bf16.msra.mxu0 0
        %813 = vmatprep.subr.bf16.mxu0 0
        %814 = vmatpush1.bf16.msra.mxu0 0
        %815 = vmatprep.subr.bf16.mxu0 0
        %816 = vmatpush1.bf16.msra.mxu0 0
        %817 = vmatprep.mubr.bf16.mxu0 0
        %818 = vmatmul.mubr.bf16.gmra.mrb[0].mxu0 %v780
        %v819 = vpop.f32.mrb[0].mxu0
        %v820 = vadd.f32 0.0, %v819
        %v821 = vpop.f32.mrb[0].mxu0
        %v822 = vpop.f32.mrb[0].mxu0
        %v823 = vadd.f32 0.0, %v822
        %v824 = vpop.f32.mrb[0].mxu0
        %825 = vdwg.mxu0
        %v828 = vunpack.c.l.b16 %v538
        %v829 = vunpack.c.l.b16 %v539
        %v830 = vpack.c.b16 %v829, %v828
        %v832 = vunpack.c.l.b16 %v525
        %v833 = vpack.c.b16 %v832, %v832
        %v834 = vrot.slane %v833, 1
        %v836 = vsel %vm553, %v830, 0
        %v839 = vsel %vm557, %v834, 0
        %841 = vmatprep.subr.bf16.mxu0 0
        %842 = vmatpush1.bf16.msra.mxu0 %v839
        %843 = vmatprep.subr.bf16.mxu0 0
        %844 = vmatpush1.bf16.msra.mxu0 0
        %845 = vmatprep.subr.bf16.mxu0 0
        %846 = vmatpush1.bf16.msra.mxu0 0
        %847 = vmatprep.subr.bf16.mxu0 0
        %848 = vmatpush1.bf16.msra.mxu0 0
        %849 = vmatprep.subr.bf16.mxu0 0
        %850 = vmatpush1.bf16.msra.mxu0 0
        %851 = vmatprep.subr.bf16.mxu0 0
        %852 = vmatpush1.bf16.msra.mxu0 0
        %853 = vmatprep.subr.bf16.mxu0 0
        %854 = vmatpush1.bf16.msra.mxu0 0
        %855 = vmatprep.subr.bf16.mxu0 0
        %856 = vmatpush1.bf16.msra.mxu0 0
        %857 = vmatprep.subr.bf16.mxu0 0
        %858 = vmatpush1.bf16.msra.mxu0 0
        %859 = vmatprep.subr.bf16.mxu0 0
        %860 = vmatpush1.bf16.msra.mxu0 0
        %861 = vmatprep.subr.bf16.mxu0 0
        %862 = vmatpush1.bf16.msra.mxu0 0
        %863 = vmatprep.subr.bf16.mxu0 0
        %864 = vmatpush1.bf16.msra.mxu0 0
        %865 = vmatprep.subr.bf16.mxu0 0
        %866 = vmatpush1.bf16.msra.mxu0 0
        %867 = vmatprep.subr.bf16.mxu0 0
        %868 = vmatpush1.bf16.msra.mxu0 0
        %869 = vmatprep.subr.bf16.mxu0 0
        %870 = vmatpush1.bf16.msra.mxu0 0
        %871 = vmatprep.subr.bf16.mxu0 0
        %872 = vmatpush1.bf16.msra.mxu0 0
        %873 = vmatprep.mubr.bf16.mxu0 0
        %874 = vmatmul.mubr.bf16.gmra.mrb[0].mxu0 %v836
        %v875 = vpop.f32.mrb[0].mxu0
        %v876 = vadd.f32 0.0, %v875
        %v877 = vpop.f32.mrb[0].mxu0
        %v878 = vpop.f32.mrb[0].mxu0
        %v879 = vadd.f32 0.0, %v878
        %v880 = vpop.f32.mrb[0].mxu0
        %881 = vdwg.mxu0
        %v884 = vunpack.c.l.b16 %v540
        %v885 = vunpack.c.l.b16 %v541
        %v886 = vpack.c.b16 %v885, %v884
        %v888 = vunpack.c.l.b16 %v526
        %v889 = vpack.c.b16 %v888, %v888
        %v890 = vrot.slane %v889, 1
        %v892 = vsel %vm553, %v886, 0
        %v895 = vsel %vm557, %v890, 0
        %897 = vmatprep.subr.bf16.mxu0 0
        %898 = vmatpush1.bf16.msra.mxu0 %v895
        %899 = vmatprep.subr.bf16.mxu0 0
        %900 = vmatpush1.bf16.msra.mxu0 0
        %901 = vmatprep.subr.bf16.mxu0 0
        %902 = vmatpush1.bf16.msra.mxu0 0
        %903 = vmatprep.subr.bf16.mxu0 0
        %904 = vmatpush1.bf16.msra.mxu0 0
        %905 = vmatprep.subr.bf16.mxu0 0
        %906 = vmatpush1.bf16.msra.mxu0 0
        %907 = vmatprep.subr.bf16.mxu0 0
        %908 = vmatpush1.bf16.msra.mxu0 0
        %909 = vmatprep.subr.bf16.mxu0 0
        %910 = vmatpush1.bf16.msra.mxu0 0
        %911 = vmatprep.subr.bf16.mxu0 0
        %912 = vmatpush1.bf16.msra.mxu0 0
        %913 = vmatprep.subr.bf16.mxu0 0
        %914 = vmatpush1.bf16.msra.mxu0 0
        %915 = vmatprep.subr.bf16.mxu0 0
        %916 = vmatpush1.bf16.msra.mxu0 0
        %917 = vmatprep.subr.bf16.mxu0 0
        %918 = vmatpush1.bf16.msra.mxu0 0
        %919 = vmatprep.subr.bf16.mxu0 0
        %920 = vmatpush1.bf16.msra.mxu0 0
        %921 = vmatprep.subr.bf16.mxu0 0
        %922 = vmatpush1.bf16.msra.mxu0 0
        %923 = vmatprep.subr.bf16.mxu0 0
        %924 = vmatpush1.bf16.msra.mxu0 0
        %925 = vmatprep.subr.bf16.mxu0 0
        %926 = vmatpush1.bf16.msra.mxu0 0
        %927 = vmatprep.subr.bf16.mxu0 0
        %928 = vmatpush1.bf16.msra.mxu0 0
        %929 = vmatprep.mubr.bf16.mxu0 0
        %930 = vmatmul.mubr.bf16.gmra.mrb[0].mxu0 %v892
        %v931 = vpop.f32.mrb[0].mxu0
        %v932 = vadd.f32 0.0, %v931
        %v933 = vpop.f32.mrb[0].mxu0
        %v934 = vpop.f32.mrb[0].mxu0
        %v935 = vadd.f32 0.0, %v934
        %v936 = vpop.f32.mrb[0].mxu0
        %937 = vdwg.mxu0
        %v940 = vunpack.c.l.b16 %v542
        %v941 = vunpack.c.l.b16 %v543
        %v942 = vpack.c.b16 %v941, %v940
        %v944 = vunpack.c.l.b16 %v527
        %v945 = vpack.c.b16 %v944, %v944
        %v946 = vrot.slane %v945, 1
        %v948 = vsel %vm553, %v942, 0
        %v951 = vsel %vm557, %v946, 0
        %953 = vmatprep.subr.bf16.mxu0 0
        %954 = vmatpush1.bf16.msra.mxu0 %v951
        %955 = vmatprep.subr.bf16.mxu0 0
        %956 = vmatpush1.bf16.msra.mxu0 0
        %957 = vmatprep.subr.bf16.mxu0 0
        %958 = vmatpush1.bf16.msra.mxu0 0
        %959 = vmatprep.subr.bf16.mxu0 0
        %960 = vmatpush1.bf16.msra.mxu0 0
        %961 = vmatprep.subr.bf16.mxu0 0
        %962 = vmatpush1.bf16.msra.mxu0 0
        %963 = vmatprep.subr.bf16.mxu0 0
        %964 = vmatpush1.bf16.msra.mxu0 0
        %965 = vmatprep.subr.bf16.mxu0 0
        %966 = vmatpush1.bf16.msra.mxu0 0
        %967 = vmatprep.subr.bf16.mxu0 0
        %968 = vmatpush1.bf16.msra.mxu0 0
        %969 = vmatprep.subr.bf16.mxu0 0
        %970 = vmatpush1.bf16.msra.mxu0 0
        %971 = vmatprep.subr.bf16.mxu0 0
        %972 = vmatpush1.bf16.msra.mxu0 0
        %973 = vmatprep.subr.bf16.mxu0 0
        %974 = vmatpush1.bf16.msra.mxu0 0
        %975 = vmatprep.subr.bf16.mxu0 0
        %976 = vmatpush1.bf16.msra.mxu0 0
        %977 = vmatprep.subr.bf16.mxu0 0
        %978 = vmatpush1.bf16.msra.mxu0 0
        %979 = vmatprep.subr.bf16.mxu0 0
        %980 = vmatpush1.bf16.msra.mxu0 0
        %981 = vmatprep.subr.bf16.mxu0 0
        %982 = vmatpush1.bf16.msra.mxu0 0
        %983 = vmatprep.subr.bf16.mxu0 0
        %984 = vmatpush1.bf16.msra.mxu0 0
        %985 = vmatprep.mubr.bf16.mxu0 0
        %986 = vmatmul.mubr.bf16.gmra.mrb[0].mxu0 %v948
        %v987 = vpop.f32.mrb[0].mxu0
        %v988 = vadd.f32 0.0, %v987
        %v989 = vpop.f32.mrb[0].mxu0
        %v990 = vpop.f32.mrb[0].mxu0
        %v991 = vadd.f32 0.0, %v990
        %v992 = vpop.f32.mrb[0].mxu0
        %993 = vdwg.mxu0
        %v994 = vld [vmem:[#allocation12] sm:$0xff]
        %v995 = vld [vmem:[#allocation12 + $0x8] sm:$0xff]
        %v996 = vunpack.c.l.bf16 %v528
        %v997 = vunpack.c.l.bf16 %v529
        %v998 = vunpack.c.l.bf16 %v530
        %v999 = vunpack.c.l.bf16 %v531
        %v1000 = vunpack.c.l.bf16 %v532
        %v1001 = vunpack.c.l.bf16 %v533
        %v1002 = vunpack.c.l.bf16 %v534
        %v1003 = vunpack.c.l.bf16 %v535
        %v1004 = vunpack.c.l.bf16 %v536
        %v1005 = vunpack.c.l.bf16 %v537
        %v1006 = vunpack.c.l.bf16 %v538
        %v1007 = vunpack.c.l.bf16 %v539
        %v1008 = vunpack.c.l.bf16 %v540
        %v1009 = vunpack.c.l.bf16 %v541
        %v1010 = vunpack.c.l.bf16 %v542
        %v1011 = vunpack.c.l.bf16 %v543
        %1013 = vset.pattern.permute.xlu0 0
        %1014 = vperm.xlu0 %1013, %v996
        %v1015 = vpop.permute.xlu0 %1014
        %1018 = vset.pattern.permute.xlu0 0
        %1019 = vperm.xlu0 %1018, %v997
        %v1020 = vpop.permute.xlu0 %1019
        %1023 = vset.pattern.permute.xlu0 0
        %1024 = vperm.xlu0 %1023, %v998
        %v1025 = vpop.permute.xlu0 %1024
        %1028 = vset.pattern.permute.xlu0 0
        %1029 = vperm.xlu0 %1028, %v999
        %v1030 = vpop.permute.xlu0 %1029
        %1033 = vset.pattern.permute.xlu0 0
        %1034 = vperm.xlu0 %1033, %v1000
        %v1035 = vpop.permute.xlu0 %1034
        %1038 = vset.pattern.permute.xlu0 0
        %1039 = vperm.xlu0 %1038, %v1001
        %v1040 = vpop.permute.xlu0 %1039
        %1043 = vset.pattern.permute.xlu0 0
        %1044 = vperm.xlu0 %1043, %v1002
        %v1045 = vpop.permute.xlu0 %1044
        %1048 = vset.pattern.permute.xlu0 0
        %1049 = vperm.xlu0 %1048, %v1003
        %v1050 = vpop.permute.xlu0 %1049
        %1053 = vset.pattern.permute.xlu0 0
        %1054 = vperm.xlu0 %1053, %v1004
        %v1055 = vpop.permute.xlu0 %1054
        %1058 = vset.pattern.permute.xlu0 0
        %1059 = vperm.xlu0 %1058, %v1005
        %v1060 = vpop.permute.xlu0 %1059
        %1063 = vset.pattern.permute.xlu0 0
        %1064 = vperm.xlu0 %1063, %v1006
        %v1065 = vpop.permute.xlu0 %1064
        %1068 = vset.pattern.permute.xlu0 0
        %1069 = vperm.xlu0 %1068, %v1007
        %v1070 = vpop.permute.xlu0 %1069
        %1073 = vset.pattern.permute.xlu0 0
        %1074 = vperm.xlu0 %1073, %v1008
        %v1075 = vpop.permute.xlu0 %1074
        %1078 = vset.pattern.permute.xlu0 0
        %1079 = vperm.xlu0 %1078, %v1009
        %v1080 = vpop.permute.xlu0 %1079
        %1083 = vset.pattern.permute.xlu0 0
        %1084 = vperm.xlu0 %1083, %v1010
        %v1085 = vpop.permute.xlu0 %1084
        %1088 = vset.pattern.permute.xlu0 0
        %1089 = vperm.xlu0 %1088, %v1011
        %v1090 = vpop.permute.xlu0 %1089
        %v1092 = vmul.f32 %v1015, %v994
        %v1093 = vmul.f32 %v1020, %v995
        %v1094 = vmul.f32 %v1025, %v994
        %v1095 = vmul.f32 %v1030, %v995
        %v1096 = vmul.f32 %v1035, %v994
        %v1097 = vmul.f32 %v1040, %v995
        %v1098 = vmul.f32 %v1045, %v994
        %v1099 = vmul.f32 %v1050, %v995
        %v1100 = vmul.f32 %v1055, %v994
        %v1101 = vmul.f32 %v1060, %v995
        %v1102 = vmul.f32 %v1065, %v994
        %v1103 = vmul.f32 %v1070, %v995
        %v1104 = vmul.f32 %v1075, %v994
        %v1105 = vmul.f32 %v1080, %v995
        %v1106 = vmul.f32 %v1085, %v994
        %v1107 = vmul.f32 %v1090, %v995
        %v1108 = vld [vmem:[#allocation13] sm:$0xff]
        %v1109 = vld [vmem:[#allocation13 + $0x8] sm:$0xff]
        %v1110 = vunpack.c.l.bf16 %v520
        %v1111 = vunpack.c.l.bf16 %v521
        %v1112 = vunpack.c.l.bf16 %v522
        %v1113 = vunpack.c.l.bf16 %v523
        %v1114 = vunpack.c.l.bf16 %v524
        %v1115 = vunpack.c.l.bf16 %v525
        %v1116 = vunpack.c.l.bf16 %v526
        %v1117 = vunpack.c.l.bf16 %v527
        %v1118 = vlaneseq
        %v1119 = vshrl.u32 %v1118, 7
        %v1120 = vsub.s32 2, %v1119
        %v1121 = vrot.slane %v1110, %v1120
        %v1122 = vlaneseq
        %v1123 = vshrl.u32 %v1122, 7
        %v1124 = vsub.s32 2, %v1123
        %v1125 = vrot.slane %v1111, %v1124
        %v1126 = vlaneseq
        %v1127 = vshrl.u32 %v1126, 7
        %v1128 = vsub.s32 2, %v1127
        %v1129 = vrot.slane %v1112, %v1128
        %v1130 = vlaneseq
        %v1131 = vshrl.u32 %v1130, 7
        %v1132 = vsub.s32 2, %v1131
        %v1133 = vrot.slane %v1113, %v1132
        %v1134 = vlaneseq
        %v1135 = vshrl.u32 %v1134, 7
        %v1136 = vsub.s32 2, %v1135
        %v1137 = vrot.slane %v1114, %v1136
        %v1138 = vlaneseq
        %v1139 = vshrl.u32 %v1138, 7
        %v1140 = vsub.s32 2, %v1139
        %v1141 = vrot.slane %v1115, %v1140
        %v1142 = vlaneseq
        %v1143 = vshrl.u32 %v1142, 7
        %v1144 = vsub.s32 2, %v1143
        %v1145 = vrot.slane %v1116, %v1144
        %v1146 = vlaneseq
        %v1147 = vshrl.u32 %v1146, 7
        %v1148 = vsub.s32 2, %v1147
        %v1149 = vrot.slane %v1117, %v1148
        %v1150 = vmul.f32 %v1121, %v1108
        %v1151 = vmul.f32 %v1121, %v1109
        %v1152 = vmul.f32 %v1125, %v1108
        %v1153 = vmul.f32 %v1125, %v1109
        %v1154 = vmul.f32 %v1129, %v1108
        %v1155 = vmul.f32 %v1129, %v1109
        %v1156 = vmul.f32 %v1133, %v1108
        %v1157 = vmul.f32 %v1133, %v1109
        %v1158 = vmul.f32 %v1137, %v1108
        %v1159 = vmul.f32 %v1137, %v1109
        %v1160 = vmul.f32 %v1141, %v1108
        %v1161 = vmul.f32 %v1141, %v1109
        %v1162 = vmul.f32 %v1145, %v1108
        %v1163 = vmul.f32 %v1145, %v1109
        %v1164 = vmul.f32 %v1149, %v1108
        %v1165 = vmul.f32 %v1149, %v1109
        %s1166 = scalar_lea.vmem [#allocation12], 16
        %v1167 = vld [vmem:[%s1166] sm:$0xff]
        %v1168 = vld [vmem:[%s1166 + $0x8] sm:$0xff]
        %1169 = vset.pattern.permute.xlu0 1
        %1170 = vperm.xlu0 %1169, %v996
        %v1171 = vpop.permute.xlu0 %1170
        %1173 = vset.pattern.permute.xlu0 1
        %1174 = vperm.xlu0 %1173, %v997
        %v1175 = vpop.permute.xlu0 %1174
        %1177 = vset.pattern.permute.xlu0 1
        %1178 = vperm.xlu0 %1177, %v998
        %v1179 = vpop.permute.xlu0 %1178
        %1181 = vset.pattern.permute.xlu0 1
        %1182 = vperm.xlu0 %1181, %v999
        %v1183 = vpop.permute.xlu0 %1182
        %1185 = vset.pattern.permute.xlu0 1
        %1186 = vperm.xlu0 %1185, %v1000
        %v1187 = vpop.permute.xlu0 %1186
        %1189 = vset.pattern.permute.xlu0 1
        %1190 = vperm.xlu0 %1189, %v1001
        %v1191 = vpop.permute.xlu0 %1190
        %1193 = vset.pattern.permute.xlu0 1
        %1194 = vperm.xlu0 %1193, %v1002
        %v1195 = vpop.permute.xlu0 %1194
        %1197 = vset.pattern.permute.xlu0 1
        %1198 = vperm.xlu0 %1197, %v1003
        %v1199 = vpop.permute.xlu0 %1198
        %1201 = vset.pattern.permute.xlu0 1
        %1202 = vperm.xlu0 %1201, %v1004
        %v1203 = vpop.permute.xlu0 %1202
        %1205 = vset.pattern.permute.xlu0 1
        %1206 = vperm.xlu0 %1205, %v1005
        %v1207 = vpop.permute.xlu0 %1206
        %1209 = vset.pattern.permute.xlu0 1
        %1210 = vperm.xlu0 %1209, %v1006
        %v1211 = vpop.permute.xlu0 %1210
        %1213 = vset.pattern.permute.xlu0 1
        %1214 = vperm.xlu0 %1213, %v1007
        %v1215 = vpop.permute.xlu0 %1214
        %1217 = vset.pattern.permute.xlu0 1
        %1218 = vperm.xlu0 %1217, %v1008
        %v1219 = vpop.permute.xlu0 %1218
        %1221 = vset.pattern.permute.xlu0 1
        %1222 = vperm.xlu0 %1221, %v1009
        %v1223 = vpop.permute.xlu0 %1222
        %1225 = vset.pattern.permute.xlu0 1
        %1226 = vperm.xlu0 %1225, %v1010
        %v1227 = vpop.permute.xlu0 %1226
        %1229 = vset.pattern.permute.xlu0 1
        %1230 = vperm.xlu0 %1229, %v1011
        %v1231 = vpop.permute.xlu0 %1230
        %v1233 = vmul.f32 %v1171, %v1167
        %v1234 = vmul.f32 %v1175, %v1168
        %v1235 = vmul.f32 %v1179, %v1167
        %v1236 = vmul.f32 %v1183, %v1168
        %v1237 = vmul.f32 %v1187, %v1167
        %v1238 = vmul.f32 %v1191, %v1168
        %v1239 = vmul.f32 %v1195, %v1167
        %v1240 = vmul.f32 %v1199, %v1168
        %v1241 = vmul.f32 %v1203, %v1167
        %v1242 = vmul.f32 %v1207, %v1168
        %v1243 = vmul.f32 %v1211, %v1167
        %v1244 = vmul.f32 %v1215, %v1168
        %v1245 = vmul.f32 %v1219, %v1167
        %v1246 = vmul.f32 %v1223, %v1168
        %v1247 = vmul.f32 %v1227, %v1167
        %v1248 = vmul.f32 %v1231, %v1168
        %v1249 = vadd.f32 %v1092, %v1233
        %v1250 = vadd.f32 %v1093, %v1234
        %v1251 = vadd.f32 %v1094, %v1235
        %v1252 = vadd.f32 %v1095, %v1236
        %v1253 = vadd.f32 %v1096, %v1237
        %v1254 = vadd.f32 %v1097, %v1238
        %v1255 = vadd.f32 %v1098, %v1239
        %v1256 = vadd.f32 %v1099, %v1240
        %v1257 = vadd.f32 %v1100, %v1241
        %v1258 = vadd.f32 %v1101, %v1242
        %v1259 = vadd.f32 %v1102, %v1243
        %v1260 = vadd.f32 %v1103, %v1244
        %v1261 = vadd.f32 %v1104, %v1245
        %v1262 = vadd.f32 %v1105, %v1246
        %v1263 = vadd.f32 %v1106, %v1247
        %v1264 = vadd.f32 %v1107, %v1248
        %s1265 = scalar_lea.vmem [#allocation13], 16
        %v1266 = vld [vmem:[%s1265] sm:$0xff]
        %v1267 = vld [vmem:[%s1265 + $0x8] sm:$0xff]
        %v1268 = vlaneseq
        %v1269 = vshrl.u32 %v1268, 7
        %v1270 = vsub.s32 3, %v1269
        %v1271 = vrot.slane %v1110, %v1270
        %v1272 = vlaneseq
        %v1273 = vshrl.u32 %v1272, 7
        %v1274 = vsub.s32 3, %v1273
        %v1275 = vrot.slane %v1111, %v1274
        %v1276 = vlaneseq
        %v1277 = vshrl.u32 %v1276, 7
        %v1278 = vsub.s32 3, %v1277
        %v1279 = vrot.slane %v1112, %v1278
        %v1280 = vlaneseq
        %v1281 = vshrl.u32 %v1280, 7
        %v1282 = vsub.s32 3, %v1281
        %v1283 = vrot.slane %v1113, %v1282
        %v1284 = vlaneseq
        %v1285 = vshrl.u32 %v1284, 7
        %v1286 = vsub.s32 3, %v1285
        %v1287 = vrot.slane %v1114, %v1286
        %v1288 = vlaneseq
        %v1289 = vshrl.u32 %v1288, 7
        %v1290 = vsub.s32 3, %v1289
        %v1291 = vrot.slane %v1115, %v1290
        %v1292 = vlaneseq
        %v1293 = vshrl.u32 %v1292, 7
        %v1294 = vsub.s32 3, %v1293
        %v1295 = vrot.slane %v1116, %v1294
        %v1296 = vlaneseq
        %v1297 = vshrl.u32 %v1296, 7
        %v1298 = vsub.s32 3, %v1297
        %v1299 = vrot.slane %v1117, %v1298
        %v1300 = vmul.f32 %v1271, %v1266
        %v1301 = vmul.f32 %v1271, %v1267
        %v1302 = vmul.f32 %v1275, %v1266
        %v1303 = vmul.f32 %v1275, %v1267
        %v1304 = vmul.f32 %v1279, %v1266
        %v1305 = vmul.f32 %v1279, %v1267
        %v1306 = vmul.f32 %v1283, %v1266
        %v1307 = vmul.f32 %v1283, %v1267
        %v1308 = vmul.f32 %v1287, %v1266
        %v1309 = vmul.f32 %v1287, %v1267
        %v1310 = vmul.f32 %v1291, %v1266
        %v1311 = vmul.f32 %v1291, %v1267
        %v1312 = vmul.f32 %v1295, %v1266
        %v1313 = vmul.f32 %v1295, %v1267
        %v1314 = vmul.f32 %v1299, %v1266
        %v1315 = vmul.f32 %v1299, %v1267
        %v1316 = vadd.f32 %v1150, %v1300
        %v1317 = vadd.f32 %v1151, %v1301
        %v1318 = vadd.f32 %v1152, %v1302
        %v1319 = vadd.f32 %v1153, %v1303
        %v1320 = vadd.f32 %v1154, %v1304
        %v1321 = vadd.f32 %v1155, %v1305
        %v1322 = vadd.f32 %v1156, %v1306
        %v1323 = vadd.f32 %v1157, %v1307
        %v1324 = vadd.f32 %v1158, %v1308
        %v1325 = vadd.f32 %v1159, %v1309
        %v1326 = vadd.f32 %v1160, %v1310
        %v1327 = vadd.f32 %v1161, %v1311
        %v1328 = vadd.f32 %v1162, %v1312
        %v1329 = vadd.f32 %v1163, %v1313
        %v1330 = vadd.f32 %v1164, %v1314
        %v1331 = vadd.f32 %v1165, %v1315
        %s1332 = sld [smem:[#allocation2]]
        %v1333 = vstv %s1332
        %v1334 = vmul.f32 %v596, %v1333
        %v1335 = vmul.f32 %v599, %v1333
        %v1336 = vmul.f32 %v652, %v1333
        %v1337 = vmul.f32 %v655, %v1333
        %v1338 = vmul.f32 %v708, %v1333
        %v1339 = vmul.f32 %v711, %v1333
        %v1340 = vmul.f32 %v764, %v1333
        %v1341 = vmul.f32 %v767, %v1333
        %v1342 = vmul.f32 %v820, %v1333
        %v1343 = vmul.f32 %v823, %v1333
        %v1344 = vmul.f32 %v876, %v1333
        %v1345 = vmul.f32 %v879, %v1333
        %v1346 = vmul.f32 %v932, %v1333
        %v1347 = vmul.f32 %v935, %v1333
        %v1348 = vmul.f32 %v988, %v1333
        %v1349 = vmul.f32 %v991, %v1333
        %s1350 = sld [smem:[#allocation3]]
        %v1351 = vstv %s1350
        %v1352 = vmul.f32 %v1249, %v1351
        %v1353 = vmul.f32 %v1250, %v1351
        %v1354 = vmul.f32 %v1251, %v1351
        %v1355 = vmul.f32 %v1252, %v1351
        %v1356 = vmul.f32 %v1253, %v1351
        %v1357 = vmul.f32 %v1254, %v1351
        %v1358 = vmul.f32 %v1255, %v1351
        %v1359 = vmul.f32 %v1256, %v1351
        %v1360 = vmul.f32 %v1257, %v1351
        %v1361 = vmul.f32 %v1258, %v1351
        %v1362 = vmul.f32 %v1259, %v1351
        %v1363 = vmul.f32 %v1260, %v1351
        %v1364 = vmul.f32 %v1261, %v1351
        %v1365 = vmul.f32 %v1262, %v1351
        %v1366 = vmul.f32 %v1263, %v1351
        %v1367 = vmul.f32 %v1264, %v1351
        %v1368 = vadd.f32 %v1334, %v1352
        %v1369 = vadd.f32 %v1335, %v1353
        %v1370 = vadd.f32 %v1336, %v1354
        %v1371 = vadd.f32 %v1337, %v1355
        %v1372 = vadd.f32 %v1338, %v1356
        %v1373 = vadd.f32 %v1339, %v1357
        %v1374 = vadd.f32 %v1340, %v1358
        %v1375 = vadd.f32 %v1341, %v1359
        %v1376 = vadd.f32 %v1342, %v1360
        %v1377 = vadd.f32 %v1343, %v1361
        %v1378 = vadd.f32 %v1344, %v1362
        %v1379 = vadd.f32 %v1345, %v1363
        %v1380 = vadd.f32 %v1346, %v1364
        %v1381 = vadd.f32 %v1347, %v1365
        %v1382 = vadd.f32 %v1348, %v1366
        %v1383 = vadd.f32 %v1349, %v1367
        %s1384 = sld [smem:[#allocation4]]
        %v1385 = vstv %s1384
        %v1386 = vmul.f32 %v1316, %v1385
        %v1387 = vmul.f32 %v1317, %v1385
        %v1388 = vmul.f32 %v1318, %v1385
        %v1389 = vmul.f32 %v1319, %v1385
        %v1390 = vmul.f32 %v1320, %v1385
        %v1391 = vmul.f32 %v1321, %v1385
        %v1392 = vmul.f32 %v1322, %v1385
        %v1393 = vmul.f32 %v1323, %v1385
        %v1394 = vmul.f32 %v1324, %v1385
        %v1395 = vmul.f32 %v1325, %v1385
        %v1396 = vmul.f32 %v1326, %v1385
        %v1397 = vmul.f32 %v1327, %v1385
        %v1398 = vmul.f32 %v1328, %v1385
        %v1399 = vmul.f32 %v1329, %v1385
        %v1400 = vmul.f32 %v1330, %v1385
        %v1401 = vmul.f32 %v1331, %v1385
        %v1402 = vadd.f32 %v1368, %v1386
        %v1403 = vadd.f32 %v1369, %v1387
        %v1404 = vadd.f32 %v1370, %v1388
        %v1405 = vadd.f32 %v1371, %v1389
        %v1406 = vadd.f32 %v1372, %v1390
        %v1407 = vadd.f32 %v1373, %v1391
        %v1408 = vadd.f32 %v1374, %v1392
        %v1409 = vadd.f32 %v1375, %v1393
        %v1410 = vadd.f32 %v1376, %v1394
        %v1411 = vadd.f32 %v1377, %v1395
        %v1412 = vadd.f32 %v1378, %v1396
        %v1413 = vadd.f32 %v1379, %v1397
        %v1414 = vadd.f32 %v1380, %v1398
        %v1415 = vadd.f32 %v1381, %v1399
        %v1416 = vadd.f32 %v1382, %v1400
        %v1417 = vadd.f32 %v1383, %v1401
        %s1418 = sld [smem:[#allocation5]]
        %v1419 = vstv %s1418
        %v1420 = vadd.f32 %v1402, %v1419
        %v1421 = vadd.f32 %v1403, %v1419
        %v1422 = vadd.f32 %v1404, %v1419
        %v1423 = vadd.f32 %v1405, %v1419
        %v1424 = vadd.f32 %v1406, %v1419
        %v1425 = vadd.f32 %v1407, %v1419
        %v1426 = vadd.f32 %v1408, %v1419
        %v1427 = vadd.f32 %v1409, %v1419
        %v1428 = vadd.f32 %v1410, %v1419
        %v1429 = vadd.f32 %v1411, %v1419
        %v1430 = vadd.f32 %v1412, %v1419
        %v1431 = vadd.f32 %v1413, %v1419
        %v1432 = vadd.f32 %v1414, %v1419
        %v1433 = vadd.f32 %v1415, %v1419
        %v1434 = vadd.f32 %v1416, %v1419
        %v1435 = vadd.f32 %v1417, %v1419
        %vm1436 = vcmask 130048
        %v1437 = vsel %vm1436, %v1420, -inf
        %1438 = vmax.xlane.f32.xlu0 %v1437
        %v1439 = vpop.xlane.xlu0 %1438
        %v1440 = vsel %vm1436, %v1421, -inf
        %1441 = vmax.xlane.f32.xlu0 %v1440
        %v1442 = vpop.xlane.xlu0 %1441
        %v1443 = vsel %vm1436, %v1422, -inf
        %1444 = vmax.xlane.f32.xlu0 %v1443
        %v1445 = vpop.xlane.xlu0 %1444
        %v1446 = vsel %vm1436, %v1423, -inf
        %1447 = vmax.xlane.f32.xlu0 %v1446
        %v1448 = vpop.xlane.xlu0 %1447
        %v1449 = vsel %vm1436, %v1424, -inf
        %1450 = vmax.xlane.f32.xlu0 %v1449
        %v1451 = vpop.xlane.xlu0 %1450
        %v1452 = vsel %vm1436, %v1425, -inf
        %1453 = vmax.xlane.f32.xlu0 %v1452
        %v1454 = vpop.xlane.xlu0 %1453
        %v1455 = vsel %vm1436, %v1426, -inf
        %1456 = vmax.xlane.f32.xlu0 %v1455
        %v1457 = vpop.xlane.xlu0 %1456
        %v1458 = vsel %vm1436, %v1427, -inf
        %1459 = vmax.xlane.f32.xlu0 %v1458
        %v1460 = vpop.xlane.xlu0 %1459
        %v1461 = vsel %vm1436, %v1428, -inf
        %1462 = vmax.xlane.f32.xlu0 %v1461
        %v1463 = vpop.xlane.xlu0 %1462
        %v1464 = vsel %vm1436, %v1429, -inf
        %1465 = vmax.xlane.f32.xlu0 %v1464
        %v1466 = vpop.xlane.xlu0 %1465
        %v1467 = vsel %vm1436, %v1430, -inf
        %1468 = vmax.xlane.f32.xlu0 %v1467
        %v1469 = vpop.xlane.xlu0 %1468
        %v1470 = vsel %vm1436, %v1431, -inf
        %1471 = vmax.xlane.f32.xlu0 %v1470
        %v1472 = vpop.xlane.xlu0 %1471
        %v1473 = vsel %vm1436, %v1432, -inf
        %1474 = vmax.xlane.f32.xlu0 %v1473
        %v1475 = vpop.xlane.xlu0 %1474
        %v1476 = vsel %vm1436, %v1433, -inf
        %1477 = vmax.xlane.f32.xlu0 %v1476
        %v1478 = vpop.xlane.xlu0 %1477
        %v1479 = vsel %vm1436, %v1434, -inf
        %1480 = vmax.xlane.f32.xlu0 %v1479
        %v1481 = vpop.xlane.xlu0 %1480
        %v1482 = vsel %vm1436, %v1435, -inf
        %1483 = vmax.xlane.f32.xlu0 %v1482
        %v1484 = vpop.xlane.xlu0 %1483
        %v1485 = vsub.f32 %v1420, %v1439
        %v1486 = vsub.f32 %v1421, %v1442
        %v1487 = vsub.f32 %v1422, %v1445
        %v1488 = vsub.f32 %v1423, %v1448
        %v1489 = vsub.f32 %v1424, %v1451
        %v1490 = vsub.f32 %v1425, %v1454
        %v1491 = vsub.f32 %v1426, %v1457
        %v1492 = vsub.f32 %v1427, %v1460
        %v1493 = vsub.f32 %v1428, %v1463
        %v1494 = vsub.f32 %v1429, %v1466
        %v1495 = vsub.f32 %v1430, %v1469
        %v1496 = vsub.f32 %v1431, %v1472
        %v1497 = vsub.f32 %v1432, %v1475
        %v1498 = vsub.f32 %v1433, %v1478
        %v1499 = vsub.f32 %v1434, %v1481
        %v1500 = vsub.f32 %v1435, %v1484
        %v1501 = vmul.f32 %v1485, 1.442695
        %v1502 = vpow.pop %v1501
        %v1503 = vmul.f32 %v1486, 1.442695
        %v1504 = vpow.pop %v1503
        %v1505 = vmul.f32 %v1487, 1.442695
        %v1506 = vpow.pop %v1505
        %v1507 = vmul.f32 %v1488, 1.442695
        %v1508 = vpow.pop %v1507
        %v1509 = vmul.f32 %v1489, 1.442695
        %v1510 = vpow.pop %v1509
        %v1511 = vmul.f32 %v1490, 1.442695
        %v1512 = vpow.pop %v1511
        %v1513 = vmul.f32 %v1491, 1.442695
        %v1514 = vpow.pop %v1513
        %v1515 = vmul.f32 %v1492, 1.442695
        %v1516 = vpow.pop %v1515
        %v1517 = vmul.f32 %v1493, 1.442695
        %v1518 = vpow.pop %v1517
        %v1519 = vmul.f32 %v1494, 1.442695
        %v1520 = vpow.pop %v1519
        %v1521 = vmul.f32 %v1495, 1.442695
        %v1522 = vpow.pop %v1521
        %v1523 = vmul.f32 %v1496, 1.442695
        %v1524 = vpow.pop %v1523
        %v1525 = vmul.f32 %v1497, 1.442695
        %v1526 = vpow.pop %v1525
        %v1527 = vmul.f32 %v1498, 1.442695
        %v1528 = vpow.pop %v1527
        %v1529 = vmul.f32 %v1499, 1.442695
        %v1530 = vpow.pop %v1529
        %v1531 = vmul.f32 %v1500, 1.442695
        %v1532 = vpow.pop %v1531
        %v1533 = vsel %vm1436, %v1502, 0.0
        %1534 = vadd.xlane.f32.xlu0 %v1533
        %v1535 = vpop.xlane.xlu0 %1534
        %v1536 = vsel %vm1436, %v1504, 0.0
        %1537 = vadd.xlane.f32.xlu0 %v1536
        %v1538 = vpop.xlane.xlu0 %1537
        %v1539 = vsel %vm1436, %v1506, 0.0
        %1540 = vadd.xlane.f32.xlu0 %v1539
        %v1541 = vpop.xlane.xlu0 %1540
        %v1542 = vsel %vm1436, %v1508, 0.0
        %1543 = vadd.xlane.f32.xlu0 %v1542
        %v1544 = vpop.xlane.xlu0 %1543
        %v1545 = vsel %vm1436, %v1510, 0.0
        %1546 = vadd.xlane.f32.xlu0 %v1545
        %v1547 = vpop.xlane.xlu0 %1546
        %v1548 = vsel %vm1436, %v1512, 0.0
        %1549 = vadd.xlane.f32.xlu0 %v1548
        %v1550 = vpop.xlane.xlu0 %1549
        %v1551 = vsel %vm1436, %v1514, 0.0
        %1552 = vadd.xlane.f32.xlu0 %v1551
        %v1553 = vpop.xlane.xlu0 %1552
        %v1554 = vsel %vm1436, %v1516, 0.0
        %1555 = vadd.xlane.f32.xlu0 %v1554
        %v1556 = vpop.xlane.xlu0 %1555
        %v1557 = vsel %vm1436, %v1518, 0.0
        %1558 = vadd.xlane.f32.xlu0 %v1557
        %v1559 = vpop.xlane.xlu0 %1558
        %v1560 = vsel %vm1436, %v1520, 0.0
        %1561 = vadd.xlane.f32.xlu0 %v1560
        %v1562 = vpop.xlane.xlu0 %1561
        %v1563 = vsel %vm1436, %v1522, 0.0
        %1564 = vadd.xlane.f32.xlu0 %v1563
        %v1565 = vpop.xlane.xlu0 %1564
        %v1566 = vsel %vm1436, %v1524, 0.0
        %1567 = vadd.xlane.f32.xlu0 %v1566
        %v1568 = vpop.xlane.xlu0 %1567
        %v1569 = vsel %vm1436, %v1526, 0.0
        %1570 = vadd.xlane.f32.xlu0 %v1569
        %v1571 = vpop.xlane.xlu0 %1570
        %v1572 = vsel %vm1436, %v1528, 0.0
        %1573 = vadd.xlane.f32.xlu0 %v1572
        %v1574 = vpop.xlane.xlu0 %1573
        %v1575 = vsel %vm1436, %v1530, 0.0
        %1576 = vadd.xlane.f32.xlu0 %v1575
        %v1577 = vpop.xlane.xlu0 %1576
        %v1578 = vsel %vm1436, %v1532, 0.0
        %1579 = vadd.xlane.f32.xlu0 %v1578
        %v1580 = vpop.xlane.xlu0 %1579
        %v1581 = vrcp.pop %v1535
        %v1582 = vrcp.pop %v1538
        %v1583 = vrcp.pop %v1541
        %v1584 = vrcp.pop %v1544
        %v1585 = vrcp.pop %v1547
        %v1586 = vrcp.pop %v1550
        %v1587 = vrcp.pop %v1553
        %v1588 = vrcp.pop %v1556
        %v1589 = vrcp.pop %v1559
        %v1590 = vrcp.pop %v1562
        %v1591 = vrcp.pop %v1565
        %v1592 = vrcp.pop %v1568
        %v1593 = vrcp.pop %v1571
        %v1594 = vrcp.pop %v1574
        %v1595 = vrcp.pop %v1577
        %v1596 = vrcp.pop %v1580
        %v1597 = vmul.f32 %v1502, %v1581
        %v1598 = vmul.f32 %v1504, %v1582
        %v1599 = vmul.f32 %v1506, %v1583
        %v1600 = vmul.f32 %v1508, %v1584
        %v1601 = vmul.f32 %v1510, %v1585
        %v1602 = vmul.f32 %v1512, %v1586
        %v1603 = vmul.f32 %v1514, %v1587
        %v1604 = vmul.f32 %v1516, %v1588
        %v1605 = vmul.f32 %v1518, %v1589
        %v1606 = vmul.f32 %v1520, %v1590
        %v1607 = vmul.f32 %v1522, %v1591
        %v1608 = vmul.f32 %v1524, %v1592
        %v1609 = vmul.f32 %v1526, %v1593
        %v1610 = vmul.f32 %v1528, %v1594
        %v1611 = vmul.f32 %v1530, %v1595
        %v1612 = vmul.f32 %v1532, %v1596
        %v1613 = vpack.c.bf16 %v1598, %v1597
        %v1614 = vpack.c.bf16 %v1600, %v1599
        %v1615 = vpack.c.bf16 %v1602, %v1601
        %v1616 = vpack.c.bf16 %v1604, %v1603
        %v1617 = vpack.c.bf16 %v1606, %v1605
        %v1618 = vpack.c.bf16 %v1608, %v1607
        %v1619 = vpack.c.bf16 %v1610, %v1609
        %v1620 = vpack.c.bf16 %v1612, %v1611
        %v1621 = vld [vmem:[#allocation15] sm:$0xff]
        %v1622 = vld [vmem:[#allocation15 + $0x8] sm:$0xff]
        %v1623 = vmul.f32 %v1597, %v1621
        %v1624 = vmul.f32 %v1598, %v1622
        %v1625 = vmul.f32 %v1599, %v1621
        %v1626 = vmul.f32 %v1600, %v1622
        %v1627 = vmul.f32 %v1601, %v1621
        %v1628 = vmul.f32 %v1602, %v1622
        %v1629 = vmul.f32 %v1603, %v1621
        %v1630 = vmul.f32 %v1604, %v1622
        %v1631 = vmul.f32 %v1605, %v1621
        %v1632 = vmul.f32 %v1606, %v1622
        %v1633 = vmul.f32 %v1607, %v1621
        %v1634 = vmul.f32 %v1608, %v1622
        %v1635 = vmul.f32 %v1609, %v1621
        %v1636 = vmul.f32 %v1610, %v1622
        %v1637 = vmul.f32 %v1611, %v1621
        %v1638 = vmul.f32 %v1612, %v1622
        %v1639 = vsel %vm1436, %v1623, 0.0
        %1640 = vadd.xlane.f32.xlu0 %v1639
        %v1641 = vpop.xlane.xlu0 %1640
        %v1642 = vsel %vm1436, %v1624, 0.0
        %1643 = vadd.xlane.f32.xlu0 %v1642
        %v1644 = vpop.xlane.xlu0 %1643
        %v1645 = vsel %vm1436, %v1625, 0.0
        %1646 = vadd.xlane.f32.xlu0 %v1645
        %v1647 = vpop.xlane.xlu0 %1646
        %v1648 = vsel %vm1436, %v1626, 0.0
        %1649 = vadd.xlane.f32.xlu0 %v1648
        %v1650 = vpop.xlane.xlu0 %1649
        %v1651 = vsel %vm1436, %v1627, 0.0
        %1652 = vadd.xlane.f32.xlu0 %v1651
        %v1653 = vpop.xlane.xlu0 %1652
        %v1654 = vsel %vm1436, %v1628, 0.0
        %1655 = vadd.xlane.f32.xlu0 %v1654
        %v1656 = vpop.xlane.xlu0 %1655
        %v1657 = vsel %vm1436, %v1629, 0.0
        %1658 = vadd.xlane.f32.xlu0 %v1657
        %v1659 = vpop.xlane.xlu0 %1658
        %v1660 = vsel %vm1436, %v1630, 0.0
        %1661 = vadd.xlane.f32.xlu0 %v1660
        %v1662 = vpop.xlane.xlu0 %1661
        %v1663 = vsel %vm1436, %v1631, 0.0
        %1664 = vadd.xlane.f32.xlu0 %v1663
        %v1665 = vpop.xlane.xlu0 %1664
        %v1666 = vsel %vm1436, %v1632, 0.0
        %1667 = vadd.xlane.f32.xlu0 %v1666
        %v1668 = vpop.xlane.xlu0 %1667
        %v1669 = vsel %vm1436, %v1633, 0.0
        %1670 = vadd.xlane.f32.xlu0 %v1669
        %v1671 = vpop.xlane.xlu0 %1670
        %v1672 = vsel %vm1436, %v1634, 0.0
        %1673 = vadd.xlane.f32.xlu0 %v1672
        %v1674 = vpop.xlane.xlu0 %1673
        %v1675 = vsel %vm1436, %v1635, 0.0
        %1676 = vadd.xlane.f32.xlu0 %v1675
        %v1677 = vpop.xlane.xlu0 %1676
        %v1678 = vsel %vm1436, %v1636, 0.0
        %1679 = vadd.xlane.f32.xlu0 %v1678
        %v1680 = vpop.xlane.xlu0 %1679
        %v1681 = vsel %vm1436, %v1637, 0.0
        %1682 = vadd.xlane.f32.xlu0 %v1681
        %v1683 = vpop.xlane.xlu0 %1682
        %v1684 = vsel %vm1436, %v1638, 0.0
        %1685 = vadd.xlane.f32.xlu0 %v1684
        %v1686 = vpop.xlane.xlu0 %1685
        %s1687 = sld [smem:[#allocation16]]
        %v1688 = vstv %s1687
        %v1689 = vmul.f32 %v1641, %v1688
        %v1690 = vmul.f32 %v1644, %v1688
        %v1691 = vmul.f32 %v1647, %v1688
        %v1692 = vmul.f32 %v1650, %v1688
        %v1693 = vmul.f32 %v1653, %v1688
        %v1694 = vmul.f32 %v1656, %v1688
        %v1695 = vmul.f32 %v1659, %v1688
        %v1696 = vmul.f32 %v1662, %v1688
        %v1697 = vmul.f32 %v1665, %v1688
        %v1698 = vmul.f32 %v1668, %v1688
        %v1699 = vmul.f32 %v1671, %v1688
        %v1700 = vmul.f32 %v1674, %v1688
        %v1701 = vmul.f32 %v1677, %v1688
        %v1702 = vmul.f32 %v1680, %v1688
        %v1703 = vmul.f32 %v1683, %v1688
        %v1704 = vmul.f32 %v1686, %v1688
        %s1705 = sld [smem:[#allocation17]]
        %v1706 = vstv %s1705
        %v1707 = vadd.f32 %v1689, %v1706
        %v1708 = vadd.f32 %v1690, %v1706
        %v1709 = vadd.f32 %v1691, %v1706
        %v1710 = vadd.f32 %v1692, %v1706
        %v1711 = vadd.f32 %v1693, %v1706
        %v1712 = vadd.f32 %v1694, %v1706
        %v1713 = vadd.f32 %v1695, %v1706
        %v1714 = vadd.f32 %v1696, %v1706
        %v1715 = vadd.f32 %v1697, %v1706
        %v1716 = vadd.f32 %v1698, %v1706
        %v1717 = vadd.f32 %v1699, %v1706
        %v1718 = vadd.f32 %v1700, %v1706
        %v1719 = vadd.f32 %v1701, %v1706
        %v1720 = vadd.f32 %v1702, %v1706
        %v1721 = vadd.f32 %v1703, %v1706
        %v1722 = vadd.f32 %v1704, %v1706
        %s1723 = scalar_lea.vmem [#allocation15], 16
        %v1724 = vld [vmem:[%s1723] sm:$0xff]
        %v1725 = vld [vmem:[%s1723 + $0x8] sm:$0xff]
        %v1726 = vmul.f32 %v1597, %v1724
        %v1727 = vmul.f32 %v1598, %v1725
        %v1728 = vmul.f32 %v1599, %v1724
        %v1729 = vmul.f32 %v1600, %v1725
        %v1730 = vmul.f32 %v1601, %v1724
        %v1731 = vmul.f32 %v1602, %v1725
        %v1732 = vmul.f32 %v1603, %v1724
        %v1733 = vmul.f32 %v1604, %v1725
        %v1734 = vmul.f32 %v1605, %v1724
        %v1735 = vmul.f32 %v1606, %v1725
        %v1736 = vmul.f32 %v1607, %v1724
        %v1737 = vmul.f32 %v1608, %v1725
        %v1738 = vmul.f32 %v1609, %v1724
        %v1739 = vmul.f32 %v1610, %v1725
        %v1740 = vmul.f32 %v1611, %v1724
        %v1741 = vmul.f32 %v1612, %v1725
        %v1742 = vsel %vm1436, %v1726, 0.0
        %1743 = vadd.xlane.f32.xlu0 %v1742
        %v1744 = vpop.xlane.xlu0 %1743
        %v1745 = vsel %vm1436, %v1727, 0.0
        %1746 = vadd.xlane.f32.xlu0 %v1745
        %v1747 = vpop.xlane.xlu0 %1746
        %v1748 = vsel %vm1436, %v1728, 0.0
        %1749 = vadd.xlane.f32.xlu0 %v1748
        %v1750 = vpop.xlane.xlu0 %1749
        %v1751 = vsel %vm1436, %v1729, 0.0
        %1752 = vadd.xlane.f32.xlu0 %v1751
        %v1753 = vpop.xlane.xlu0 %1752
        %v1754 = vsel %vm1436, %v1730, 0.0
        %1755 = vadd.xlane.f32.xlu0 %v1754
        %v1756 = vpop.xlane.xlu0 %1755
        %v1757 = vsel %vm1436, %v1731, 0.0
        %1758 = vadd.xlane.f32.xlu0 %v1757
        %v1759 = vpop.xlane.xlu0 %1758
        %v1760 = vsel %vm1436, %v1732, 0.0
        %1761 = vadd.xlane.f32.xlu0 %v1760
        %v1762 = vpop.xlane.xlu0 %1761
        %v1763 = vsel %vm1436, %v1733, 0.0
        %1764 = vadd.xlane.f32.xlu0 %v1763
        %v1765 = vpop.xlane.xlu0 %1764
        %v1766 = vsel %vm1436, %v1734, 0.0
        %1767 = vadd.xlane.f32.xlu0 %v1766
        %v1768 = vpop.xlane.xlu0 %1767
        %v1769 = vsel %vm1436, %v1735, 0.0
        %1770 = vadd.xlane.f32.xlu0 %v1769
        %v1771 = vpop.xlane.xlu0 %1770
        %v1772 = vsel %vm1436, %v1736, 0.0
        %1773 = vadd.xlane.f32.xlu0 %v1772
        %v1774 = vpop.xlane.xlu0 %1773
        %v1775 = vsel %vm1436, %v1737, 0.0
        %1776 = vadd.xlane.f32.xlu0 %v1775
        %v1777 = vpop.xlane.xlu0 %1776
        %v1778 = vsel %vm1436, %v1738, 0.0
        %1779 = vadd.xlane.f32.xlu0 %v1778
        %v1780 = vpop.xlane.xlu0 %1779
        %v1781 = vsel %vm1436, %v1739, 0.0
        %1782 = vadd.xlane.f32.xlu0 %v1781
        %v1783 = vpop.xlane.xlu0 %1782
        %v1784 = vsel %vm1436, %v1740, 0.0
        %1785 = vadd.xlane.f32.xlu0 %v1784
        %v1786 = vpop.xlane.xlu0 %1785
        %v1787 = vsel %vm1436, %v1741, 0.0
        %1788 = vadd.xlane.f32.xlu0 %v1787
        %v1789 = vpop.xlane.xlu0 %1788
        %s1790 = sld [smem:[#allocation16 + $0x1]]
        %v1791 = vstv %s1790
        %v1792 = vmul.f32 %v1744, %v1791
        %v1793 = vmul.f32 %v1747, %v1791
        %v1794 = vmul.f32 %v1750, %v1791
        %v1795 = vmul.f32 %v1753, %v1791
        %v1796 = vmul.f32 %v1756, %v1791
        %v1797 = vmul.f32 %v1759, %v1791
        %v1798 = vmul.f32 %v1762, %v1791
        %v1799 = vmul.f32 %v1765, %v1791
        %v1800 = vmul.f32 %v1768, %v1791
        %v1801 = vmul.f32 %v1771, %v1791
        %v1802 = vmul.f32 %v1774, %v1791
        %v1803 = vmul.f32 %v1777, %v1791
        %v1804 = vmul.f32 %v1780, %v1791
        %v1805 = vmul.f32 %v1783, %v1791
        %v1806 = vmul.f32 %v1786, %v1791
        %v1807 = vmul.f32 %v1789, %v1791
        %s1808 = sld [smem:[#allocation17 + $0x1]]
        %v1809 = vstv %s1808
        %v1810 = vadd.f32 %v1792, %v1809
        %v1811 = vadd.f32 %v1793, %v1809
        %v1812 = vadd.f32 %v1794, %v1809
        %v1813 = vadd.f32 %v1795, %v1809
        %v1814 = vadd.f32 %v1796, %v1809
        %v1815 = vadd.f32 %v1797, %v1809
        %v1816 = vadd.f32 %v1798, %v1809
        %v1817 = vadd.f32 %v1799, %v1809
        %v1818 = vadd.f32 %v1800, %v1809
        %v1819 = vadd.f32 %v1801, %v1809
        %v1820 = vadd.f32 %v1802, %v1809
        %v1821 = vadd.f32 %v1803, %v1809
        %v1822 = vadd.f32 %v1804, %v1809
        %v1823 = vadd.f32 %v1805, %v1809
        %v1824 = vadd.f32 %v1806, %v1809
        %v1825 = vadd.f32 %v1807, %v1809
        %s1826 = scalar_lea.vmem [#allocation15], 32
        %v1827 = vld [vmem:[%s1826] sm:$0xff]
        %v1828 = vld [vmem:[%s1826 + $0x8] sm:$0xff]
        %v1829 = vmul.f32 %v1597, %v1827
        %v1830 = vmul.f32 %v1598, %v1828
        %v1831 = vmul.f32 %v1599, %v1827
        %v1832 = vmul.f32 %v1600, %v1828
        %v1833 = vmul.f32 %v1601, %v1827
        %v1834 = vmul.f32 %v1602, %v1828
        %v1835 = vmul.f32 %v1603, %v1827
        %v1836 = vmul.f32 %v1604, %v1828
        %v1837 = vmul.f32 %v1605, %v1827
        %v1838 = vmul.f32 %v1606, %v1828
        %v1839 = vmul.f32 %v1607, %v1827
        %v1840 = vmul.f32 %v1608, %v1828
        %v1841 = vmul.f32 %v1609, %v1827
        %v1842 = vmul.f32 %v1610, %v1828
        %v1843 = vmul.f32 %v1611, %v1827
        %v1844 = vmul.f32 %v1612, %v1828
        %v1845 = vsel %vm1436, %v1829, 0.0
        %1846 = vadd.xlane.f32.xlu0 %v1845
        %v1847 = vpop.xlane.xlu0 %1846
        %v1848 = vsel %vm1436, %v1830, 0.0
        %1849 = vadd.xlane.f32.xlu0 %v1848
        %v1850 = vpop.xlane.xlu0 %1849
        %v1851 = vsel %vm1436, %v1831, 0.0
        %1852 = vadd.xlane.f32.xlu0 %v1851
        %v1853 = vpop.xlane.xlu0 %1852
        %v1854 = vsel %vm1436, %v1832, 0.0
        %1855 = vadd.xlane.f32.xlu0 %v1854
        %v1856 = vpop.xlane.xlu0 %1855
        %v1857 = vsel %vm1436, %v1833, 0.0
        %1858 = vadd.xlane.f32.xlu0 %v1857
        %v1859 = vpop.xlane.xlu0 %1858
        %v1860 = vsel %vm1436, %v1834, 0.0
        %1861 = vadd.xlane.f32.xlu0 %v1860
        %v1862 = vpop.xlane.xlu0 %1861
        %v1863 = vsel %vm1436, %v1835, 0.0
        %1864 = vadd.xlane.f32.xlu0 %v1863
        %v1865 = vpop.xlane.xlu0 %1864
        %v1866 = vsel %vm1436, %v1836, 0.0
        %1867 = vadd.xlane.f32.xlu0 %v1866
        %v1868 = vpop.xlane.xlu0 %1867
        %v1869 = vsel %vm1436, %v1837, 0.0
        %1870 = vadd.xlane.f32.xlu0 %v1869
        %v1871 = vpop.xlane.xlu0 %1870
        %v1872 = vsel %vm1436, %v1838, 0.0
        %1873 = vadd.xlane.f32.xlu0 %v1872
        %v1874 = vpop.xlane.xlu0 %1873
        %v1875 = vsel %vm1436, %v1839, 0.0
        %1876 = vadd.xlane.f32.xlu0 %v1875
        %v1877 = vpop.xlane.xlu0 %1876
        %v1878 = vsel %vm1436, %v1840, 0.0
        %1879 = vadd.xlane.f32.xlu0 %v1878
        %v1880 = vpop.xlane.xlu0 %1879
        %v1881 = vsel %vm1436, %v1841, 0.0
        %1882 = vadd.xlane.f32.xlu0 %v1881
        %v1883 = vpop.xlane.xlu0 %1882
        %v1884 = vsel %vm1436, %v1842, 0.0
        %1885 = vadd.xlane.f32.xlu0 %v1884
        %v1886 = vpop.xlane.xlu0 %1885
        %v1887 = vsel %vm1436, %v1843, 0.0
        %1888 = vadd.xlane.f32.xlu0 %v1887
        %v1889 = vpop.xlane.xlu0 %1888
        %v1890 = vsel %vm1436, %v1844, 0.0
        %1891 = vadd.xlane.f32.xlu0 %v1890
        %v1892 = vpop.xlane.xlu0 %1891
        %s1893 = sld [smem:[#allocation16 + $0x2]]
        %v1894 = vstv %s1893
        %v1895 = vmul.f32 %v1847, %v1894
        %v1896 = vmul.f32 %v1850, %v1894
        %v1897 = vmul.f32 %v1853, %v1894
        %v1898 = vmul.f32 %v1856, %v1894
        %v1899 = vmul.f32 %v1859, %v1894
        %v1900 = vmul.f32 %v1862, %v1894
        %v1901 = vmul.f32 %v1865, %v1894
        %v1902 = vmul.f32 %v1868, %v1894
        %v1903 = vmul.f32 %v1871, %v1894
        %v1904 = vmul.f32 %v1874, %v1894
        %v1905 = vmul.f32 %v1877, %v1894
        %v1906 = vmul.f32 %v1880, %v1894
        %v1907 = vmul.f32 %v1883, %v1894
        %v1908 = vmul.f32 %v1886, %v1894
        %v1909 = vmul.f32 %v1889, %v1894
        %v1910 = vmul.f32 %v1892, %v1894
        %s1911 = sld [smem:[#allocation17 + $0x2]]
        %v1912 = vstv %s1911
        %v1913 = vadd.f32 %v1895, %v1912
        %v1914 = vadd.f32 %v1896, %v1912
        %v1915 = vadd.f32 %v1897, %v1912
        %v1916 = vadd.f32 %v1898, %v1912
        %v1917 = vadd.f32 %v1899, %v1912
        %v1918 = vadd.f32 %v1900, %v1912
        %v1919 = vadd.f32 %v1901, %v1912
        %v1920 = vadd.f32 %v1902, %v1912
        %v1921 = vadd.f32 %v1903, %v1912
        %v1922 = vadd.f32 %v1904, %v1912
        %v1923 = vadd.f32 %v1905, %v1912
        %v1924 = vadd.f32 %v1906, %v1912
        %v1925 = vadd.f32 %v1907, %v1912
        %v1926 = vadd.f32 %v1908, %v1912
        %v1927 = vadd.f32 %v1909, %v1912
        %v1928 = vadd.f32 %v1910, %v1912
        %s1929 = scalar_lea.vmem [#allocation15], 48
        %v1930 = vld [vmem:[%s1929] sm:$0xff]
        %v1931 = vld [vmem:[%s1929 + $0x8] sm:$0xff]
        %v1932 = vmul.f32 %v1597, %v1930
        %v1933 = vmul.f32 %v1598, %v1931
        %v1934 = vmul.f32 %v1599, %v1930
        %v1935 = vmul.f32 %v1600, %v1931
        %v1936 = vmul.f32 %v1601, %v1930
        %v1937 = vmul.f32 %v1602, %v1931
        %v1938 = vmul.f32 %v1603, %v1930
        %v1939 = vmul.f32 %v1604, %v1931
        %v1940 = vmul.f32 %v1605, %v1930
        %v1941 = vmul.f32 %v1606, %v1931
        %v1942 = vmul.f32 %v1607, %v1930
        %v1943 = vmul.f32 %v1608, %v1931
        %v1944 = vmul.f32 %v1609, %v1930
        %v1945 = vmul.f32 %v1610, %v1931
        %v1946 = vmul.f32 %v1611, %v1930
        %v1947 = vmul.f32 %v1612, %v1931
        %v1948 = vsel %vm1436, %v1932, 0.0
        %1949 = vadd.xlane.f32.xlu0 %v1948
        %v1950 = vpop.xlane.xlu0 %1949
        %v1951 = vsel %vm1436, %v1933, 0.0
        %1952 = vadd.xlane.f32.xlu0 %v1951
        %v1953 = vpop.xlane.xlu0 %1952
        %v1954 = vsel %vm1436, %v1934, 0.0
        %1955 = vadd.xlane.f32.xlu0 %v1954
        %v1956 = vpop.xlane.xlu0 %1955
        %v1957 = vsel %vm1436, %v1935, 0.0
        %1958 = vadd.xlane.f32.xlu0 %v1957
        %v1959 = vpop.xlane.xlu0 %1958
        %v1960 = vsel %vm1436, %v1936, 0.0
        %1961 = vadd.xlane.f32.xlu0 %v1960
        %v1962 = vpop.xlane.xlu0 %1961
        %v1963 = vsel %vm1436, %v1937, 0.0
        %1964 = vadd.xlane.f32.xlu0 %v1963
        %v1965 = vpop.xlane.xlu0 %1964
        %v1966 = vsel %vm1436, %v1938, 0.0
        %1967 = vadd.xlane.f32.xlu0 %v1966
        %v1968 = vpop.xlane.xlu0 %1967
        %v1969 = vsel %vm1436, %v1939, 0.0
        %1970 = vadd.xlane.f32.xlu0 %v1969
        %v1971 = vpop.xlane.xlu0 %1970
        %v1972 = vsel %vm1436, %v1940, 0.0
        %1973 = vadd.xlane.f32.xlu0 %v1972
        %v1974 = vpop.xlane.xlu0 %1973
        %v1975 = vsel %vm1436, %v1941, 0.0
        %1976 = vadd.xlane.f32.xlu0 %v1975
        %v1977 = vpop.xlane.xlu0 %1976
        %v1978 = vsel %vm1436, %v1942, 0.0
        %1979 = vadd.xlane.f32.xlu0 %v1978
        %v1980 = vpop.xlane.xlu0 %1979
        %v1981 = vsel %vm1436, %v1943, 0.0
        %1982 = vadd.xlane.f32.xlu0 %v1981
        %v1983 = vpop.xlane.xlu0 %1982
        %v1984 = vsel %vm1436, %v1944, 0.0
        %1985 = vadd.xlane.f32.xlu0 %v1984
        %v1986 = vpop.xlane.xlu0 %1985
        %v1987 = vsel %vm1436, %v1945, 0.0
        %1988 = vadd.xlane.f32.xlu0 %v1987
        %v1989 = vpop.xlane.xlu0 %1988
        %v1990 = vsel %vm1436, %v1946, 0.0
        %1991 = vadd.xlane.f32.xlu0 %v1990
        %v1992 = vpop.xlane.xlu0 %1991
        %v1993 = vsel %vm1436, %v1947, 0.0
        %1994 = vadd.xlane.f32.xlu0 %v1993
        %v1995 = vpop.xlane.xlu0 %1994
        %s1996 = sld [smem:[#allocation16 + $0x3]]
        %v1997 = vstv %s1996
        %v1998 = vmul.f32 %v1950, %v1997
        %v1999 = vmul.f32 %v1953, %v1997
        %v2000 = vmul.f32 %v1956, %v1997
        %v2001 = vmul.f32 %v1959, %v1997
        %v2002 = vmul.f32 %v1962, %v1997
        %v2003 = vmul.f32 %v1965, %v1997
        %v2004 = vmul.f32 %v1968, %v1997
        %v2005 = vmul.f32 %v1971, %v1997
        %v2006 = vmul.f32 %v1974, %v1997
        %v2007 = vmul.f32 %v1977, %v1997
        %v2008 = vmul.f32 %v1980, %v1997
        %v2009 = vmul.f32 %v1983, %v1997
        %v2010 = vmul.f32 %v1986, %v1997
        %v2011 = vmul.f32 %v1989, %v1997
        %v2012 = vmul.f32 %v1992, %v1997
        %v2013 = vmul.f32 %v1995, %v1997
        %s2014 = sld [smem:[#allocation17 + $0x3]]
        %v2015 = vstv %s2014
        %v2016 = vadd.f32 %v1998, %v2015
        %v2017 = vadd.f32 %v1999, %v2015
        %v2018 = vadd.f32 %v2000, %v2015
        %v2019 = vadd.f32 %v2001, %v2015
        %v2020 = vadd.f32 %v2002, %v2015
        %v2021 = vadd.f32 %v2003, %v2015
        %v2022 = vadd.f32 %v2004, %v2015
        %v2023 = vadd.f32 %v2005, %v2015
        %v2024 = vadd.f32 %v2006, %v2015
        %v2025 = vadd.f32 %v2007, %v2015
        %v2026 = vadd.f32 %v2008, %v2015
        %v2027 = vadd.f32 %v2009, %v2015
        %v2028 = vadd.f32 %v2010, %v2015
        %v2029 = vadd.f32 %v2011, %v2015
        %v2030 = vadd.f32 %v2012, %v2015
        %v2031 = vadd.f32 %v2013, %v2015
        %v2048 = vlaneseq
        %v2049 = vand.u32 %v2048, 127
        %v2050 = vlaneseq
        %v2051 = vshrl.u32 %v2050, 7
        %v2052 = vsub.s32 %v2049, %v2051
        %v2053 = vrot.slane %v1707, %v2052
        %v2054 = vadd.s32 %v2049, 4294967288
        %v2055 = vlaneseq
        %v2056 = vshrl.u32 %v2055, 7
        %v2057 = vsub.s32 %v2054, %v2056
        %v2058 = vrot.slane %v1708, %v2057
        %vm2059 = vcmask 130112
        %v2060 = vsel %vm2059, %v2058, %v2053
        %v2061 = vlaneseq
        %v2062 = vshrl.u32 %v2061, 7
        %v2063 = vsub.s32 %v2049, %v2062
        %v2064 = vrot.slane %v1709, %v2063
        %v2065 = vlaneseq
        %v2066 = vshrl.u32 %v2065, 7
        %v2067 = vsub.s32 %v2054, %v2066
        %v2068 = vrot.slane %v1710, %v2067
        %v2069 = vsel %vm2059, %v2068, %v2064
        %v2070 = vlaneseq
        %v2071 = vshrl.u32 %v2070, 7
        %v2072 = vsub.s32 %v2049, %v2071
        %v2073 = vrot.slane %v1711, %v2072
        %v2074 = vlaneseq
        %v2075 = vshrl.u32 %v2074, 7
        %v2076 = vsub.s32 %v2054, %v2075
        %v2077 = vrot.slane %v1712, %v2076
        %v2078 = vsel %vm2059, %v2077, %v2073
        %v2079 = vlaneseq
        %v2080 = vshrl.u32 %v2079, 7
        %v2081 = vsub.s32 %v2049, %v2080
        %v2082 = vrot.slane %v1713, %v2081
        %v2083 = vlaneseq
        %v2084 = vshrl.u32 %v2083, 7
        %v2085 = vsub.s32 %v2054, %v2084
        %v2086 = vrot.slane %v1714, %v2085
        %v2087 = vsel %vm2059, %v2086, %v2082
        %v2088 = vlaneseq
        %v2089 = vshrl.u32 %v2088, 7
        %v2090 = vsub.s32 %v2049, %v2089
        %v2091 = vrot.slane %v1715, %v2090
        %v2092 = vlaneseq
        %v2093 = vshrl.u32 %v2092, 7
        %v2094 = vsub.s32 %v2054, %v2093
        %v2095 = vrot.slane %v1716, %v2094
        %v2096 = vsel %vm2059, %v2095, %v2091
        %v2097 = vlaneseq
        %v2098 = vshrl.u32 %v2097, 7
        %v2099 = vsub.s32 %v2049, %v2098
        %v2100 = vrot.slane %v1717, %v2099
        %v2101 = vlaneseq
        %v2102 = vshrl.u32 %v2101, 7
        %v2103 = vsub.s32 %v2054, %v2102
        %v2104 = vrot.slane %v1718, %v2103
        %v2105 = vsel %vm2059, %v2104, %v2100
        %v2106 = vlaneseq
        %v2107 = vshrl.u32 %v2106, 7
        %v2108 = vsub.s32 %v2049, %v2107
        %v2109 = vrot.slane %v1719, %v2108
        %v2110 = vlaneseq
        %v2111 = vshrl.u32 %v2110, 7
        %v2112 = vsub.s32 %v2054, %v2111
        %v2113 = vrot.slane %v1720, %v2112
        %v2114 = vsel %vm2059, %v2113, %v2109
        %v2115 = vlaneseq
        %v2116 = vshrl.u32 %v2115, 7
        %v2117 = vsub.s32 %v2049, %v2116
        %v2118 = vrot.slane %v1721, %v2117
        %v2119 = vlaneseq
        %v2120 = vshrl.u32 %v2119, 7
        %v2121 = vsub.s32 %v2054, %v2120
        %v2122 = vrot.slane %v1722, %v2121
        %v2123 = vsel %vm2059, %v2122, %v2118
        %v2148 = vlaneseq
        %v2149 = vshrl.u32 %v2148, 7
        %v2150 = vsub.s32 %v2049, %v2149
        %v2151 = vrot.slane %v1810, %v2150
        %v2152 = vlaneseq
        %v2153 = vshrl.u32 %v2152, 7
        %v2154 = vsub.s32 %v2054, %v2153
        %v2155 = vrot.slane %v1811, %v2154
        %v2156 = vsel %vm2059, %v2155, %v2151
        %v2157 = vlaneseq
        %v2158 = vshrl.u32 %v2157, 7
        %v2159 = vsub.s32 %v2049, %v2158
        %v2160 = vrot.slane %v1812, %v2159
        %v2161 = vlaneseq
        %v2162 = vshrl.u32 %v2161, 7
        %v2163 = vsub.s32 %v2054, %v2162
        %v2164 = vrot.slane %v1813, %v2163
        %v2165 = vsel %vm2059, %v2164, %v2160
        %v2166 = vlaneseq
        %v2167 = vshrl.u32 %v2166, 7
        %v2168 = vsub.s32 %v2049, %v2167
        %v2169 = vrot.slane %v1814, %v2168
        %v2170 = vlaneseq
        %v2171 = vshrl.u32 %v2170, 7
        %v2172 = vsub.s32 %v2054, %v2171
        %v2173 = vrot.slane %v1815, %v2172
        %v2174 = vsel %vm2059, %v2173, %v2169
        %v2175 = vlaneseq
        %v2176 = vshrl.u32 %v2175, 7
        %v2177 = vsub.s32 %v2049, %v2176
        %v2178 = vrot.slane %v1816, %v2177
        %v2179 = vlaneseq
        %v2180 = vshrl.u32 %v2179, 7
        %v2181 = vsub.s32 %v2054, %v2180
        %v2182 = vrot.slane %v1817, %v2181
        %v2183 = vsel %vm2059, %v2182, %v2178
        %v2184 = vlaneseq
        %v2185 = vshrl.u32 %v2184, 7
        %v2186 = vsub.s32 %v2049, %v2185
        %v2187 = vrot.slane %v1818, %v2186
        %v2188 = vlaneseq
        %v2189 = vshrl.u32 %v2188, 7
        %v2190 = vsub.s32 %v2054, %v2189
        %v2191 = vrot.slane %v1819, %v2190
        %v2192 = vsel %vm2059, %v2191, %v2187
        %v2193 = vlaneseq
        %v2194 = vshrl.u32 %v2193, 7
        %v2195 = vsub.s32 %v2049, %v2194
        %v2196 = vrot.slane %v1820, %v2195
        %v2197 = vlaneseq
        %v2198 = vshrl.u32 %v2197, 7
        %v2199 = vsub.s32 %v2054, %v2198
        %v2200 = vrot.slane %v1821, %v2199
        %v2201 = vsel %vm2059, %v2200, %v2196
        %v2202 = vlaneseq
        %v2203 = vshrl.u32 %v2202, 7
        %v2204 = vsub.s32 %v2049, %v2203
        %v2205 = vrot.slane %v1822, %v2204
        %v2206 = vlaneseq
        %v2207 = vshrl.u32 %v2206, 7
        %v2208 = vsub.s32 %v2054, %v2207
        %v2209 = vrot.slane %v1823, %v2208
        %v2210 = vsel %vm2059, %v2209, %v2205
        %v2211 = vlaneseq
        %v2212 = vshrl.u32 %v2211, 7
        %v2213 = vsub.s32 %v2049, %v2212
        %v2214 = vrot.slane %v1824, %v2213
        %v2215 = vlaneseq
        %v2216 = vshrl.u32 %v2215, 7
        %v2217 = vsub.s32 %v2054, %v2216
        %v2218 = vrot.slane %v1825, %v2217
        %v2219 = vsel %vm2059, %v2218, %v2214
        %v2244 = vlaneseq
        %v2245 = vshrl.u32 %v2244, 7
        %v2246 = vsub.s32 %v2049, %v2245
        %v2247 = vrot.slane %v1913, %v2246
        %v2248 = vlaneseq
        %v2249 = vshrl.u32 %v2248, 7
        %v2250 = vsub.s32 %v2054, %v2249
        %v2251 = vrot.slane %v1914, %v2250
        %v2252 = vsel %vm2059, %v2251, %v2247
        %v2253 = vlaneseq
        %v2254 = vshrl.u32 %v2253, 7
        %v2255 = vsub.s32 %v2049, %v2254
        %v2256 = vrot.slane %v1915, %v2255
        %v2257 = vlaneseq
        %v2258 = vshrl.u32 %v2257, 7
        %v2259 = vsub.s32 %v2054, %v2258
        %v2260 = vrot.slane %v1916, %v2259
        %v2261 = vsel %vm2059, %v2260, %v2256
        %v2262 = vlaneseq
        %v2263 = vshrl.u32 %v2262, 7
        %v2264 = vsub.s32 %v2049, %v2263
        %v2265 = vrot.slane %v1917, %v2264
        %v2266 = vlaneseq
        %v2267 = vshrl.u32 %v2266, 7
        %v2268 = vsub.s32 %v2054, %v2267
        %v2269 = vrot.slane %v1918, %v2268
        %v2270 = vsel %vm2059, %v2269, %v2265
        %v2271 = vlaneseq
        %v2272 = vshrl.u32 %v2271, 7
        %v2273 = vsub.s32 %v2049, %v2272
        %v2274 = vrot.slane %v1919, %v2273
        %v2275 = vlaneseq
        %v2276 = vshrl.u32 %v2275, 7
        %v2277 = vsub.s32 %v2054, %v2276
        %v2278 = vrot.slane %v1920, %v2277
        %v2279 = vsel %vm2059, %v2278, %v2274
        %v2280 = vlaneseq
        %v2281 = vshrl.u32 %v2280, 7
        %v2282 = vsub.s32 %v2049, %v2281
        %v2283 = vrot.slane %v1921, %v2282
        %v2284 = vlaneseq
        %v2285 = vshrl.u32 %v2284, 7
        %v2286 = vsub.s32 %v2054, %v2285
        %v2287 = vrot.slane %v1922, %v2286
        %v2288 = vsel %vm2059, %v2287, %v2283
        %v2289 = vlaneseq
        %v2290 = vshrl.u32 %v2289, 7
        %v2291 = vsub.s32 %v2049, %v2290
        %v2292 = vrot.slane %v1923, %v2291
        %v2293 = vlaneseq
        %v2294 = vshrl.u32 %v2293, 7
        %v2295 = vsub.s32 %v2054, %v2294
        %v2296 = vrot.slane %v1924, %v2295
        %v2297 = vsel %vm2059, %v2296, %v2292
        %v2298 = vlaneseq
        %v2299 = vshrl.u32 %v2298, 7
        %v2300 = vsub.s32 %v2049, %v2299
        %v2301 = vrot.slane %v1925, %v2300
        %v2302 = vlaneseq
        %v2303 = vshrl.u32 %v2302, 7
        %v2304 = vsub.s32 %v2054, %v2303
        %v2305 = vrot.slane %v1926, %v2304
        %v2306 = vsel %vm2059, %v2305, %v2301
        %v2307 = vlaneseq
        %v2308 = vshrl.u32 %v2307, 7
        %v2309 = vsub.s32 %v2049, %v2308
        %v2310 = vrot.slane %v1927, %v2309
        %v2311 = vlaneseq
        %v2312 = vshrl.u32 %v2311, 7
        %v2313 = vsub.s32 %v2054, %v2312
        %v2314 = vrot.slane %v1928, %v2313
        %v2315 = vsel %vm2059, %v2314, %v2310
        %v2340 = vlaneseq
        %v2341 = vshrl.u32 %v2340, 7
        %v2342 = vsub.s32 %v2049, %v2341
        %v2343 = vrot.slane %v2016, %v2342
        %v2344 = vlaneseq
        %v2345 = vshrl.u32 %v2344, 7
        %v2346 = vsub.s32 %v2054, %v2345
        %v2347 = vrot.slane %v2017, %v2346
        %v2348 = vsel %vm2059, %v2347, %v2343
        %v2349 = vlaneseq
        %v2350 = vshrl.u32 %v2349, 7
        %v2351 = vsub.s32 %v2049, %v2350
        %v2352 = vrot.slane %v2018, %v2351
        %v2353 = vlaneseq
        %v2354 = vshrl.u32 %v2353, 7
        %v2355 = vsub.s32 %v2054, %v2354
        %v2356 = vrot.slane %v2019, %v2355
        %v2357 = vsel %vm2059, %v2356, %v2352
        %v2358 = vlaneseq
        %v2359 = vshrl.u32 %v2358, 7
        %v2360 = vsub.s32 %v2049, %v2359
        %v2361 = vrot.slane %v2020, %v2360
        %v2362 = vlaneseq
        %v2363 = vshrl.u32 %v2362, 7
        %v2364 = vsub.s32 %v2054, %v2363
        %v2365 = vrot.slane %v2021, %v2364
        %v2366 = vsel %vm2059, %v2365, %v2361
        %v2367 = vlaneseq
        %v2368 = vshrl.u32 %v2367, 7
        %v2369 = vsub.s32 %v2049, %v2368
        %v2370 = vrot.slane %v2022, %v2369
        %v2371 = vlaneseq
        %v2372 = vshrl.u32 %v2371, 7
        %v2373 = vsub.s32 %v2054, %v2372
        %v2374 = vrot.slane %v2023, %v2373
        %v2375 = vsel %vm2059, %v2374, %v2370
        %v2376 = vlaneseq
        %v2377 = vshrl.u32 %v2376, 7
        %v2378 = vsub.s32 %v2049, %v2377
        %v2379 = vrot.slane %v2024, %v2378
        %v2380 = vlaneseq
        %v2381 = vshrl.u32 %v2380, 7
        %v2382 = vsub.s32 %v2054, %v2381
        %v2383 = vrot.slane %v2025, %v2382
        %v2384 = vsel %vm2059, %v2383, %v2379
        %v2385 = vlaneseq
        %v2386 = vshrl.u32 %v2385, 7
        %v2387 = vsub.s32 %v2049, %v2386
        %v2388 = vrot.slane %v2026, %v2387
        %v2389 = vlaneseq
        %v2390 = vshrl.u32 %v2389, 7
        %v2391 = vsub.s32 %v2054, %v2390
        %v2392 = vrot.slane %v2027, %v2391
        %v2393 = vsel %vm2059, %v2392, %v2388
        %v2394 = vlaneseq
        %v2395 = vshrl.u32 %v2394, 7
        %v2396 = vsub.s32 %v2049, %v2395
        %v2397 = vrot.slane %v2028, %v2396
        %v2398 = vlaneseq
        %v2399 = vshrl.u32 %v2398, 7
        %v2400 = vsub.s32 %v2054, %v2399
        %v2401 = vrot.slane %v2029, %v2400
        %v2402 = vsel %vm2059, %v2401, %v2397
        %v2403 = vlaneseq
        %v2404 = vshrl.u32 %v2403, 7
        %v2405 = vsub.s32 %v2049, %v2404
        %v2406 = vrot.slane %v2030, %v2405
        %v2407 = vlaneseq
        %v2408 = vshrl.u32 %v2407, 7
        %v2409 = vsub.s32 %v2054, %v2408
        %v2410 = vrot.slane %v2031, %v2409
        %v2411 = vsel %vm2059, %v2410, %v2406
        %v2420 = vsel %vm557, %v2060, %v2156
        %v2421 = vsel %vm557, %v2069, %v2165
        %v2422 = vsel %vm557, %v2078, %v2174
        %v2423 = vsel %vm557, %v2087, %v2183
        %v2424 = vsel %vm557, %v2096, %v2192
        %v2425 = vsel %vm557, %v2105, %v2201
        %v2426 = vsel %vm557, %v2114, %v2210
        %v2427 = vsel %vm557, %v2123, %v2219
        %vm2428 = vcmask 1041408
        %v2429 = vsel %vm2428, %v2420, %v2252
        %v2430 = vsel %vm2428, %v2421, %v2261
        %v2431 = vsel %vm2428, %v2422, %v2270
        %v2432 = vsel %vm2428, %v2423, %v2279
        %v2433 = vsel %vm2428, %v2424, %v2288
        %v2434 = vsel %vm2428, %v2425, %v2297
        %v2435 = vsel %vm2428, %v2426, %v2306
        %v2436 = vsel %vm2428, %v2427, %v2315
        %vm2437 = vcmask 1042432
        %v2438 = vsel %vm2437, %v2429, %v2348
        %v2439 = vsel %vm2437, %v2430, %v2357
        %v2440 = vsel %vm2437, %v2431, %v2366
        %v2441 = vsel %vm2437, %v2432, %v2375
        %v2442 = vsel %vm2437, %v2433, %v2384
        %v2443 = vsel %vm2437, %v2434, %v2393
        %v2444 = vsel %vm2437, %v2435, %v2402
        %v2445 = vsel %vm2437, %v2436, %v2411
        %v2446 = vrot.slane %v551, 2
        %v2448 = vsel %vm1436, %v2446, 0
        %v2451 = vsel %vm1436, %v1613, 0
        %2453 = vmatprep.subr.bf16.mxu0 0
        %2454 = vmatpush1.bf16.xpose.msra.mxu0 %v2451
        %2455 = vmatprep.subr.bf16.mxu0 0
        %2456 = vmatpush1.bf16.xpose.msra.mxu0 0
        %2457 = vmatprep.subr.bf16.mxu0 0
        %2458 = vmatpush1.bf16.xpose.msra.mxu0 0
        %2459 = vmatprep.subr.bf16.mxu0 0
        %2460 = vmatpush1.bf16.xpose.msra.mxu0 0
        %2461 = vmatprep.subr.bf16.mxu0 0
        %2462 = vmatpush1.bf16.xpose.msra.mxu0 0
        %2463 = vmatprep.subr.bf16.mxu0 0
        %2464 = vmatpush1.bf16.xpose.msra.mxu0 0
        %2465 = vmatprep.subr.bf16.mxu0 0
        %2466 = vmatpush1.bf16.xpose.msra.mxu0 0
        %2467 = vmatprep.subr.bf16.mxu0 0
        %2468 = vmatpush1.bf16.xpose.msra.mxu0 0
        %2469 = vmatprep.subr.bf16.mxu0 0
        %2470 = vmatpush1.bf16.xpose.msra.mxu0 0
        %2471 = vmatprep.subr.bf16.mxu0 0
        %2472 = vmatpush1.bf16.xpose.msra.mxu0 0
        %2473 = vmatprep.subr.bf16.mxu0 0
        %2474 = vmatpush1.bf16.xpose.msra.mxu0 0
        %2475 = vmatprep.subr.bf16.mxu0 0
        %2476 = vmatpush1.bf16.xpose.msra.mxu0 0
        %2477 = vmatprep.subr.bf16.mxu0 0
        %2478 = vmatpush1.bf16.xpose.msra.mxu0 0
        %2479 = vmatprep.subr.bf16.mxu0 0
        %2480 = vmatpush1.bf16.xpose.msra.mxu0 0
        %2481 = vmatprep.subr.bf16.mxu0 0
        %2482 = vmatpush1.bf16.xpose.msra.mxu0 0
        %2483 = vmatprep.subr.bf16.mxu0 0
        %2484 = vmatpush1.bf16.xpose.msra.mxu0 0
        %2485 = vmatprep.mubr.bf16.mxu0 0
        %2486 = vmatmul.mubr.bf16.gmra.mrb[0].mxu0 %v2448
        %v2487 = vpop.f32.mrb[0].mxu0
        %v2488 = vadd.f32 %v2438, %v2487
        %v2489 = vpop.f32.mrb[0].mxu0
        %v2490 = vpop.f32.mrb[0].mxu0
        %v2491 = vpop.f32.mrb[0].mxu0
        %2492 = vdwg.mxu0
        %v2493 = vrot.slane %v609, 2
        %v2495 = vsel %vm1436, %v2493, 0
        %v2498 = vsel %vm1436, %v1614, 0
        %2500 = vmatprep.subr.bf16.mxu0 0
        %2501 = vmatpush1.bf16.xpose.msra.mxu0 %v2498
        %2502 = vmatprep.subr.bf16.mxu0 0
        %2503 = vmatpush1.bf16.xpose.msra.mxu0 0
        %2504 = vmatprep.subr.bf16.mxu0 0
        %2505 = vmatpush1.bf16.xpose.msra.mxu0 0
        %2506 = vmatprep.subr.bf16.mxu0 0
        %2507 = vmatpush1.bf16.xpose.msra.mxu0 0
        %2508 = vmatprep.subr.bf16.mxu0 0
        %2509 = vmatpush1.bf16.xpose.msra.mxu0 0
        %2510 = vmatprep.subr.bf16.mxu0 0
        %2511 = vmatpush1.bf16.xpose.msra.mxu0 0
        %2512 = vmatprep.subr.bf16.mxu0 0
        %2513 = vmatpush1.bf16.xpose.msra.mxu0 0
        %2514 = vmatprep.subr.bf16.mxu0 0
        %2515 = vmatpush1.bf16.xpose.msra.mxu0 0
        %2516 = vmatprep.subr.bf16.mxu0 0
        %2517 = vmatpush1.bf16.xpose.msra.mxu0 0
        %2518 = vmatprep.subr.bf16.mxu0 0
        %2519 = vmatpush1.bf16.xpose.msra.mxu0 0
        %2520 = vmatprep.subr.bf16.mxu0 0
        %2521 = vmatpush1.bf16.xpose.msra.mxu0 0
        %2522 = vmatprep.subr.bf16.mxu0 0
        %2523 = vmatpush1.bf16.xpose.msra.mxu0 0
        %2524 = vmatprep.subr.bf16.mxu0 0
        %2525 = vmatpush1.bf16.xpose.msra.mxu0 0
        %2526 = vmatprep.subr.bf16.mxu0 0
        %2527 = vmatpush1.bf16.xpose.msra.mxu0 0
        %2528 = vmatprep.subr.bf16.mxu0 0
        %2529 = vmatpush1.bf16.xpose.msra.mxu0 0
        %2530 = vmatprep.subr.bf16.mxu0 0
        %2531 = vmatpush1.bf16.xpose.msra.mxu0 0
        %2532 = vmatprep.mubr.bf16.mxu0 0
        %2533 = vmatmul.mubr.bf16.gmra.mrb[0].mxu0 %v2495
        %v2534 = vpop.f32.mrb[0].mxu0
        %v2535 = vadd.f32 %v2439, %v2534
        %v2536 = vpop.f32.mrb[0].mxu0
        %v2537 = vpop.f32.mrb[0].mxu0
        %v2538 = vpop.f32.mrb[0].mxu0
        %2539 = vdwg.mxu0
        %v2540 = vrot.slane %v665, 2
        %v2542 = vsel %vm1436, %v2540, 0
        %v2545 = vsel %vm1436, %v1615, 0
        %2547 = vmatprep.subr.bf16.mxu0 0
        %2548 = vmatpush1.bf16.xpose.msra.mxu0 %v2545
        %2549 = vmatprep.subr.bf16.mxu0 0
        %2550 = vmatpush1.bf16.xpose.msra.mxu0 0
        %2551 = vmatprep.subr.bf16.mxu0 0
        %2552 = vmatpush1.bf16.xpose.msra.mxu0 0
        %2553 = vmatprep.subr.bf16.mxu0 0
        %2554 = vmatpush1.bf16.xpose.msra.mxu0 0
        %2555 = vmatprep.subr.bf16.mxu0 0
        %2556 = vmatpush1.bf16.xpose.msra.mxu0 0
        %2557 = vmatprep.subr.bf16.mxu0 0
        %2558 = vmatpush1.bf16.xpose.msra.mxu0 0
        %2559 = vmatprep.subr.bf16.mxu0 0
        %2560 = vmatpush1.bf16.xpose.msra.mxu0 0
        %2561 = vmatprep.subr.bf16.mxu0 0
        %2562 = vmatpush1.bf16.xpose.msra.mxu0 0
        %2563 = vmatprep.subr.bf16.mxu0 0
        %2564 = vmatpush1.bf16.xpose.msra.mxu0 0
        %2565 = vmatprep.subr.bf16.mxu0 0
        %2566 = vmatpush1.bf16.xpose.msra.mxu0 0
        %2567 = vmatprep.subr.bf16.mxu0 0
        %2568 = vmatpush1.bf16.xpose.msra.mxu0 0
        %2569 = vmatprep.subr.bf16.mxu0 0
        %2570 = vmatpush1.bf16.xpose.msra.mxu0 0
        %2571 = vmatprep.subr.bf16.mxu0 0
        %2572 = vmatpush1.bf16.xpose.msra.mxu0 0
        %2573 = vmatprep.subr.bf16.mxu0 0
        %2574 = vmatpush1.bf16.xpose.msra.mxu0 0
        %2575 = vmatprep.subr.bf16.mxu0 0
        %2576 = vmatpush1.bf16.xpose.msra.mxu0 0
        %2577 = vmatprep.subr.bf16.mxu0 0
        %2578 = vmatpush1.bf16.xpose.msra.mxu0 0
        %2579 = vmatprep.mubr.bf16.mxu0 0
        %2580 = vmatmul.mubr.bf16.gmra.mrb[0].mxu0 %v2542
        %v2581 = vpop.f32.mrb[0].mxu0
        %v2582 = vadd.f32 %v2440, %v2581
        %v2583 = vpop.f32.mrb[0].mxu0
        %v2584 = vpop.f32.mrb[0].mxu0
        %v2585 = vpop.f32.mrb[0].mxu0
        %2586 = vdwg.mxu0
        %v2587 = vrot.slane %v721, 2
        %v2589 = vsel %vm1436, %v2587, 0
        %v2592 = vsel %vm1436, %v1616, 0
        %2594 = vmatprep.subr.bf16.mxu0 0
        %2595 = vmatpush1.bf16.xpose.msra.mxu0 %v2592
        %2596 = vmatprep.subr.bf16.mxu0 0
        %2597 = vmatpush1.bf16.xpose.msra.mxu0 0
        %2598 = vmatprep.subr.bf16.mxu0 0
        %2599 = vmatpush1.bf16.xpose.msra.mxu0 0
        %2600 = vmatprep.subr.bf16.mxu0 0
        %2601 = vmatpush1.bf16.xpose.msra.mxu0 0
        %2602 = vmatprep.subr.bf16.mxu0 0
        %2603 = vmatpush1.bf16.xpose.msra.mxu0 0
        %2604 = vmatprep.subr.bf16.mxu0 0
        %2605 = vmatpush1.bf16.xpose.msra.mxu0 0
        %2606 = vmatprep.subr.bf16.mxu0 0
        %2607 = vmatpush1.bf16.xpose.msra.mxu0 0
        %2608 = vmatprep.subr.bf16.mxu0 0
        %2609 = vmatpush1.bf16.xpose.msra.mxu0 0
        %2610 = vmatprep.subr.bf16.mxu0 0
        %2611 = vmatpush1.bf16.xpose.msra.mxu0 0
        %2612 = vmatprep.subr.bf16.mxu0 0
        %2613 = vmatpush1.bf16.xpose.msra.mxu0 0
        %2614 = vmatprep.subr.bf16.mxu0 0
        %2615 = vmatpush1.bf16.xpose.msra.mxu0 0
        %2616 = vmatprep.subr.bf16.mxu0 0
        %2617 = vmatpush1.bf16.xpose.msra.mxu0 0
        %2618 = vmatprep.subr.bf16.mxu0 0
        %2619 = vmatpush1.bf16.xpose.msra.mxu0 0
        %2620 = vmatprep.subr.bf16.mxu0 0
        %2621 = vmatpush1.bf16.xpose.msra.mxu0 0
        %2622 = vmatprep.subr.bf16.mxu0 0
        %2623 = vmatpush1.bf16.xpose.msra.mxu0 0
        %2624 = vmatprep.subr.bf16.mxu0 0
        %2625 = vmatpush1.bf16.xpose.msra.mxu0 0
        %2626 = vmatprep.mubr.bf16.mxu0 0
        %2627 = vmatmul.mubr.bf16.gmra.mrb[0].mxu0 %v2589
        %v2628 = vpop.f32.mrb[0].mxu0
        %v2629 = vadd.f32 %v2441, %v2628
        %v2630 = vpop.f32.mrb[0].mxu0
        %v2631 = vpop.f32.mrb[0].mxu0
        %v2632 = vpop.f32.mrb[0].mxu0
        %2633 = vdwg.mxu0
        %v2634 = vrot.slane %v777, 2
        %v2636 = vsel %vm1436, %v2634, 0
        %v2639 = vsel %vm1436, %v1617, 0
        %2641 = vmatprep.subr.bf16.mxu0 0
        %2642 = vmatpush1.bf16.xpose.msra.mxu0 %v2639
        %2643 = vmatprep.subr.bf16.mxu0 0
        %2644 = vmatpush1.bf16.xpose.msra.mxu0 0
        %2645 = vmatprep.subr.bf16.mxu0 0
        %2646 = vmatpush1.bf16.xpose.msra.mxu0 0
        %2647 = vmatprep.subr.bf16.mxu0 0
        %2648 = vmatpush1.bf16.xpose.msra.mxu0 0
        %2649 = vmatprep.subr.bf16.mxu0 0
        %2650 = vmatpush1.bf16.xpose.msra.mxu0 0
        %2651 = vmatprep.subr.bf16.mxu0 0
        %2652 = vmatpush1.bf16.xpose.msra.mxu0 0
        %2653 = vmatprep.subr.bf16.mxu0 0
        %2654 = vmatpush1.bf16.xpose.msra.mxu0 0
        %2655 = vmatprep.subr.bf16.mxu0 0
        %2656 = vmatpush1.bf16.xpose.msra.mxu0 0
        %2657 = vmatprep.subr.bf16.mxu0 0
        %2658 = vmatpush1.bf16.xpose.msra.mxu0 0
        %2659 = vmatprep.subr.bf16.mxu0 0
        %2660 = vmatpush1.bf16.xpose.msra.mxu0 0
        %2661 = vmatprep.subr.bf16.mxu0 0
        %2662 = vmatpush1.bf16.xpose.msra.mxu0 0
        %2663 = vmatprep.subr.bf16.mxu0 0
        %2664 = vmatpush1.bf16.xpose.msra.mxu0 0
        %2665 = vmatprep.subr.bf16.mxu0 0
        %2666 = vmatpush1.bf16.xpose.msra.mxu0 0
        %2667 = vmatprep.subr.bf16.mxu0 0
        %2668 = vmatpush1.bf16.xpose.msra.mxu0 0
        %2669 = vmatprep.subr.bf16.mxu0 0
        %2670 = vmatpush1.bf16.xpose.msra.mxu0 0
        %2671 = vmatprep.subr.bf16.mxu0 0
        %2672 = vmatpush1.bf16.xpose.msra.mxu0 0
        %2673 = vmatprep.mubr.bf16.mxu0 0
        %2674 = vmatmul.mubr.bf16.gmra.mrb[0].mxu0 %v2636
        %v2675 = vpop.f32.mrb[0].mxu0
        %v2676 = vadd.f32 %v2442, %v2675
        %v2677 = vpop.f32.mrb[0].mxu0
        %v2678 = vpop.f32.mrb[0].mxu0
        %v2679 = vpop.f32.mrb[0].mxu0
        %2680 = vdwg.mxu0
        %v2681 = vrot.slane %v833, 2
        %v2683 = vsel %vm1436, %v2681, 0
        %v2686 = vsel %vm1436, %v1618, 0
        %2688 = vmatprep.subr.bf16.mxu0 0
        %2689 = vmatpush1.bf16.xpose.msra.mxu0 %v2686
        %2690 = vmatprep.subr.bf16.mxu0 0
        %2691 = vmatpush1.bf16.xpose.msra.mxu0 0
        %2692 = vmatprep.subr.bf16.mxu0 0
        %2693 = vmatpush1.bf16.xpose.msra.mxu0 0
        %2694 = vmatprep.subr.bf16.mxu0 0
        %2695 = vmatpush1.bf16.xpose.msra.mxu0 0
        %2696 = vmatprep.subr.bf16.mxu0 0
        %2697 = vmatpush1.bf16.xpose.msra.mxu0 0
        %2698 = vmatprep.subr.bf16.mxu0 0
        %2699 = vmatpush1.bf16.xpose.msra.mxu0 0
        %2700 = vmatprep.subr.bf16.mxu0 0
        %2701 = vmatpush1.bf16.xpose.msra.mxu0 0
        %2702 = vmatprep.subr.bf16.mxu0 0
        %2703 = vmatpush1.bf16.xpose.msra.mxu0 0
        %2704 = vmatprep.subr.bf16.mxu0 0
        %2705 = vmatpush1.bf16.xpose.msra.mxu0 0
        %2706 = vmatprep.subr.bf16.mxu0 0
        %2707 = vmatpush1.bf16.xpose.msra.mxu0 0
        %2708 = vmatprep.subr.bf16.mxu0 0
        %2709 = vmatpush1.bf16.xpose.msra.mxu0 0
        %2710 = vmatprep.subr.bf16.mxu0 0
        %2711 = vmatpush1.bf16.xpose.msra.mxu0 0
        %2712 = vmatprep.subr.bf16.mxu0 0
        %2713 = vmatpush1.bf16.xpose.msra.mxu0 0
        %2714 = vmatprep.subr.bf16.mxu0 0
        %2715 = vmatpush1.bf16.xpose.msra.mxu0 0
        %2716 = vmatprep.subr.bf16.mxu0 0
        %2717 = vmatpush1.bf16.xpose.msra.mxu0 0
        %2718 = vmatprep.subr.bf16.mxu0 0
        %2719 = vmatpush1.bf16.xpose.msra.mxu0 0
        %2720 = vmatprep.mubr.bf16.mxu0 0
        %2721 = vmatmul.mubr.bf16.gmra.mrb[0].mxu0 %v2683
        %v2722 = vpop.f32.mrb[0].mxu0
        %v2723 = vadd.f32 %v2443, %v2722
        %v2724 = vpop.f32.mrb[0].mxu0
        %v2725 = vpop.f32.mrb[0].mxu0
        %v2726 = vpop.f32.mrb[0].mxu0
        %2727 = vdwg.mxu0
        %v2728 = vrot.slane %v889, 2
        %v2730 = vsel %vm1436, %v2728, 0
        %v2733 = vsel %vm1436, %v1619, 0
        %2735 = vmatprep.subr.bf16.mxu0 0
        %2736 = vmatpush1.bf16.xpose.msra.mxu0 %v2733
        %2737 = vmatprep.subr.bf16.mxu0 0
        %2738 = vmatpush1.bf16.xpose.msra.mxu0 0
        %2739 = vmatprep.subr.bf16.mxu0 0
        %2740 = vmatpush1.bf16.xpose.msra.mxu0 0
        %2741 = vmatprep.subr.bf16.mxu0 0
        %2742 = vmatpush1.bf16.xpose.msra.mxu0 0
        %2743 = vmatprep.subr.bf16.mxu0 0
        %2744 = vmatpush1.bf16.xpose.msra.mxu0 0
        %2745 = vmatprep.subr.bf16.mxu0 0
        %2746 = vmatpush1.bf16.xpose.msra.mxu0 0
        %2747 = vmatprep.subr.bf16.mxu0 0
        %2748 = vmatpush1.bf16.xpose.msra.mxu0 0
        %2749 = vmatprep.subr.bf16.mxu0 0
        %2750 = vmatpush1.bf16.xpose.msra.mxu0 0
        %2751 = vmatprep.subr.bf16.mxu0 0
        %2752 = vmatpush1.bf16.xpose.msra.mxu0 0
        %2753 = vmatprep.subr.bf16.mxu0 0
        %2754 = vmatpush1.bf16.xpose.msra.mxu0 0
        %2755 = vmatprep.subr.bf16.mxu0 0
        %2756 = vmatpush1.bf16.xpose.msra.mxu0 0
        %2757 = vmatprep.subr.bf16.mxu0 0
        %2758 = vmatpush1.bf16.xpose.msra.mxu0 0
        %2759 = vmatprep.subr.bf16.mxu0 0
        %2760 = vmatpush1.bf16.xpose.msra.mxu0 0
        %2761 = vmatprep.subr.bf16.mxu0 0
        %2762 = vmatpush1.bf16.xpose.msra.mxu0 0
        %2763 = vmatprep.subr.bf16.mxu0 0
        %2764 = vmatpush1.bf16.xpose.msra.mxu0 0
        %2765 = vmatprep.subr.bf16.mxu0 0
        %2766 = vmatpush1.bf16.xpose.msra.mxu0 0
        %2767 = vmatprep.mubr.bf16.mxu0 0
        %2768 = vmatmul.mubr.bf16.gmra.mrb[0].mxu0 %v2730
        %v2769 = vpop.f32.mrb[0].mxu0
        %v2770 = vadd.f32 %v2444, %v2769
        %v2771 = vpop.f32.mrb[0].mxu0
        %v2772 = vpop.f32.mrb[0].mxu0
        %v2773 = vpop.f32.mrb[0].mxu0
        %2774 = vdwg.mxu0
        %v2775 = vrot.slane %v945, 2
        %v2777 = vsel %vm1436, %v2775, 0
        %v2780 = vsel %vm1436, %v1620, 0
        %2782 = vmatprep.subr.bf16.mxu0 0
        %2783 = vmatpush1.bf16.xpose.msra.mxu0 %v2780
        %2784 = vmatprep.subr.bf16.mxu0 0
        %2785 = vmatpush1.bf16.xpose.msra.mxu0 0
        %2786 = vmatprep.subr.bf16.mxu0 0
        %2787 = vmatpush1.bf16.xpose.msra.mxu0 0
        %2788 = vmatprep.subr.bf16.mxu0 0
        %2789 = vmatpush1.bf16.xpose.msra.mxu0 0
        %2790 = vmatprep.subr.bf16.mxu0 0
        %2791 = vmatpush1.bf16.xpose.msra.mxu0 0
        %2792 = vmatprep.subr.bf16.mxu0 0
        %2793 = vmatpush1.bf16.xpose.msra.mxu0 0
        %2794 = vmatprep.subr.bf16.mxu0 0
        %2795 = vmatpush1.bf16.xpose.msra.mxu0 0
        %2796 = vmatprep.subr.bf16.mxu0 0
        %2797 = vmatpush1.bf16.xpose.msra.mxu0 0
        %2798 = vmatprep.subr.bf16.mxu0 0
        %2799 = vmatpush1.bf16.xpose.msra.mxu0 0
        %2800 = vmatprep.subr.bf16.mxu0 0
        %2801 = vmatpush1.bf16.xpose.msra.mxu0 0
        %2802 = vmatprep.subr.bf16.mxu0 0
        %2803 = vmatpush1.bf16.xpose.msra.mxu0 0
        %2804 = vmatprep.subr.bf16.mxu0 0
        %2805 = vmatpush1.bf16.xpose.msra.mxu0 0
        %2806 = vmatprep.subr.bf16.mxu0 0
        %2807 = vmatpush1.bf16.xpose.msra.mxu0 0
        %2808 = vmatprep.subr.bf16.mxu0 0
        %2809 = vmatpush1.bf16.xpose.msra.mxu0 0
        %2810 = vmatprep.subr.bf16.mxu0 0
        %2811 = vmatpush1.bf16.xpose.msra.mxu0 0
        %2812 = vmatprep.subr.bf16.mxu0 0
        %2813 = vmatpush1.bf16.xpose.msra.mxu0 0
        %2814 = vmatprep.mubr.bf16.mxu0 0
        %2815 = vmatmul.mubr.bf16.gmra.mrb[0].mxu0 %v2777
        %v2816 = vpop.f32.mrb[0].mxu0
        %v2817 = vadd.f32 %v2445, %v2816
        %v2818 = vpop.f32.mrb[0].mxu0
        %v2819 = vpop.f32.mrb[0].mxu0
        %v2820 = vpop.f32.mrb[0].mxu0
        %2821 = vdwg.mxu0
        %v2822 = vpack.c.bf16 %v2488, %v2488
        %v2823 = vpack.c.bf16 %v2535, %v2535
        %v2824 = vpack.c.bf16 %v2582, %v2582
        %v2825 = vpack.c.bf16 %v2629, %v2629
        %v2826 = vpack.c.bf16 %v2676, %v2676
        %v2827 = vpack.c.bf16 %v2723, %v2723
        %v2828 = vpack.c.bf16 %v2770, %v2770
        %v2829 = vpack.c.bf16 %v2817, %v2817
        %vm2830 = vcmask 123904
        %2831 = vst.msk [vmem:[%s515] sm:$0x3] %vm2830, %v2822
        %2832 = vst.msk [vmem:[%s515 + $0x2] sm:$0x3] %vm2830, %v2823
        %2833 = vst.msk [vmem:[%s515 + $0x4] sm:$0x3] %vm2830, %v2824
        %2834 = vst.msk [vmem:[%s515 + $0x6] sm:$0x3] %vm2830, %v2825
        %2835 = vst.msk [vmem:[%s515 + $0x8] sm:$0x3] %vm2830, %v2826
        %2836 = vst.msk [vmem:[%s515 + $0xa] sm:$0x3] %vm2830, %v2827
        %2837 = vst.msk [vmem:[%s515 + $0xc] sm:$0x3] %vm2830, %v2828
        %2838 = vst.msk [vmem:[%s515 + $0xe] sm:$0x3] %vm2830, %v2829
        %s2839 = sand.u32 %s287, 1
        %s2840 = scalar_lea.sflag [#allocation8], %s2839
        %s2841 = sand.u32 %s287, 1
        %s2842 = smul.addr %s2841, 16
        %s2843 = scalar_lea.vmem [#allocation19], %s2842
        // Predicated region
        $region93: #{axial_block_forward.6} parent=63 // pred_check
          %p2844 = pneg %p297
        $region94: #{axial_block_forward.6} parent=63 // pred_check_branch
          %2846 = sbr.rel (%p2844) target = $region96
        $region95: #{axial_block_forward.6} parent=63 // pred_region
          %s2847 = smul.u32 8, %s38
          %s2849 = ssub.s32 256, 256
          %2850 = vsyncadd %s2840, %s2849
          %s2851 = smul.addr %s2847, 32
          %s2852 = scalar_lea.hbm %s11, %s2851
          %s2853 = sshll.u32 %s2843, 4
          %s2854 = int_to_ptr.vmem [resolvable:$true] %s2853
          %2859 = dma.vmem_to_hbm [thread:$0]  %s2854, 256, %s2852, %s2840, 32, 32, 2
        $region96: #{axial_block_forward.6} parent=63 // pred_fallthru
          _
      $region64: #{axial_block_forward.6} parent=5 // pred_fallthru
        _
      %p2860 = scmp.le.s32.totalorder 2, %s33
      // Predicated region
      $region97: #{axial_block_forward.6} parent=5 // pred_check
        %p2861 = pneg %p2860
      $region98: #{axial_block_forward.6} parent=5 // pred_check_branch
        %2863 = sbr.rel (%p2861) target = $region100
      $region99: #{axial_block_forward.6} parent=5 // pred_region
        %s2864 = ssub.s32 %s33, 2
        // Predicated region
        $region101: #{axial_block_forward.6} parent=99 // pred_check
          %p2865 = pneg %p303
        $region102: #{axial_block_forward.6} parent=99 // pred_check_branch
          %2867 = sbr.rel (%p2865) target = $region104
        $region103: #{axial_block_forward.6} parent=99 // pred_region
          %s2868 = sand.u32 %s288, 1
          %s2869 = scalar_lea.sflag [#allocation8], %s2868
          %s2870 = sand.u32 %s288, 1
          %s2871 = smul.addr %s2870, 16
          %s2872 = scalar_lea.vmem [#allocation19], %s2871
          %2873 = dma.done %s2869, 256
        $region104: #{axial_block_forward.6} parent=99 // pred_fallthru
          _
      $region100: #{axial_block_forward.6} parent=5 // pred_fallthru
        _
    $region6: #{axial_block_forward.6} parent=1 // loop_footer
      %s37 = sadd.s32 1, %s33
    $region7: #{axial_block_forward.6} parent=1 // loop_footer_branch
      %32 = sbr.rel target = $region3
    $region8: #{axial_block_forward.6} parent=1 // loop_exit
      _
    %2874 = vsyncpa [#allocation7], 1
    %s2875 = scalar_lea.sflag [#allocation7], 1
    %2876 = vsyncpa %s2875, 1
    %2877 = vsyncpa [#allocation11], 1
    %s2878 = scalar_lea.sflag [#allocation11], 1
    %2879 = vsyncpa %s2878, 1
    %2880 = vsyncpa [#allocation14], 1
    %2881 = vsyncpa [#allocation8], 1
    %s2882 = scalar_lea.sflag [#allocation8], 1
    %2883 = vsyncpa %s2882, 1
    %2884 = vsyncpa [#allocation9], 1
    %s2885 = scalar_lea.sflag [#allocation9], 1
    %2886 = vsyncpa %s2885, 1
    %2887 = vsyncpa [#allocation18], 1

// kernel: axial_block_forward.9
$region0: #{axial_block_forward.9}
  #allocation0 [shape = 'u32[]', space=smem, size = 0x4, offset = 0x4, fixed_abs, tag = 'smem constant byte address 0x4 - core index']
  #allocation1 [shape = 'u32[144,128]{1,0:T(1,128)}', space=vmem, size = 0x12000, scoped, tag = 'internal scratch']
  %s0 = inlined_call_operand.hbm [shape: bf16[2,4,256], index: 0, kind: input, shape index: {}]
  %s1 = inlined_call_operand.hbm [shape: f32[2,8,256], index: 1, kind: input, shape index: {}]
  %s2 = inlined_call_operand.hbm [shape: bf16[8,4], index: 2, kind: input, shape index: {}]
  %s3 = inlined_call_operand.hbm [shape: f32[8,1], index: 3, kind: input, shape index: {}]
  %s4 = inlined_call_operand.hbm [shape: f32[8,1], index: 4, kind: input, shape index: {}]
  %s5 = inlined_call_operand.hbm [shape: f32[2,8,256], index: 5, kind: output, shape index: {}]
  %s6 = sld [smem:[#allocation0]]
  $region73: #{axial_block_forward.9} parent=0
    _
  %s8 = ssub.s32 1, %s6
  %s9 = scalar_select 0, %s8, %s6
  $region1: #{axial_block_forward.9} parent=0
    #allocation2 [shape = 'u8[4096]{0}', space=vmem, size = 0x1000, scoped, tag = 'input window, operand 0']
    #allocation3 [shape = 's32[2]{0}', space=sflag, size = 0x8, scoped, tag = 'scoped memory for axial_block_forward.9']
    #allocation4 [shape = 's32[2]{0}', space=sflag, size = 0x8, scoped, tag = 'scoped memory for axial_block_forward.9']
    #allocation5 [shape = 'u8[16384]{0}', space=vmem, size = 0x4000, scoped, tag = 'input window, operand 1']
    #allocation6 [shape = 's32[2]{0}', space=sflag, size = 0x8, scoped, tag = 'scoped memory for axial_block_forward.9']
    #allocation7 [shape = 'u8[2048]{0}', space=vmem, size = 0x800, scoped, tag = 'input window, operand 2, single buffered']
    #allocation8 [shape = 'u8[4096]{0}', space=vmem, size = 0x1000, scoped, tag = 'input window, operand 3, single buffered']
    #allocation9 [shape = 's32[1]{0}', space=sflag, size = 0x4, scoped, tag = 'scoped memory for axial_block_forward.9']
    #allocation10 [shape = 'u8[4096]{0}', space=vmem, size = 0x1000, scoped, tag = 'input window, operand 4, single buffered']
    #allocation11 [shape = 'u8[16384]{0}', space=vmem, size = 0x4000, scoped, tag = 'output window, operand 0']
    %10 = vsyncpa [#allocation3], 0
    %s11 = scalar_lea.sflag [#allocation3], 1
    %12 = vsyncpa %s11, 0
    %13 = vsyncpa [#allocation6], 0
    %s14 = scalar_lea.sflag [#allocation6], 1
    %15 = vsyncpa %s14, 0
    %16 = vsyncpa [#allocation9], 0
    %17 = vsyncpa [#allocation4], 0
    %s18 = scalar_lea.sflag [#allocation4], 1
    %19 = vsyncpa %s18, 0
    loop: start=0, step=1, limit=4
    $region2: #{axial_block_forward.9} parent=1 // loop_pre_header
      _
    $region3: #{axial_block_forward.9} parent=1 // loop_header
      %s21 = sphi 0, %s25
      %p22 = scmp.ge.s32.totalorder %s21, 4
      %s28 = sphi 0, %s40
      %s29 = sphi 0, %s36
      %s30 = sphi 0, %s28
      %s31 = sphi 0, %s29
      %s32 = sphi 0, %s30
      %s33 = sphi 0, %s31
      %s45 = sphi 0, %s47
      %s48 = sphi 0, %s45
      %s49 = sphi 0, %s48
      %s65 = sphi 0, %s49
      %s73 = sphi 0, %s75
      %s76 = sphi 0, %s73
      %s77 = sphi 0, %s76
      %s93 = sphi 0, %s77
      %s97 = sphi 0, %s97
      %s99 = sphi 0, %s97
      %s100 = sphi 0, %s99
      %s114 = sphi 0, %s100
      %s118 = sphi 0, %s118
      %s120 = sphi 0, %s118
      %s121 = sphi 0, %s120
      %s135 = sphi 0, %s121
      %s139 = sphi 0, %s139
      %s141 = sphi 0, %s139
      %s142 = sphi 0, %s141
      %s156 = sphi 0, %s142
      %s164 = sphi 0, %s166
      %s167 = sphi 0, %s164
      %s168 = sphi 0, %s167
      %s184 = sphi 0, %s168
    $region4: #{axial_block_forward.9} parent=1 // loop_header_branch
      %24 = sbr.rel (%p22) target = $region8
    $region5: #{axial_block_forward.9} parent=1 // loop_body
      %s26 = ssub.s32 %s21, 1
      %s27 = ssub.s32 %s21, 2
      %s34 = sadd.s32 1, %s29
      %p35 = scmp.ge.s32.totalorder %s34, 1
      %s36 = scalar_select %p35, 0, %s34
      %s37 = sadd.s32 1, %s28
      %s38 = scalar_select %p35, %s37, %s28
      %p39 = scmp.ge.s32.totalorder %s38, 2
      %s40 = scalar_select %p39, 0, %s38
      %s41 = ssub.s32 %s28, %s40
      %s42 = ssub.s32 %s29, %s36
      %s43 = sor.u32 %s41, %s42
      %p44 = scmp.eq.s32.totalorder %s43, 0
      %s46 = sadd.s32 %s45, 1
      %s47 = scalar_select %p44, %s45, %s46
      %p50 = pneg %p44
      %p51 = scmp.eq.s32.totalorder %s21, 1
      %p52 = por %p50, %p51
      %p53 = scmp.ne.s32.totalorder %s45, %s48
      %p54 = scmp.eq.s32.totalorder %s21, 0
      %p55 = por %p53, %p54
      %p56 = scmp.ne.s32.totalorder %s45, %s48
      %p57 = scmp.eq.s32.totalorder %s26, 1
      %p58 = por %p56, %p57
      %p59 = scmp.ne.s32.totalorder %s48, %s49
      %p60 = scmp.eq.s32.totalorder %s26, 0
      %p61 = por %p59, %p60
      %p62 = scmp.ne.s32.totalorder %s48, %s49
      %p63 = scmp.eq.s32.totalorder %s27, 1
      %p64 = por %p62, %p63
      %p66 = scmp.ne.s32.totalorder %s49, %s65
      %p67 = scmp.eq.s32.totalorder %s27, 0
      %p68 = por %p66, %p67
      %s69 = ssub.s32 %s28, %s40
      %s70 = ssub.s32 %s29, %s36
      %s71 = sor.u32 %s69, %s70
      %p72 = scmp.eq.s32.totalorder %s71, 0
      %s74 = sadd.s32 %s73, 1
      %s75 = scalar_select %p72, %s73, %s74
      %p78 = pneg %p72
      %p79 = scmp.eq.s32.totalorder %s21, 1
      %p80 = por %p78, %p79
      %p81 = scmp.ne.s32.totalorder %s73, %s76
      %p82 = scmp.eq.s32.totalorder %s21, 0
      %p83 = por %p81, %p82
      %p84 = scmp.ne.s32.totalorder %s73, %s76
      %p85 = scmp.eq.s32.totalorder %s26, 1
      %p86 = por %p84, %p85
      %p87 = scmp.ne.s32.totalorder %s76, %s77
      %p88 = scmp.eq.s32.totalorder %s26, 0
      %p89 = por %p87, %p88
      %p90 = scmp.ne.s32.totalorder %s76, %s77
      %p91 = scmp.eq.s32.totalorder %s27, 1
      %p92 = por %p90, %p91
      %p94 = scmp.ne.s32.totalorder %s77, %s93
      %p95 = scmp.eq.s32.totalorder %s27, 0
      %p96 = por %p94, %p95
      %s98 = sadd.s32 %s97, 1
      %p101 = scmp.eq.s32.totalorder %s21, 1
      %p102 = scmp.ne.s32.totalorder %s97, %s99
      %p103 = scmp.eq.s32.totalorder %s21, 0
      %p104 = por %p102, %p103
      %p105 = scmp.ne.s32.totalorder %s97, %s99
      %p106 = scmp.eq.s32.totalorder %s26, 1
      %p107 = por %p105, %p106
      %p108 = scmp.ne.s32.totalorder %s99, %s100
      %p109 = scmp.eq.s32.totalorder %s26, 0
      %p110 = por %p108, %p109
      %p111 = scmp.ne.s32.totalorder %s99, %s100
      %p112 = scmp.eq.s32.totalorder %s27, 1
      %p113 = por %p111, %p112
      %p115 = scmp.ne.s32.totalorder %s100, %s114
      %p116 = scmp.eq.s32.totalorder %s27, 0
      %p117 = por %p115, %p116
      %s119 = sadd.s32 %s118, 1
      %p122 = scmp.eq.s32.totalorder %s21, 1
      %p123 = scmp.ne.s32.totalorder %s118, %s120
      %p124 = scmp.eq.s32.totalorder %s21, 0
      %p125 = por %p123, %p124
      %p126 = scmp.ne.s32.totalorder %s118, %s120
      %p127 = scmp.eq.s32.totalorder %s26, 1
      %p128 = por %p126, %p127
      %p129 = scmp.ne.s32.totalorder %s120, %s121
      %p130 = scmp.eq.s32.totalorder %s26, 0
      %p131 = por %p129, %p130
      %p132 = scmp.ne.s32.totalorder %s120, %s121
      %p133 = scmp.eq.s32.totalorder %s27, 1
      %p134 = por %p132, %p133
      %p136 = scmp.ne.s32.totalorder %s121, %s135
      %p137 = scmp.eq.s32.totalorder %s27, 0
      %p138 = por %p136, %p137
      %s140 = sadd.s32 %s139, 1
      %p143 = scmp.eq.s32.totalorder %s21, 1
      %p144 = scmp.ne.s32.totalorder %s139, %s141
      %p145 = scmp.eq.s32.totalorder %s21, 0
      %p146 = por %p144, %p145
      %p147 = scmp.ne.s32.totalorder %s139, %s141
      %p148 = scmp.eq.s32.totalorder %s26, 1
      %p149 = por %p147, %p148
      %p150 = scmp.ne.s32.totalorder %s141, %s142
      %p151 = scmp.eq.s32.totalorder %s26, 0
      %p152 = por %p150, %p151
      %p153 = scmp.ne.s32.totalorder %s141, %s142
      %p154 = scmp.eq.s32.totalorder %s27, 1
      %p155 = por %p153, %p154
      %p157 = scmp.ne.s32.totalorder %s142, %s156
      %p158 = scmp.eq.s32.totalorder %s27, 0
      %p159 = por %p157, %p158
      %s160 = ssub.s32 %s28, %s40
      %s161 = ssub.s32 %s29, %s36
      %s162 = sor.u32 %s160, %s161
      %p163 = scmp.eq.s32.totalorder %s162, 0
      %s165 = sadd.s32 %s164, 1
      %s166 = scalar_select %p163, %s164, %s165
      %p169 = pneg %p163
      %p170 = scmp.eq.s32.totalorder %s21, 1
      %p171 = por %p169, %p170
      %p172 = scmp.ne.s32.totalorder %s164, %s167
      %p173 = scmp.eq.s32.totalorder %s21, 0
      %p174 = por %p172, %p173
      %p175 = scmp.ne.s32.totalorder %s164, %s167
      %p176 = scmp.eq.s32.totalorder %s26, 1
      %p177 = por %p175, %p176
      %p178 = scmp.ne.s32.totalorder %s167, %s168
      %p179 = scmp.eq.s32.totalorder %s26, 0
      %p180 = por %p178, %p179
      %p181 = scmp.ne.s32.totalorder %s167, %s168
      %p182 = scmp.eq.s32.totalorder %s27, 1
      %p183 = por %p181, %p182
      %p185 = scmp.ne.s32.totalorder %s168, %s184
      %p186 = scmp.eq.s32.totalorder %s27, 0
      %p187 = por %p185, %p186
      %p188 = scmp.le.s32.totalorder 1, %s21
      %p189 = scmp.lt.s32.totalorder %s21, 3
      %p190 = pnand %p188, %p189
      %p191 = pneg %p190
      // Predicated region
      $region9: #{axial_block_forward.9} parent=5 // pred_check
        _
      $region10: #{axial_block_forward.9} parent=5 // pred_check_branch
        %193 = sbr.rel (%p190) target = $region12
      $region11: #{axial_block_forward.9} parent=5 // pred_region
        %s194 = ssub.s32 %s21, 1
        // Predicated region
        $region13: #{axial_block_forward.9} parent=11 // pred_check
          %p195 = pneg %p110
        $region14: #{axial_block_forward.9} parent=11 // pred_check_branch
          %197 = sbr.rel (%p195) target = $region16
        $region15: #{axial_block_forward.9} parent=11 // pred_region
          %s199 = ssub.s32 64, 64
          %200 = vsyncadd [#allocation6], %s199
          %s202 = sshll.u32 [#allocation7], 4
          %s203 = int_to_ptr.vmem [resolvable:$true] %s202
          %205 = dma.hbm_to_vmem [thread:$0]  %s2, 64, %s203, [#allocation6]
        $region16: #{axial_block_forward.9} parent=11 // pred_fallthru
          _
        // Predicated region
        $region17: #{axial_block_forward.9} parent=11 // pred_check
          %p206 = pneg %p131
        $region18: #{axial_block_forward.9} parent=11 // pred_check_branch
          %208 = sbr.rel (%p206) target = $region20
        $region19: #{axial_block_forward.9} parent=11 // pred_region
          %s210 = ssub.s32 128, 128
          %211 = vsyncadd [#allocation9], %s210
          %s213 = sshll.u32 [#allocation8], 4
          %s214 = int_to_ptr.vmem [resolvable:$true] %s213
          %216 = dma.hbm_to_vmem [thread:$0]  %s3, 128, %s214, [#allocation9]
        $region20: #{axial_block_forward.9} parent=11 // pred_fallthru
          _
        // Predicated region
        $region21: #{axial_block_forward.9} parent=11 // pred_check
          %p217 = pneg %p152
        $region22: #{axial_block_forward.9} parent=11 // pred_check_branch
          %219 = sbr.rel (%p217) target = $region24
        $region23: #{axial_block_forward.9} parent=11 // pred_region
          %s221 = ssub.s32 128, 128
          %222 = vsyncadd [#allocation9], %s221
          %s224 = sshll.u32 [#allocation10], 4
          %s225 = int_to_ptr.vmem [resolvable:$true] %s224
          %227 = dma.hbm_to_vmem [thread:$0]  %s4, 128, %s225, [#allocation9]
        $region24: #{axial_block_forward.9} parent=11 // pred_fallthru
          _
      $region12: #{axial_block_forward.9} parent=5 // pred_fallthru
        _
      %p228 = scmp.lt.s32.totalorder %s21, 2
      // Predicated region
      $region25: #{axial_block_forward.9} parent=5 // pred_check
        %p229 = pneg %p228
      $region26: #{axial_block_forward.9} parent=5 // pred_check_branch
        %231 = sbr.rel (%p229) target = $region28
      $region27: #{axial_block_forward.9} parent=5 // pred_region
        // Predicated region
        $region29: #{axial_block_forward.9} parent=27 // pred_check
          %p232 = pneg %p55
        $region30: #{axial_block_forward.9} parent=27 // pred_check_branch
          %234 = sbr.rel (%p232) target = $region32
        $region31: #{axial_block_forward.9} parent=27 // pred_region
          %s235 = sand.u32 %s45, 1
          %s236 = scalar_lea.sflag [#allocation3], %s235
          %s237 = sand.u32 %s45, 1
          %s238 = smul.addr %s237, 4
          %s239 = scalar_lea.vmem [#allocation2], %s238
          %s240 = smul.u32 2, %s29
          %s242 = ssub.s32 64, 64
          %243 = vsyncadd %s236, %s242
          %s244 = smul.addr %s28, 2
          %s245 = sadd.s32 %s240, %s244
          %s246 = smul.addr %s245, 32
          %s247 = scalar_lea.hbm %s0, %s246
          %s249 = sshll.u32 %s239, 4
          %s250 = int_to_ptr.vmem [resolvable:$true] %s249
          %252 = dma.hbm_to_vmem [thread:$0]  %s247, 64, %s250, %s236
        $region32: #{axial_block_forward.9} parent=27 // pred_fallthru
          _
        // Predicated region
        $region33: #{axial_block_forward.9} parent=27 // pred_check
          %p253 = pneg %p83
        $region34: #{axial_block_forward.9} parent=27 // pred_check_branch
          %255 = sbr.rel (%p253) target = $region36
        $region35: #{axial_block_forward.9} parent=27 // pred_region
          %s256 = sand.u32 %s21, 1
          %s257 = scalar_lea.sflag [#allocation6], %s256
          %s258 = sand.u32 %s73, 1
          %s259 = smul.addr %s258, 16
          %s260 = scalar_lea.vmem [#allocation5], %s259
          %s261 = smul.u32 2, %s29
          %s263 = ssub.s32 256, 256
          %264 = vsyncadd %s257, %s263
          %s265 = smul.addr %s28, 2
          %s266 = sadd.s32 %s261, %s265
          %s267 = smul.addr %s266, 128
          %s268 = scalar_lea.hbm %s1, %s267
          %s270 = sshll.u32 %s260, 4
          %s271 = int_to_ptr.vmem [resolvable:$true] %s270
          %273 = dma.hbm_to_vmem [thread:$0]  %s268, 256, %s271, %s257
        $region36: #{axial_block_forward.9} parent=27 // pred_fallthru
          _
      $region28: #{axial_block_forward.9} parent=5 // pred_fallthru
        _
      %p274 = scmp.le.s32.totalorder 1, %s21
      %p275 = scmp.lt.s32.totalorder %s21, 3
      %p276 = pnand %p274, %p275
      %p277 = pneg %p276
      // Predicated region
      $region37: #{axial_block_forward.9} parent=5 // pred_check
        _
      $region38: #{axial_block_forward.9} parent=5 // pred_check_branch
        %279 = sbr.rel (%p276) target = $region40
      $region39: #{axial_block_forward.9} parent=5 // pred_region
        %s280 = ssub.s32 %s21, 1
        %s281 = sand.u32 %s48, 1
        %s282 = scalar_lea.sflag [#allocation3], %s281
        %s283 = sand.u32 %s48, 1
        %s284 = smul.addr %s283, 4
        %s285 = scalar_lea.vmem [#allocation2], %s284
        // Predicated region
        $region41: #{axial_block_forward.9} parent=39 // pred_check
          %p286 = pneg %p61
        $region42: #{axial_block_forward.9} parent=39 // pred_check_branch
          %288 = sbr.rel (%p286) target = $region44
        $region43: #{axial_block_forward.9} parent=39 // pred_region
          %289 = dma.done %s282, 64
        $region44: #{axial_block_forward.9} parent=39 // pred_fallthru
          _
        %s290 = sand.u32 %s26, 1
        %s291 = scalar_lea.sflag [#allocation6], %s290
        %s292 = sand.u32 %s76, 1
        %s293 = smul.addr %s292, 16
        %s294 = scalar_lea.vmem [#allocation5], %s293
        // Predicated region
        $region45: #{axial_block_forward.9} parent=39 // pred_check
          %p295 = pneg %p89
        $region46: #{axial_block_forward.9} parent=39 // pred_check_branch
          %297 = sbr.rel (%p295) target = $region48
        $region47: #{axial_block_forward.9} parent=39 // pred_region
          %298 = dma.done %s291, 256
        $region48: #{axial_block_forward.9} parent=39 // pred_fallthru
          _
        // Predicated region
        $region49: #{axial_block_forward.9} parent=39 // pred_check
          %p299 = pneg %p110
        $region50: #{axial_block_forward.9} parent=39 // pred_check_branch
          %301 = sbr.rel (%p299) target = $region52
        $region51: #{axial_block_forward.9} parent=39 // pred_region
          %302 = dma.done [#allocation6], 64
        $region52: #{axial_block_forward.9} parent=39 // pred_fallthru
          _
        // Predicated region
        $region53: #{axial_block_forward.9} parent=39 // pred_check
          %p303 = pneg %p131
        $region54: #{axial_block_forward.9} parent=39 // pred_check_branch
          %305 = sbr.rel (%p303) target = $region56
        $region55: #{axial_block_forward.9} parent=39 // pred_region
          %306 = dma.done [#allocation9], 128
        $region56: #{axial_block_forward.9} parent=39 // pred_fallthru
          _
        // Predicated region
        $region57: #{axial_block_forward.9} parent=39 // pred_check
          %p307 = pneg %p152
        $region58: #{axial_block_forward.9} parent=39 // pred_check_branch
          %309 = sbr.rel (%p307) target = $region60
        $region59: #{axial_block_forward.9} parent=39 // pred_region
          %310 = dma.done [#allocation9], 128
        $region60: #{axial_block_forward.9} parent=39 // pred_fallthru
          _
        %s311 = sand.u32 %s48, 1
        %s312 = scalar_lea.sflag [#allocation3], %s311
        %s313 = sand.u32 %s48, 1
        %s314 = smul.addr %s313, 4
        %s315 = scalar_lea.vmem [#allocation2], %s314
        %p316 = pneg %p61
        %p317 = pneg %p58
        %s318 = sand.u32 %s26, 1
        %s319 = scalar_lea.sflag [#allocation6], %s318
        %s320 = sand.u32 %s76, 1
        %s321 = smul.addr %s320, 16
        %s322 = scalar_lea.vmem [#allocation5], %s321
        %p323 = pneg %p89
        %p324 = pneg %p86
        %p325 = pneg %p110
        %p326 = pneg %p107
        %p327 = pneg %p131
        %p328 = pneg %p128
        %p329 = pneg %p152
        %p330 = pneg %p149
        %p331 = pneg %p180
        %p332 = pneg %p177
        %s333 = sand.u32 %s167, 1
        %s334 = scalar_lea.sflag [#allocation4], %s333
        %s335 = sand.u32 %s167, 1
        %s336 = smul.addr %s335, 16
        %s337 = scalar_lea.vmem [#allocation11], %s336
        %s338 = smul.u32 2, %s31
        %s339 = smul.u32 2, %s31
        %s340 = smul.u32 2, %s31
        %v342 = vld [vmem:[%s285] sm:$0xf]
        %v343 = vmax.bf16 %v342, 0
        %v344 = vld [vmem:[#allocation7] sm:$0xf]
        %v347 = vunpack.c.l.s4 1983009808
        %v348 = vunpack.c.0.s8 %v347
        %v349 = vlaneseq
        %v350 = vshrl.u32 %v349, 7
        %v351 = vsub.s32 %v348, %v350
        %v352 = vrot.slane %v343, %v351
        %v353 = vcombine.high %v352, %v352
        %vm354 = vcmask 31744
        %v356 = vsel %vm354, %v344, 0
        %vm358 = vcmask 1041408
        %v360 = vsel %vm358, %v352, 0
        %v363 = vsel %vm358, %v353, 0
        %365 = vmatprep.subr.bf16.mxu0 %v363
        %366 = vmatpush1.bf16.msra.mxu0 %v360
        %367 = vmatprep.subr.bf16.mxu0 0
        %368 = vmatpush1.bf16.msra.mxu0 0
        %369 = vmatprep.subr.bf16.mxu0 0
        %370 = vmatpush1.bf16.msra.mxu0 0
        %371 = vmatprep.subr.bf16.mxu0 0
        %372 = vmatpush1.bf16.msra.mxu0 0
        %373 = vmatprep.subr.bf16.mxu0 0
        %374 = vmatpush1.bf16.msra.mxu0 0
        %375 = vmatprep.subr.bf16.mxu0 0
        %376 = vmatpush1.bf16.msra.mxu0 0
        %377 = vmatprep.subr.bf16.mxu0 0
        %378 = vmatpush1.bf16.msra.mxu0 0
        %379 = vmatprep.subr.bf16.mxu0 0
        %380 = vmatpush1.bf16.msra.mxu0 0
        %381 = vmatprep.subr.bf16.mxu0 0
        %382 = vmatpush1.bf16.msra.mxu0 0
        %383 = vmatprep.subr.bf16.mxu0 0
        %384 = vmatpush1.bf16.msra.mxu0 0
        %385 = vmatprep.subr.bf16.mxu0 0
        %386 = vmatpush1.bf16.msra.mxu0 0
        %387 = vmatprep.subr.bf16.mxu0 0
        %388 = vmatpush1.bf16.msra.mxu0 0
        %389 = vmatprep.subr.bf16.mxu0 0
        %390 = vmatpush1.bf16.msra.mxu0 0
        %391 = vmatprep.subr.bf16.mxu0 0
        %392 = vmatpush1.bf16.msra.mxu0 0
        %393 = vmatprep.subr.bf16.mxu0 0
        %394 = vmatpush1.bf16.msra.mxu0 0
        %395 = vmatprep.subr.bf16.mxu0 0
        %396 = vmatpush1.bf16.msra.mxu0 0
        %397 = vmatprep.mubr.bf16.mxu0 0
        %398 = vmatmul.mubr.bf16.gmra.mrb[0].mxu0 %v356
        %v399 = vpop.f32.mrb[0].mxu0
        %v400 = vadd.f32 0.0, %v399
        %v401 = vpop.f32.mrb[0].mxu0
        %v402 = vadd.f32 0.0, %v401
        %v403 = vpop.f32.mrb[0].mxu0
        %v404 = vpop.f32.mrb[0].mxu0
        %405 = vdwg.mxu0
        %v406 = vld [vmem:[#allocation8] sm:$0xff]
        %408 = vset.pattern.permute.xlu0 0
        %409 = vperm.xlu0 %408, %v406
        %v410 = vpop.permute.xlu0 %409
        %v412 = vmul.f32 %v400, %v410
        %v413 = vmul.f32 %v402, %v410
        %v414 = vld [vmem:[#allocation10] sm:$0xff]
        %416 = vset.pattern.permute.xlu0 0
        %417 = vperm.xlu0 %416, %v414
        %v418 = vpop.permute.xlu0 %417
        %v420 = vadd.f32 %v412, %v418
        %v421 = vadd.f32 %v413, %v418
        %v422 = vld [vmem:[%s294] sm:$0xff]
        %v423 = vld [vmem:[%s294 + $0x8] sm:$0xff]
        %v424 = vadd.f32 %v420, %v422
        %v425 = vadd.f32 %v421, %v423
        %v426 = vmax.f32 %v424, 0.0
        %v427 = vmax.f32 %v425, 0.0
        %428 = vst [vmem:[%s337] sm:$0xff] %v426
        %429 = vst [vmem:[%s337 + $0x8] sm:$0xff] %v427
        %s430 = sand.u32 %s167, 1
        %s431 = scalar_lea.sflag [#allocation4], %s430
        %s432 = sand.u32 %s167, 1
        %s433 = smul.addr %s432, 16
        %s434 = scalar_lea.vmem [#allocation11], %s433
        // Predicated region
        $region61: #{axial_block_forward.9} parent=39 // pred_check
          %p435 = pneg %p177
        $region62: #{axial_block_forward.9} parent=39 // pred_check_branch
          %437 = sbr.rel (%p435) target = $region64
        $region63: #{axial_block_forward.9} parent=39 // pred_region
          %s438 = smul.u32 2, %s31
          %s440 = ssub.s32 256, 256
          %441 = vsyncadd %s431, %s440
          %s442 = smul.addr %s30, 2
          %s443 = sadd.s32 %s438, %s442
          %s444 = smul.addr %s443, 128
          %s445 = scalar_lea.hbm %s5, %s444
          %s447 = sshll.u32 %s434, 4
          %s448 = int_to_ptr.vmem [resolvable:$true] %s447
          %450 = dma.vmem_to_hbm [thread:$0]  %s448, 256, %s445, %s431
        $region64: #{axial_block_forward.9} parent=39 // pred_fallthru
          _
      $region40: #{axial_block_forward.9} parent=5 // pred_fallthru
        _
      %p451 = scmp.le.s32.totalorder 2, %s21
      // Predicated region
      $region65: #{axial_block_forward.9} parent=5 // pred_check
        %p452 = pneg %p451
      $region66: #{axial_block_forward.9} parent=5 // pred_check_branch
        %454 = sbr.rel (%p452) target = $region68
      $region67: #{axial_block_forward.9} parent=5 // pred_region
        %s455 = ssub.s32 %s21, 2
        // Predicated region
        $region69: #{axial_block_forward.9} parent=67 // pred_check
          %p456 = pneg %p183
        $region70: #{axial_block_forward.9} parent=67 // pred_check_branch
          %458 = sbr.rel (%p456) target = $region72
        $region71: #{axial_block_forward.9} parent=67 // pred_region
          %s459 = sand.u32 %s168, 1
          %s460 = scalar_lea.sflag [#allocation4], %s459
          %s461 = sand.u32 %s168, 1
          %s462 = smul.addr %s461, 16
          %s463 = scalar_lea.vmem [#allocation11], %s462
          %464 = dma.done %s460, 256
        $region72: #{axial_block_forward.9} parent=67 // pred_fallthru
          _
      $region68: #{axial_block_forward.9} parent=5 // pred_fallthru
        _
    $region6: #{axial_block_forward.9} parent=1 // loop_footer
      %s25 = sadd.s32 1, %s21
    $region7: #{axial_block_forward.9} parent=1 // loop_footer_branch
      %20 = sbr.rel target = $region3
    $region8: #{axial_block_forward.9} parent=1 // loop_exit
      _
    %465 = vsyncpa [#allocation3], 1
    %s466 = scalar_lea.sflag [#allocation3], 1
    %467 = vsyncpa %s466, 1
    %468 = vsyncpa [#allocation6], 1
    %s469 = scalar_lea.sflag [#allocation6], 1
    %470 = vsyncpa %s469, 1
    %471 = vsyncpa [#allocation9], 1
    %472 = vsyncpa [#allocation4], 1
    %s473 = scalar_lea.sflag [#allocation4], 1
    %474 = vsyncpa %s473, 1

</llo_original>
